<compile_context>
chip_gen: v5e
topology: v5e:2x2
jax: 0.10.0
libtpu: 0.0.40
codegen_flags: <defaults>
</compile_context>

<pallas_src>
import jax
import jax.numpy as jnp
from jax.experimental import pallas as pl
from jax.experimental.pallas import tpu as pltpu


# ----------------------------------------------------------------------------
# Pallas kernel: 2-layer LSTM recurrence + MLP head (single invocation, all
# operands resident in VMEM at these sizes -> no grid / tiling needed).
# ----------------------------------------------------------------------------
def lstm_mlp_kernel(x_ref,                          # (T, B, D)  time-major input, f32
                    wih0_ref, whh0_ref, b0_ref,     # (D, 4H) bf16, (H, 4H) bf16, (1, 4H) f32
                    wih1_ref, whh1_ref, b1_ref,     # (H, 4H) bf16, (H, 4H) bf16, (1, 4H) f32
                    fcw1_ref, fcb1_ref,             # (H, H)  bf16, (1, H)  f32
                    fcw2_ref, fcb2_ref,             # (H, Fp) bf16, (1, Fp) f32 (lane-padded)
                    out_ref):                       # (B, Fp) f32
    T, B, D = x_ref.shape
    H = whh0_ref.shape[0]

    # ---- hoisted layer-0 input projection: ONE GEMM for all timesteps ------
    # Kept time-major (T, B, 4H) so xproj[t] is a free leading-axis slice.
    xflat = x_ref[...].reshape(T * B, D).astype(jnp.bfloat16)
    xproj = (jnp.dot(xflat, wih0_ref[...],
                     preferred_element_type=jnp.float32)
             .reshape(T, B, 4 * H)
             + b0_ref[...])                          # bias fused once, outside loop

    # ---- hoisted bias broadcast (JAX does not CSE broadcast_in_dim) --------
    b1b = jnp.broadcast_to(b1_ref[...], (B, 4 * H))

    def gate_combine(gates, c_prev):
        # H=128 -> every gate boundary sits on a 128-lane vreg boundary, so the
        # static slices are free; sigmoid only on i/f/o lanes, tanh only on g.
        i = jax.nn.sigmoid(gates[:, 0 * H:1 * H])
        f = jax.nn.sigmoid(gates[:, 1 * H:2 * H])
        g = jnp.tanh(gates[:, 2 * H:3 * H])
        o = jax.nn.sigmoid(gates[:, 3 * H:4 * H])
        c_new = f * c_prev + i * g
        h_new = o * jnp.tanh(c_new)
        return h_new, c_new

    zeros = jnp.zeros((B, H), jnp.float32)
    h0, c0, h1, c1 = zeros, zeros, zeros, zeros

    # ---- recurrence: fully unrolled (T is small and static) ----------------
    # Weight refs are read at each dot call site (streamed from VMEM by the
    # MXU) instead of being held live across the unrolled loop.
    for t in range(T):
        # layer 0: input projection precomputed; only the recurrent dot left.
        g0 = xproj[t] + jnp.dot(h0.astype(jnp.bfloat16), whh0_ref[...],
                                preferred_element_type=jnp.float32)
        h0, c0 = gate_combine(g0, c0)

        # layer 1: two independent dots -> h1_{t-1} @ Whh1 can overlap with
        # layer-0's dot / gate_combine for the same step.
        g1 = (jnp.dot(h1.astype(jnp.bfloat16), whh1_ref[...],
                      preferred_element_type=jnp.float32)
              + jnp.dot(h0.astype(jnp.bfloat16), wih1_ref[...],
                        preferred_element_type=jnp.float32)
              + b1b)
        h1, c1 = gate_combine(g1, c1)

    # ---- fc head: Linear(H,H) -> ReLU -> Linear(H, Fp) ---------------------
    hid = jnp.maximum(
        jnp.dot(h1.astype(jnp.bfloat16), fcw1_ref[...],
                preferred_element_type=jnp.float32) + fcb1_ref[...],
        0.0)
    out = (jnp.dot(hid.astype(jnp.bfloat16), fcw2_ref[...],
                   preferred_element_type=jnp.float32) + fcb2_ref[...])
    out_ref[...] = out.astype(out_ref.dtype)          # lane-dense (B, 128) store


# ----------------------------------------------------------------------------
# Wrapper
# ----------------------------------------------------------------------------
def lstm_model_multi_output(x, kparams, n_forecasts):
    """x: (B, T, D) batch-first (PyTorch convention). Returns (B, n_forecasts, 1).

    Inference-only forward (inter-layer LSTM dropout omitted)."""
    B, T, D = x.shape
    x_tm = jnp.transpose(x.astype(jnp.float32), (1, 0, 2))   # (T, B, D), tiny copy
    args = (
        x_tm,
        kparams["wih0"], kparams["whh0"], kparams["b0"],
        kparams["wih1"], kparams["whh1"], kparams["b1"],
        kparams["fcw1"], kparams["fcb1"],
        kparams["fcw2"], kparams["fcb2"],
    )
    f_pad = kparams["fcw2"].shape[1]
    vmem = pl.BlockSpec(memory_space=pltpu.MemorySpace.VMEM)
    out = pl.pallas_call(
        lstm_mlp_kernel,
        out_shape=jax.ShapeDtypeStruct((B, f_pad), jnp.float32),
        in_specs=[vmem] * len(args),
        out_specs=vmem,
    )(*args)
    return out[:, :n_forecasts].reshape(B, n_forecasts, 1)


# ----------------------------------------------------------------------------
# Deterministic parameter init in RAW PyTorch layout
# (uniform(-1/sqrt(H), 1/sqrt(H)), like nn.LSTM / nn.Linear with fan_in=H).
# ----------------------------------------------------------------------------
def init_torch_params(key, input_size, hidden_size, n_forecasts):
    H, D, F = hidden_size, input_size, n_forecasts
    ks = jax.random.split(key, 12)
    k = 1.0 / jnp.sqrt(H)

    def u(kk, shape):
        return jax.random.uniform(kk, shape, jnp.float32, -k, k)

    return {
        # LSTM layer 0 (PyTorch shapes)
        "weight_ih_l0": u(ks[0], (4 * H, D)),
        "weight_hh_l0": u(ks[1], (4 * H, H)),
        "bias_ih_l0":   u(ks[2], (4 * H,)),
        "bias_hh_l0":   u(ks[3], (4 * H,)),
        # LSTM layer 1
        "weight_ih_l1": u(ks[4], (4 * H, H)),
        "weight_hh_l1": u(ks[5], (4 * H, H)),
        "bias_ih_l1":   u(ks[6], (4 * H,)),
        "bias_hh_l1":   u(ks[7], (4 * H,)),
        # fc head
        "fc1_w": u(ks[8], (H, H)),
        "fc1_b": u(ks[9], (H,)),
        "fc2_w": u(ks[10], (F, H)),
        "fc2_b": u(ks[11], (F,)),
    }


def pack_params(p):
    """Pack raw PyTorch-layout weights into the kernel layout:
    pre-transposed, biases fused per layer (f32), weight matrices cast to
    bf16 (MXU default precision already runs bf16 passes, so accuracy is
    unchanged while the resident-weight DMA halves), head output
    lane-padded to 128."""
    H = p["weight_hh_l0"].shape[1]
    F = p["fc2_w"].shape[0]
    f_pad = max(128, ((F + 127) // 128) * 128)

    fcw2 = jnp.zeros((H, f_pad), jnp.float32).at[:, :F].set(p["fc2_w"].T)
    fcb2 = jnp.zeros((1, f_pad), jnp.float32).at[0, :F].set(p["fc2_b"])

    bf = jnp.bfloat16
    return {
        "wih0": p["weight_ih_l0"].T.astype(bf),                     # (D, 4H)
        "whh0": p["weight_hh_l0"].T.astype(bf),                     # (H, 4H)
        "b0":   (p["bias_ih_l0"] + p["bias_hh_l0"]).reshape(1, 4 * H),
        "wih1": p["weight_ih_l1"].T.astype(bf),                     # (H, 4H)
        "whh1": p["weight_hh_l1"].T.astype(bf),                     # (H, 4H)
        "b1":   (p["bias_ih_l1"] + p["bias_hh_l1"]).reshape(1, 4 * H),
        "fcw1": p["fc1_w"].T.astype(bf),                            # (H, H)
        "fcb1": p["fc1_b"].reshape(1, H),
        "fcw2": fcw2.astype(bf),                                    # (H, f_pad)
        "fcb2": fcb2,                                               # (1, f_pad)
    }


# ----------------------------------------------------------------------------
# Pure-JAX reference using the RAW PyTorch-layout weights (so it independently
# validates the transpose / bias fusion / padding done in pack_params).
# ----------------------------------------------------------------------------
def reference_forward(x, p, n_forecasts):
    B, T, D = x.shape
    H = p["weight_hh_l0"].shape[1]

    def cell(xt, h, c, w_ih, w_hh, b_ih, b_hh):
        g = xt @ w_ih.T + h @ w_hh.T + b_ih + b_hh
        i = jax.nn.sigmoid(g[:, 0 * H:1 * H])
        f = jax.nn.sigmoid(g[:, 1 * H:2 * H])
        gg = jnp.tanh(g[:, 2 * H:3 * H])
        o = jax.nn.sigmoid(g[:, 3 * H:4 * H])
        c = f * c + i * gg
        h = o * jnp.tanh(c)
        return h, c

    h0 = c0 = h1 = c1 = jnp.zeros((B, H), jnp.float32)
    for t in range(T):
        xt = x[:, t, :]
        h0, c0 = cell(xt, h0, c0, p["weight_ih_l0"], p["weight_hh_l0"],
                      p["bias_ih_l0"], p["bias_hh_l0"])
        h1, c1 = cell(h0, h1, c1, p["weight_ih_l1"], p["weight_hh_l1"],
                      p["bias_ih_l1"], p["bias_hh_l1"])
    hid = jnp.maximum(h1 @ p["fc1_w"].T + p["fc1_b"], 0.0)
    out = hid @ p["fc2_w"].T + p["fc2_b"]
    return out.reshape(B, n_forecasts, 1)


if __name__ == "__main__":
    # Small shapes consistent with the module (hidden_size uses the module
    # default of 128, which also keeps gate slices on vreg lane boundaries).
    batch, seq_len, input_size = 2, 8, 8
    hidden_size, n_forecasts = 128, 5

    key = jax.random.PRNGKey(0)
    k_x, k_p = jax.random.split(key)
    x = jax.random.normal(k_x, (batch, seq_len, input_size), jnp.float32)

    raw = init_torch_params(k_p, input_size, hidden_size, n_forecasts)
    kparams = pack_params(raw)

    out = lstm_model_multi_output(x, kparams, n_forecasts)
    out = jax.block_until_ready(out)
    assert out.shape == (batch, n_forecasts, 1), out.shape

    ref = reference_forward(x, raw, n_forecasts)

    # Tolerance note: the kernel feeds bf16 operands to the MXU explicitly;
    # the f32 reference's dots are also demoted to bf16 passes at DEFAULT
    # precision, so both paths see bf16 weight rounding across the 16 chained
    # cell matmuls and differ mainly in accumulation order.  ~1e-2 is still
    # orders of magnitude below the error a wrong gate slice / layout bug
    # would produce; closer PyTorch parity would require precision=HIGHEST
    # everywhere (~3x MXU cost) — an explicit accuracy/perf trade.
    err = jnp.max(jnp.abs(out - ref))
    assert jnp.allclose(out, ref, atol=1e-2, rtol=1e-2), f"max abs err {err}"

    print("KERNEL_OK")
</pallas_src>

<mosaic_0001>
module attributes {stable_mosaic.version = 11 : i64} {
  func.func @lstm_mlp_kernel(%arg0: memref<8x2x8xf32, #tpu.memory_space<vmem>>, %arg1: memref<8x512xbf16, #tpu.memory_space<vmem>>, %arg2: memref<128x512xbf16, #tpu.memory_space<vmem>>, %arg3: memref<1x512xf32, #tpu.memory_space<vmem>>, %arg4: memref<128x512xbf16, #tpu.memory_space<vmem>>, %arg5: memref<128x512xbf16, #tpu.memory_space<vmem>>, %arg6: memref<1x512xf32, #tpu.memory_space<vmem>>, %arg7: memref<128x128xbf16, #tpu.memory_space<vmem>>, %arg8: memref<1x128xf32, #tpu.memory_space<vmem>>, %arg9: memref<128x128xbf16, #tpu.memory_space<vmem>>, %arg10: memref<1x128xf32, #tpu.memory_space<vmem>>, %arg11: memref<2x128xf32, #tpu.memory_space<vmem>>) attributes {dimension_semantics = [], scalar_prefetch = 0 : i64, scratch_operands = 0 : i64, tpu.core_type = #tpu.core_type<tc>} {
    %c0 = arith.constant 0 : index
    %c0_0 = arith.constant 0 : index
    %c0_1 = arith.constant 0 : index
    %0 = vector.load %arg0[%c0, %c0_0, %c0_1] : memref<8x2x8xf32, #tpu.memory_space<vmem>>, vector<8x2x8xf32>
    %1 = vector.shape_cast %0 : vector<8x2x8xf32> to vector<16x8xf32>
    %2 = arith.truncf %1 : vector<16x8xf32> to vector<16x8xbf16>
    %c0_2 = arith.constant 0 : index
    %c0_3 = arith.constant 0 : index
    %3 = vector.load %arg1[%c0_2, %c0_3] : memref<8x512xbf16, #tpu.memory_space<vmem>>, vector<8x512xbf16>
    %cst = arith.constant dense<0.000000e+00> : vector<16x512xf32>
    %4 = tpu.matmul %2, %3, %cst {dimension_numbers = #tpu.dot_dimension_numbers<[1], [0], [0], [1], [0, 0, 1, 1], [], []>} : vector<16x8xbf16>, vector<8x512xbf16>, vector<16x512xf32> -> vector<16x512xf32>
    %5 = vector.shape_cast %4 : vector<16x512xf32> to vector<8x2x512xf32>
    %c0_4 = arith.constant 0 : index
    %c0_5 = arith.constant 0 : index
    %6 = vector.load %arg3[%c0_4, %c0_5] : memref<1x512xf32, #tpu.memory_space<vmem>>, vector<1x512xf32>
    %7 = vector.shape_cast %6 : vector<1x512xf32> to vector<1x1x512xf32>
    %8 = vector.broadcast %7 : vector<1x1x512xf32> to vector<8x2x512xf32>
    %9 = arith.addf %5, %8 : vector<8x2x512xf32>
    %c0_6 = arith.constant 0 : index
    %c0_7 = arith.constant 0 : index
    %10 = vector.load %arg6[%c0_6, %c0_7] : memref<1x512xf32, #tpu.memory_space<vmem>>, vector<1x512xf32>
    %11 = vector.shape_cast %10 : vector<1x512xf32> to vector<1x512xf32>
    %12 = vector.broadcast %11 : vector<1x512xf32> to vector<2x512xf32>
    %cst_8 = arith.constant 0.000000e+00 : f32
    %13 = vector.broadcast %cst_8 : f32 to vector<2x128xf32>
    %14 = vector.extract_strided_slice %9 {offsets = [0, 0, 0], sizes = [1, 2, 512], strides = [1, 1, 1]} : vector<8x2x512xf32> to vector<1x2x512xf32>
    %15 = vector.shape_cast %14 : vector<1x2x512xf32> to vector<2x512xf32>
    %16 = arith.truncf %13 : vector<2x128xf32> to vector<2x128xbf16>
    %c0_9 = arith.constant 0 : index
    %c0_10 = arith.constant 0 : index
    %17 = vector.load %arg2[%c0_9, %c0_10] : memref<128x512xbf16, #tpu.memory_space<vmem>>, vector<128x512xbf16>
    %cst_11 = arith.constant dense<0.000000e+00> : vector<2x512xf32>
    %18 = tpu.matmul %16, %17, %cst_11 {dimension_numbers = #tpu.dot_dimension_numbers<[1], [0], [0], [1], [0, 0, 1, 1], [], []>} : vector<2x128xbf16>, vector<128x512xbf16>, vector<2x512xf32> -> vector<2x512xf32>
    %19 = arith.addf %15, %18 : vector<2x512xf32>
    %20 = vector.extract_strided_slice %19 {offsets = [0, 0], sizes = [2, 128], strides = [1, 1]} : vector<2x512xf32> to vector<2x128xf32>
    %21 = arith.negf %20 : vector<2x128xf32>
    %22 = math.exp %21 : vector<2x128xf32>
    %cst_12 = arith.constant 1.000000e+00 : f32
    %23 = vector.broadcast %cst_12 : f32 to vector<2x128xf32>
    %24 = arith.addf %23, %22 : vector<2x128xf32>
    %25 = arith.divf %23, %24 : vector<2x128xf32>
    %26 = vector.extract_strided_slice %19 {offsets = [0, 128], sizes = [2, 128], strides = [1, 1]} : vector<2x512xf32> to vector<2x128xf32>
    %27 = arith.negf %26 : vector<2x128xf32>
    %28 = math.exp %27 : vector<2x128xf32>
    %cst_13 = arith.constant 1.000000e+00 : f32
    %29 = vector.broadcast %cst_13 : f32 to vector<2x128xf32>
    %30 = arith.addf %29, %28 : vector<2x128xf32>
    %31 = arith.divf %29, %30 : vector<2x128xf32>
    %32 = vector.extract_strided_slice %19 {offsets = [0, 256], sizes = [2, 128], strides = [1, 1]} : vector<2x512xf32> to vector<2x128xf32>
    %33 = math.tanh %32 : vector<2x128xf32>
    %34 = vector.extract_strided_slice %19 {offsets = [0, 384], sizes = [2, 128], strides = [1, 1]} : vector<2x512xf32> to vector<2x128xf32>
    %35 = arith.negf %34 : vector<2x128xf32>
    %36 = math.exp %35 : vector<2x128xf32>
    %cst_14 = arith.constant 1.000000e+00 : f32
    %37 = vector.broadcast %cst_14 : f32 to vector<2x128xf32>
    %38 = arith.addf %37, %36 : vector<2x128xf32>
    %39 = arith.divf %37, %38 : vector<2x128xf32>
    %40 = arith.mulf %31, %13 : vector<2x128xf32>
    %41 = arith.mulf %25, %33 : vector<2x128xf32>
    %42 = arith.addf %40, %41 : vector<2x128xf32>
    %43 = math.tanh %42 : vector<2x128xf32>
    %44 = arith.mulf %39, %43 : vector<2x128xf32>
    %45 = arith.truncf %13 : vector<2x128xf32> to vector<2x128xbf16>
    %c0_15 = arith.constant 0 : index
    %c0_16 = arith.constant 0 : index
    %46 = vector.load %arg5[%c0_15, %c0_16] : memref<128x512xbf16, #tpu.memory_space<vmem>>, vector<128x512xbf16>
    %cst_17 = arith.constant dense<0.000000e+00> : vector<2x512xf32>
    %47 = tpu.matmul %45, %46, %cst_17 {dimension_numbers = #tpu.dot_dimension_numbers<[1], [0], [0], [1], [0, 0, 1, 1], [], []>} : vector<2x128xbf16>, vector<128x512xbf16>, vector<2x512xf32> -> vector<2x512xf32>
    %48 = arith.truncf %44 : vector<2x128xf32> to vector<2x128xbf16>
    %c0_18 = arith.constant 0 : index
    %c0_19 = arith.constant 0 : index
    %49 = vector.load %arg4[%c0_18, %c0_19] : memref<128x512xbf16, #tpu.memory_space<vmem>>, vector<128x512xbf16>
    %cst_20 = arith.constant dense<0.000000e+00> : vector<2x512xf32>
    %50 = tpu.matmul %48, %49, %cst_20 {dimension_numbers = #tpu.dot_dimension_numbers<[1], [0], [0], [1], [0, 0, 1, 1], [], []>} : vector<2x128xbf16>, vector<128x512xbf16>, vector<2x512xf32> -> vector<2x512xf32>
    %51 = arith.addf %47, %50 : vector<2x512xf32>
    %52 = arith.addf %51, %12 : vector<2x512xf32>
    %53 = vector.extract_strided_slice %52 {offsets = [0, 0], sizes = [2, 128], strides = [1, 1]} : vector<2x512xf32> to vector<2x128xf32>
    %54 = arith.negf %53 : vector<2x128xf32>
    %55 = math.exp %54 : vector<2x128xf32>
    %cst_21 = arith.constant 1.000000e+00 : f32
    %56 = vector.broadcast %cst_21 : f32 to vector<2x128xf32>
    %57 = arith.addf %56, %55 : vector<2x128xf32>
    %58 = arith.divf %56, %57 : vector<2x128xf32>
    %59 = vector.extract_strided_slice %52 {offsets = [0, 128], sizes = [2, 128], strides = [1, 1]} : vector<2x512xf32> to vector<2x128xf32>
    %60 = arith.negf %59 : vector<2x128xf32>
    %61 = math.exp %60 : vector<2x128xf32>
    %cst_22 = arith.constant 1.000000e+00 : f32
    %62 = vector.broadcast %cst_22 : f32 to vector<2x128xf32>
    %63 = arith.addf %62, %61 : vector<2x128xf32>
    %64 = arith.divf %62, %63 : vector<2x128xf32>
    %65 = vector.extract_strided_slice %52 {offsets = [0, 256], sizes = [2, 128], strides = [1, 1]} : vector<2x512xf32> to vector<2x128xf32>
    %66 = math.tanh %65 : vector<2x128xf32>
    %67 = vector.extract_strided_slice %52 {offsets = [0, 384], sizes = [2, 128], strides = [1, 1]} : vector<2x512xf32> to vector<2x128xf32>
    %68 = arith.negf %67 : vector<2x128xf32>
    %69 = math.exp %68 : vector<2x128xf32>
    %cst_23 = arith.constant 1.000000e+00 : f32
    %70 = vector.broadcast %cst_23 : f32 to vector<2x128xf32>
    %71 = arith.addf %70, %69 : vector<2x128xf32>
    %72 = arith.divf %70, %71 : vector<2x128xf32>
    %73 = arith.mulf %64, %13 : vector<2x128xf32>
    %74 = arith.mulf %58, %66 : vector<2x128xf32>
    %75 = arith.addf %73, %74 : vector<2x128xf32>
    %76 = math.tanh %75 : vector<2x128xf32>
    %77 = arith.mulf %72, %76 : vector<2x128xf32>
    %78 = vector.extract_strided_slice %9 {offsets = [1, 0, 0], sizes = [1, 2, 512], strides = [1, 1, 1]} : vector<8x2x512xf32> to vector<1x2x512xf32>
    %79 = vector.shape_cast %78 : vector<1x2x512xf32> to vector<2x512xf32>
    %80 = arith.truncf %44 : vector<2x128xf32> to vector<2x128xbf16>
    %c0_24 = arith.constant 0 : index
    %c0_25 = arith.constant 0 : index
    %81 = vector.load %arg2[%c0_24, %c0_25] : memref<128x512xbf16, #tpu.memory_space<vmem>>, vector<128x512xbf16>
    %cst_26 = arith.constant dense<0.000000e+00> : vector<2x512xf32>
    %82 = tpu.matmul %80, %81, %cst_26 {dimension_numbers = #tpu.dot_dimension_numbers<[1], [0], [0], [1], [0, 0, 1, 1], [], []>} : vector<2x128xbf16>, vector<128x512xbf16>, vector<2x512xf32> -> vector<2x512xf32>
    %83 = arith.addf %79, %82 : vector<2x512xf32>
    %84 = vector.extract_strided_slice %83 {offsets = [0, 0], sizes = [2, 128], strides = [1, 1]} : vector<2x512xf32> to vector<2x128xf32>
    %85 = arith.negf %84 : vector<2x128xf32>
    %86 = math.exp %85 : vector<2x128xf32>
    %cst_27 = arith.constant 1.000000e+00 : f32
    %87 = vector.broadcast %cst_27 : f32 to vector<2x128xf32>
    %88 = arith.addf %87, %86 : vector<2x128xf32>
    %89 = arith.divf %87, %88 : vector<2x128xf32>
    %90 = vector.extract_strided_slice %83 {offsets = [0, 128], sizes = [2, 128], strides = [1, 1]} : vector<2x512xf32> to vector<2x128xf32>
    %91 = arith.negf %90 : vector<2x128xf32>
    %92 = math.exp %91 : vector<2x128xf32>
    %cst_28 = arith.constant 1.000000e+00 : f32
    %93 = vector.broadcast %cst_28 : f32 to vector<2x128xf32>
    %94 = arith.addf %93, %92 : vector<2x128xf32>
    %95 = arith.divf %93, %94 : vector<2x128xf32>
    %96 = vector.extract_strided_slice %83 {offsets = [0, 256], sizes = [2, 128], strides = [1, 1]} : vector<2x512xf32> to vector<2x128xf32>
    %97 = math.tanh %96 : vector<2x128xf32>
    %98 = vector.extract_strided_slice %83 {offsets = [0, 384], sizes = [2, 128], strides = [1, 1]} : vector<2x512xf32> to vector<2x128xf32>
    %99 = arith.negf %98 : vector<2x128xf32>
    %100 = math.exp %99 : vector<2x128xf32>
    %cst_29 = arith.constant 1.000000e+00 : f32
    %101 = vector.broadcast %cst_29 : f32 to vector<2x128xf32>
    %102 = arith.addf %101, %100 : vector<2x128xf32>
    %103 = arith.divf %101, %102 : vector<2x128xf32>
    %104 = arith.mulf %95, %42 : vector<2x128xf32>
    %105 = arith.mulf %89, %97 : vector<2x128xf32>
    %106 = arith.addf %104, %105 : vector<2x128xf32>
    %107 = math.tanh %106 : vector<2x128xf32>
    %108 = arith.mulf %103, %107 : vector<2x128xf32>
    %109 = arith.truncf %77 : vector<2x128xf32> to vector<2x128xbf16>
    %c0_30 = arith.constant 0 : index
    %c0_31 = arith.constant 0 : index
    %110 = vector.load %arg5[%c0_30, %c0_31] : memref<128x512xbf16, #tpu.memory_space<vmem>>, vector<128x512xbf16>
    %cst_32 = arith.constant dense<0.000000e+00> : vector<2x512xf32>
    %111 = tpu.matmul %109, %110, %cst_32 {dimension_numbers = #tpu.dot_dimension_numbers<[1], [0], [0], [1], [0, 0, 1, 1], [], []>} : vector<2x128xbf16>, vector<128x512xbf16>, vector<2x512xf32> -> vector<2x512xf32>
    %112 = arith.truncf %108 : vector<2x128xf32> to vector<2x128xbf16>
    %c0_33 = arith.constant 0 : index
    %c0_34 = arith.constant 0 : index
    %113 = vector.load %arg4[%c0_33, %c0_34] : memref<128x512xbf16, #tpu.memory_space<vmem>>, vector<128x512xbf16>
    %cst_35 = arith.constant dense<0.000000e+00> : vector<2x512xf32>
    %114 = tpu.matmul %112, %113, %cst_35 {dimension_numbers = #tpu.dot_dimension_numbers<[1], [0], [0], [1], [0, 0, 1, 1], [], []>} : vector<2x128xbf16>, vector<128x512xbf16>, vector<2x512xf32> -> vector<2x512xf32>
    %115 = arith.addf %111, %114 : vector<2x512xf32>
    %116 = arith.addf %115, %12 : vector<2x512xf32>
    %117 = vector.extract_strided_slice %116 {offsets = [0, 0], sizes = [2, 128], strides = [1, 1]} : vector<2x512xf32> to vector<2x128xf32>
    %118 = arith.negf %117 : vector<2x128xf32>
    %119 = math.exp %118 : vector<2x128xf32>
    %cst_36 = arith.constant 1.000000e+00 : f32
    %120 = vector.broadcast %cst_36 : f32 to vector<2x128xf32>
    %121 = arith.addf %120, %119 : vector<2x128xf32>
    %122 = arith.divf %120, %121 : vector<2x128xf32>
    %123 = vector.extract_strided_slice %116 {offsets = [0, 128], sizes = [2, 128], strides = [1, 1]} : vector<2x512xf32> to vector<2x128xf32>
    %124 = arith.negf %123 : vector<2x128xf32>
    %125 = math.exp %124 : vector<2x128xf32>
    %cst_37 = arith.constant 1.000000e+00 : f32
    %126 = vector.broadcast %cst_37 : f32 to vector<2x128xf32>
    %127 = arith.addf %126, %125 : vector<2x128xf32>
    %128 = arith.divf %126, %127 : vector<2x128xf32>
    %129 = vector.extract_strided_slice %116 {offsets = [0, 256], sizes = [2, 128], strides = [1, 1]} : vector<2x512xf32> to vector<2x128xf32>
    %130 = math.tanh %129 : vector<2x128xf32>
    %131 = vector.extract_strided_slice %116 {offsets = [0, 384], sizes = [2, 128], strides = [1, 1]} : vector<2x512xf32> to vector<2x128xf32>
    %132 = arith.negf %131 : vector<2x128xf32>
    %133 = math.exp %132 : vector<2x128xf32>
    %cst_38 = arith.constant 1.000000e+00 : f32
    %134 = vector.broadcast %cst_38 : f32 to vector<2x128xf32>
    %135 = arith.addf %134, %133 : vector<2x128xf32>
    %136 = arith.divf %134, %135 : vector<2x128xf32>
    %137 = arith.mulf %128, %75 : vector<2x128xf32>
    %138 = arith.mulf %122, %130 : vector<2x128xf32>
    %139 = arith.addf %137, %138 : vector<2x128xf32>
    %140 = math.tanh %139 : vector<2x128xf32>
    %141 = arith.mulf %136, %140 : vector<2x128xf32>
    %142 = vector.extract_strided_slice %9 {offsets = [2, 0, 0], sizes = [1, 2, 512], strides = [1, 1, 1]} : vector<8x2x512xf32> to vector<1x2x512xf32>
    %143 = vector.shape_cast %142 : vector<1x2x512xf32> to vector<2x512xf32>
    %144 = arith.truncf %108 : vector<2x128xf32> to vector<2x128xbf16>
    %c0_39 = arith.constant 0 : index
    %c0_40 = arith.constant 0 : index
    %145 = vector.load %arg2[%c0_39, %c0_40] : memref<128x512xbf16, #tpu.memory_space<vmem>>, vector<128x512xbf16>
    %cst_41 = arith.constant dense<0.000000e+00> : vector<2x512xf32>
    %146 = tpu.matmul %144, %145, %cst_41 {dimension_numbers = #tpu.dot_dimension_numbers<[1], [0], [0], [1], [0, 0, 1, 1], [], []>} : vector<2x128xbf16>, vector<128x512xbf16>, vector<2x512xf32> -> vector<2x512xf32>
    %147 = arith.addf %143, %146 : vector<2x512xf32>
    %148 = vector.extract_strided_slice %147 {offsets = [0, 0], sizes = [2, 128], strides = [1, 1]} : vector<2x512xf32> to vector<2x128xf32>
    %149 = arith.negf %148 : vector<2x128xf32>
    %150 = math.exp %149 : vector<2x128xf32>
    %cst_42 = arith.constant 1.000000e+00 : f32
    %151 = vector.broadcast %cst_42 : f32 to vector<2x128xf32>
    %152 = arith.addf %151, %150 : vector<2x128xf32>
    %153 = arith.divf %151, %152 : vector<2x128xf32>
    %154 = vector.extract_strided_slice %147 {offsets = [0, 128], sizes = [2, 128], strides = [1, 1]} : vector<2x512xf32> to vector<2x128xf32>
    %155 = arith.negf %154 : vector<2x128xf32>
    %156 = math.exp %155 : vector<2x128xf32>
    %cst_43 = arith.constant 1.000000e+00 : f32
    %157 = vector.broadcast %cst_43 : f32 to vector<2x128xf32>
    %158 = arith.addf %157, %156 : vector<2x128xf32>
    %159 = arith.divf %157, %158 : vector<2x128xf32>
    %160 = vector.extract_strided_slice %147 {offsets = [0, 256], sizes = [2, 128], strides = [1, 1]} : vector<2x512xf32> to vector<2x128xf32>
    %161 = math.tanh %160 : vector<2x128xf32>
    %162 = vector.extract_strided_slice %147 {offsets = [0, 384], sizes = [2, 128], strides = [1, 1]} : vector<2x512xf32> to vector<2x128xf32>
    %163 = arith.negf %162 : vector<2x128xf32>
    %164 = math.exp %163 : vector<2x128xf32>
    %cst_44 = arith.constant 1.000000e+00 : f32
    %165 = vector.broadcast %cst_44 : f32 to vector<2x128xf32>
    %166 = arith.addf %165, %164 : vector<2x128xf32>
    %167 = arith.divf %165, %166 : vector<2x128xf32>
    %168 = arith.mulf %159, %106 : vector<2x128xf32>
    %169 = arith.mulf %153, %161 : vector<2x128xf32>
    %170 = arith.addf %168, %169 : vector<2x128xf32>
    %171 = math.tanh %170 : vector<2x128xf32>
    %172 = arith.mulf %167, %171 : vector<2x128xf32>
    %173 = arith.truncf %141 : vector<2x128xf32> to vector<2x128xbf16>
    %c0_45 = arith.constant 0 : index
    %c0_46 = arith.constant 0 : index
    %174 = vector.load %arg5[%c0_45, %c0_46] : memref<128x512xbf16, #tpu.memory_space<vmem>>, vector<128x512xbf16>
    %cst_47 = arith.constant dense<0.000000e+00> : vector<2x512xf32>
    %175 = tpu.matmul %173, %174, %cst_47 {dimension_numbers = #tpu.dot_dimension_numbers<[1], [0], [0], [1], [0, 0, 1, 1], [], []>} : vector<2x128xbf16>, vector<128x512xbf16>, vector<2x512xf32> -> vector<2x512xf32>
    %176 = arith.truncf %172 : vector<2x128xf32> to vector<2x128xbf16>
    %c0_48 = arith.constant 0 : index
    %c0_49 = arith.constant 0 : index
    %177 = vector.load %arg4[%c0_48, %c0_49] : memref<128x512xbf16, #tpu.memory_space<vmem>>, vector<128x512xbf16>
    %cst_50 = arith.constant dense<0.000000e+00> : vector<2x512xf32>
    %178 = tpu.matmul %176, %177, %cst_50 {dimension_numbers = #tpu.dot_dimension_numbers<[1], [0], [0], [1], [0, 0, 1, 1], [], []>} : vector<2x128xbf16>, vector<128x512xbf16>, vector<2x512xf32> -> vector<2x512xf32>
    %179 = arith.addf %175, %178 : vector<2x512xf32>
    %180 = arith.addf %179, %12 : vector<2x512xf32>
    %181 = vector.extract_strided_slice %180 {offsets = [0, 0], sizes = [2, 128], strides = [1, 1]} : vector<2x512xf32> to vector<2x128xf32>
    %182 = arith.negf %181 : vector<2x128xf32>
    %183 = math.exp %182 : vector<2x128xf32>
    %cst_51 = arith.constant 1.000000e+00 : f32
    %184 = vector.broadcast %cst_51 : f32 to vector<2x128xf32>
    %185 = arith.addf %184, %183 : vector<2x128xf32>
    %186 = arith.divf %184, %185 : vector<2x128xf32>
    %187 = vector.extract_strided_slice %180 {offsets = [0, 128], sizes = [2, 128], strides = [1, 1]} : vector<2x512xf32> to vector<2x128xf32>
    %188 = arith.negf %187 : vector<2x128xf32>
    %189 = math.exp %188 : vector<2x128xf32>
    %cst_52 = arith.constant 1.000000e+00 : f32
    %190 = vector.broadcast %cst_52 : f32 to vector<2x128xf32>
    %191 = arith.addf %190, %189 : vector<2x128xf32>
    %192 = arith.divf %190, %191 : vector<2x128xf32>
    %193 = vector.extract_strided_slice %180 {offsets = [0, 256], sizes = [2, 128], strides = [1, 1]} : vector<2x512xf32> to vector<2x128xf32>
    %194 = math.tanh %193 : vector<2x128xf32>
    %195 = vector.extract_strided_slice %180 {offsets = [0, 384], sizes = [2, 128], strides = [1, 1]} : vector<2x512xf32> to vector<2x128xf32>
    %196 = arith.negf %195 : vector<2x128xf32>
    %197 = math.exp %196 : vector<2x128xf32>
    %cst_53 = arith.constant 1.000000e+00 : f32
    %198 = vector.broadcast %cst_53 : f32 to vector<2x128xf32>
    %199 = arith.addf %198, %197 : vector<2x128xf32>
    %200 = arith.divf %198, %199 : vector<2x128xf32>
    %201 = arith.mulf %192, %139 : vector<2x128xf32>
    %202 = arith.mulf %186, %194 : vector<2x128xf32>
    %203 = arith.addf %201, %202 : vector<2x128xf32>
    %204 = math.tanh %203 : vector<2x128xf32>
    %205 = arith.mulf %200, %204 : vector<2x128xf32>
    %206 = vector.extract_strided_slice %9 {offsets = [3, 0, 0], sizes = [1, 2, 512], strides = [1, 1, 1]} : vector<8x2x512xf32> to vector<1x2x512xf32>
    %207 = vector.shape_cast %206 : vector<1x2x512xf32> to vector<2x512xf32>
    %208 = arith.truncf %172 : vector<2x128xf32> to vector<2x128xbf16>
    %c0_54 = arith.constant 0 : index
    %c0_55 = arith.constant 0 : index
    %209 = vector.load %arg2[%c0_54, %c0_55] : memref<128x512xbf16, #tpu.memory_space<vmem>>, vector<128x512xbf16>
    %cst_56 = arith.constant dense<0.000000e+00> : vector<2x512xf32>
    %210 = tpu.matmul %208, %209, %cst_56 {dimension_numbers = #tpu.dot_dimension_numbers<[1], [0], [0], [1], [0, 0, 1, 1], [], []>} : vector<2x128xbf16>, vector<128x512xbf16>, vector<2x512xf32> -> vector<2x512xf32>
    %211 = arith.addf %207, %210 : vector<2x512xf32>
    %212 = vector.extract_strided_slice %211 {offsets = [0, 0], sizes = [2, 128], strides = [1, 1]} : vector<2x512xf32> to vector<2x128xf32>
    %213 = arith.negf %212 : vector<2x128xf32>
    %214 = math.exp %213 : vector<2x128xf32>
    %cst_57 = arith.constant 1.000000e+00 : f32
    %215 = vector.broadcast %cst_57 : f32 to vector<2x128xf32>
    %216 = arith.addf %215, %214 : vector<2x128xf32>
    %217 = arith.divf %215, %216 : vector<2x128xf32>
    %218 = vector.extract_strided_slice %211 {offsets = [0, 128], sizes = [2, 128], strides = [1, 1]} : vector<2x512xf32> to vector<2x128xf32>
    %219 = arith.negf %218 : vector<2x128xf32>
    %220 = math.exp %219 : vector<2x128xf32>
    %cst_58 = arith.constant 1.000000e+00 : f32
    %221 = vector.broadcast %cst_58 : f32 to vector<2x128xf32>
    %222 = arith.addf %221, %220 : vector<2x128xf32>
    %223 = arith.divf %221, %222 : vector<2x128xf32>
    %224 = vector.extract_strided_slice %211 {offsets = [0, 256], sizes = [2, 128], strides = [1, 1]} : vector<2x512xf32> to vector<2x128xf32>
    %225 = math.tanh %224 : vector<2x128xf32>
    %226 = vector.extract_strided_slice %211 {offsets = [0, 384], sizes = [2, 128], strides = [1, 1]} : vector<2x512xf32> to vector<2x128xf32>
    %227 = arith.negf %226 : vector<2x128xf32>
    %228 = math.exp %227 : vector<2x128xf32>
    %cst_59 = arith.constant 1.000000e+00 : f32
    %229 = vector.broadcast %cst_59 : f32 to vector<2x128xf32>
    %230 = arith.addf %229, %228 : vector<2x128xf32>
    %231 = arith.divf %229, %230 : vector<2x128xf32>
    %232 = arith.mulf %223, %170 : vector<2x128xf32>
    %233 = arith.mulf %217, %225 : vector<2x128xf32>
    %234 = arith.addf %232, %233 : vector<2x128xf32>
    %235 = math.tanh %234 : vector<2x128xf32>
    %236 = arith.mulf %231, %235 : vector<2x128xf32>
    %237 = arith.truncf %205 : vector<2x128xf32> to vector<2x128xbf16>
    %c0_60 = arith.constant 0 : index
    %c0_61 = arith.constant 0 : index
    %238 = vector.load %arg5[%c0_60, %c0_61] : memref<128x512xbf16, #tpu.memory_space<vmem>>, vector<128x512xbf16>
    %cst_62 = arith.constant dense<0.000000e+00> : vector<2x512xf32>
    %239 = tpu.matmul %237, %238, %cst_62 {dimension_numbers = #tpu.dot_dimension_numbers<[1], [0], [0], [1], [0, 0, 1, 1], [], []>} : vector<2x128xbf16>, vector<128x512xbf16>, vector<2x512xf32> -> vector<2x512xf32>
    %240 = arith.truncf %236 : vector<2x128xf32> to vector<2x128xbf16>
    %c0_63 = arith.constant 0 : index
    %c0_64 = arith.constant 0 : index
    %241 = vector.load %arg4[%c0_63, %c0_64] : memref<128x512xbf16, #tpu.memory_space<vmem>>, vector<128x512xbf16>
    %cst_65 = arith.constant dense<0.000000e+00> : vector<2x512xf32>
    %242 = tpu.matmul %240, %241, %cst_65 {dimension_numbers = #tpu.dot_dimension_numbers<[1], [0], [0], [1], [0, 0, 1, 1], [], []>} : vector<2x128xbf16>, vector<128x512xbf16>, vector<2x512xf32> -> vector<2x512xf32>
    %243 = arith.addf %239, %242 : vector<2x512xf32>
    %244 = arith.addf %243, %12 : vector<2x512xf32>
    %245 = vector.extract_strided_slice %244 {offsets = [0, 0], sizes = [2, 128], strides = [1, 1]} : vector<2x512xf32> to vector<2x128xf32>
    %246 = arith.negf %245 : vector<2x128xf32>
    %247 = math.exp %246 : vector<2x128xf32>
    %cst_66 = arith.constant 1.000000e+00 : f32
    %248 = vector.broadcast %cst_66 : f32 to vector<2x128xf32>
    %249 = arith.addf %248, %247 : vector<2x128xf32>
    %250 = arith.divf %248, %249 : vector<2x128xf32>
    %251 = vector.extract_strided_slice %244 {offsets = [0, 128], sizes = [2, 128], strides = [1, 1]} : vector<2x512xf32> to vector<2x128xf32>
    %252 = arith.negf %251 : vector<2x128xf32>
    %253 = math.exp %252 : vector<2x128xf32>
    %cst_67 = arith.constant 1.000000e+00 : f32
    %254 = vector.broadcast %cst_67 : f32 to vector<2x128xf32>
    %255 = arith.addf %254, %253 : vector<2x128xf32>
    %256 = arith.divf %254, %255 : vector<2x128xf32>
    %257 = vector.extract_strided_slice %244 {offsets = [0, 256], sizes = [2, 128], strides = [1, 1]} : vector<2x512xf32> to vector<2x128xf32>
    %258 = math.tanh %257 : vector<2x128xf32>
    %259 = vector.extract_strided_slice %244 {offsets = [0, 384], sizes = [2, 128], strides = [1, 1]} : vector<2x512xf32> to vector<2x128xf32>
    %260 = arith.negf %259 : vector<2x128xf32>
    %261 = math.exp %260 : vector<2x128xf32>
    %cst_68 = arith.constant 1.000000e+00 : f32
    %262 = vector.broadcast %cst_68 : f32 to vector<2x128xf32>
    %263 = arith.addf %262, %261 : vector<2x128xf32>
    %264 = arith.divf %262, %263 : vector<2x128xf32>
    %265 = arith.mulf %256, %203 : vector<2x128xf32>
    %266 = arith.mulf %250, %258 : vector<2x128xf32>
    %267 = arith.addf %265, %266 : vector<2x128xf32>
    %268 = math.tanh %267 : vector<2x128xf32>
    %269 = arith.mulf %264, %268 : vector<2x128xf32>
    %270 = vector.extract_strided_slice %9 {offsets = [4, 0, 0], sizes = [1, 2, 512], strides = [1, 1, 1]} : vector<8x2x512xf32> to vector<1x2x512xf32>
    %271 = vector.shape_cast %270 : vector<1x2x512xf32> to vector<2x512xf32>
    %272 = arith.truncf %236 : vector<2x128xf32> to vector<2x128xbf16>
    %c0_69 = arith.constant 0 : index
    %c0_70 = arith.constant 0 : index
    %273 = vector.load %arg2[%c0_69, %c0_70] : memref<128x512xbf16, #tpu.memory_space<vmem>>, vector<128x512xbf16>
    %cst_71 = arith.constant dense<0.000000e+00> : vector<2x512xf32>
    %274 = tpu.matmul %272, %273, %cst_71 {dimension_numbers = #tpu.dot_dimension_numbers<[1], [0], [0], [1], [0, 0, 1, 1], [], []>} : vector<2x128xbf16>, vector<128x512xbf16>, vector<2x512xf32> -> vector<2x512xf32>
    %275 = arith.addf %271, %274 : vector<2x512xf32>
    %276 = vector.extract_strided_slice %275 {offsets = [0, 0], sizes = [2, 128], strides = [1, 1]} : vector<2x512xf32> to vector<2x128xf32>
    %277 = arith.negf %276 : vector<2x128xf32>
    %278 = math.exp %277 : vector<2x128xf32>
    %cst_72 = arith.constant 1.000000e+00 : f32
    %279 = vector.broadcast %cst_72 : f32 to vector<2x128xf32>
    %280 = arith.addf %279, %278 : vector<2x128xf32>
    %281 = arith.divf %279, %280 : vector<2x128xf32>
    %282 = vector.extract_strided_slice %275 {offsets = [0, 128], sizes = [2, 128], strides = [1, 1]} : vector<2x512xf32> to vector<2x128xf32>
    %283 = arith.negf %282 : vector<2x128xf32>
    %284 = math.exp %283 : vector<2x128xf32>
    %cst_73 = arith.constant 1.000000e+00 : f32
    %285 = vector.broadcast %cst_73 : f32 to vector<2x128xf32>
    %286 = arith.addf %285, %284 : vector<2x128xf32>
    %287 = arith.divf %285, %286 : vector<2x128xf32>
    %288 = vector.extract_strided_slice %275 {offsets = [0, 256], sizes = [2, 128], strides = [1, 1]} : vector<2x512xf32> to vector<2x128xf32>
    %289 = math.tanh %288 : vector<2x128xf32>
    %290 = vector.extract_strided_slice %275 {offsets = [0, 384], sizes = [2, 128], strides = [1, 1]} : vector<2x512xf32> to vector<2x128xf32>
    %291 = arith.negf %290 : vector<2x128xf32>
    %292 = math.exp %291 : vector<2x128xf32>
    %cst_74 = arith.constant 1.000000e+00 : f32
    %293 = vector.broadcast %cst_74 : f32 to vector<2x128xf32>
    %294 = arith.addf %293, %292 : vector<2x128xf32>
    %295 = arith.divf %293, %294 : vector<2x128xf32>
    %296 = arith.mulf %287, %234 : vector<2x128xf32>
    %297 = arith.mulf %281, %289 : vector<2x128xf32>
    %298 = arith.addf %296, %297 : vector<2x128xf32>
    %299 = math.tanh %298 : vector<2x128xf32>
    %300 = arith.mulf %295, %299 : vector<2x128xf32>
    %301 = arith.truncf %269 : vector<2x128xf32> to vector<2x128xbf16>
    %c0_75 = arith.constant 0 : index
    %c0_76 = arith.constant 0 : index
    %302 = vector.load %arg5[%c0_75, %c0_76] : memref<128x512xbf16, #tpu.memory_space<vmem>>, vector<128x512xbf16>
    %cst_77 = arith.constant dense<0.000000e+00> : vector<2x512xf32>
    %303 = tpu.matmul %301, %302, %cst_77 {dimension_numbers = #tpu.dot_dimension_numbers<[1], [0], [0], [1], [0, 0, 1, 1], [], []>} : vector<2x128xbf16>, vector<128x512xbf16>, vector<2x512xf32> -> vector<2x512xf32>
    %304 = arith.truncf %300 : vector<2x128xf32> to vector<2x128xbf16>
    %c0_78 = arith.constant 0 : index
    %c0_79 = arith.constant 0 : index
    %305 = vector.load %arg4[%c0_78, %c0_79] : memref<128x512xbf16, #tpu.memory_space<vmem>>, vector<128x512xbf16>
    %cst_80 = arith.constant dense<0.000000e+00> : vector<2x512xf32>
    %306 = tpu.matmul %304, %305, %cst_80 {dimension_numbers = #tpu.dot_dimension_numbers<[1], [0], [0], [1], [0, 0, 1, 1], [], []>} : vector<2x128xbf16>, vector<128x512xbf16>, vector<2x512xf32> -> vector<2x512xf32>
    %307 = arith.addf %303, %306 : vector<2x512xf32>
    %308 = arith.addf %307, %12 : vector<2x512xf32>
    %309 = vector.extract_strided_slice %308 {offsets = [0, 0], sizes = [2, 128], strides = [1, 1]} : vector<2x512xf32> to vector<2x128xf32>
    %310 = arith.negf %309 : vector<2x128xf32>
    %311 = math.exp %310 : vector<2x128xf32>
    %cst_81 = arith.constant 1.000000e+00 : f32
    %312 = vector.broadcast %cst_81 : f32 to vector<2x128xf32>
    %313 = arith.addf %312, %311 : vector<2x128xf32>
    %314 = arith.divf %312, %313 : vector<2x128xf32>
    %315 = vector.extract_strided_slice %308 {offsets = [0, 128], sizes = [2, 128], strides = [1, 1]} : vector<2x512xf32> to vector<2x128xf32>
    %316 = arith.negf %315 : vector<2x128xf32>
    %317 = math.exp %316 : vector<2x128xf32>
    %cst_82 = arith.constant 1.000000e+00 : f32
    %318 = vector.broadcast %cst_82 : f32 to vector<2x128xf32>
    %319 = arith.addf %318, %317 : vector<2x128xf32>
    %320 = arith.divf %318, %319 : vector<2x128xf32>
    %321 = vector.extract_strided_slice %308 {offsets = [0, 256], sizes = [2, 128], strides = [1, 1]} : vector<2x512xf32> to vector<2x128xf32>
    %322 = math.tanh %321 : vector<2x128xf32>
    %323 = vector.extract_strided_slice %308 {offsets = [0, 384], sizes = [2, 128], strides = [1, 1]} : vector<2x512xf32> to vector<2x128xf32>
    %324 = arith.negf %323 : vector<2x128xf32>
    %325 = math.exp %324 : vector<2x128xf32>
    %cst_83 = arith.constant 1.000000e+00 : f32
    %326 = vector.broadcast %cst_83 : f32 to vector<2x128xf32>
    %327 = arith.addf %326, %325 : vector<2x128xf32>
    %328 = arith.divf %326, %327 : vector<2x128xf32>
    %329 = arith.mulf %320, %267 : vector<2x128xf32>
    %330 = arith.mulf %314, %322 : vector<2x128xf32>
    %331 = arith.addf %329, %330 : vector<2x128xf32>
    %332 = math.tanh %331 : vector<2x128xf32>
    %333 = arith.mulf %328, %332 : vector<2x128xf32>
    %334 = vector.extract_strided_slice %9 {offsets = [5, 0, 0], sizes = [1, 2, 512], strides = [1, 1, 1]} : vector<8x2x512xf32> to vector<1x2x512xf32>
    %335 = vector.shape_cast %334 : vector<1x2x512xf32> to vector<2x512xf32>
    %336 = arith.truncf %300 : vector<2x128xf32> to vector<2x128xbf16>
    %c0_84 = arith.constant 0 : index
    %c0_85 = arith.constant 0 : index
    %337 = vector.load %arg2[%c0_84, %c0_85] : memref<128x512xbf16, #tpu.memory_space<vmem>>, vector<128x512xbf16>
    %cst_86 = arith.constant dense<0.000000e+00> : vector<2x512xf32>
    %338 = tpu.matmul %336, %337, %cst_86 {dimension_numbers = #tpu.dot_dimension_numbers<[1], [0], [0], [1], [0, 0, 1, 1], [], []>} : vector<2x128xbf16>, vector<128x512xbf16>, vector<2x512xf32> -> vector<2x512xf32>
    %339 = arith.addf %335, %338 : vector<2x512xf32>
    %340 = vector.extract_strided_slice %339 {offsets = [0, 0], sizes = [2, 128], strides = [1, 1]} : vector<2x512xf32> to vector<2x128xf32>
    %341 = arith.negf %340 : vector<2x128xf32>
    %342 = math.exp %341 : vector<2x128xf32>
    %cst_87 = arith.constant 1.000000e+00 : f32
    %343 = vector.broadcast %cst_87 : f32 to vector<2x128xf32>
    %344 = arith.addf %343, %342 : vector<2x128xf32>
    %345 = arith.divf %343, %344 : vector<2x128xf32>
    %346 = vector.extract_strided_slice %339 {offsets = [0, 128], sizes = [2, 128], strides = [1, 1]} : vector<2x512xf32> to vector<2x128xf32>
    %347 = arith.negf %346 : vector<2x128xf32>
    %348 = math.exp %347 : vector<2x128xf32>
    %cst_88 = arith.constant 1.000000e+00 : f32
    %349 = vector.broadcast %cst_88 : f32 to vector<2x128xf32>
    %350 = arith.addf %349, %348 : vector<2x128xf32>
    %351 = arith.divf %349, %350 : vector<2x128xf32>
    %352 = vector.extract_strided_slice %339 {offsets = [0, 256], sizes = [2, 128], strides = [1, 1]} : vector<2x512xf32> to vector<2x128xf32>
    %353 = math.tanh %352 : vector<2x128xf32>
    %354 = vector.extract_strided_slice %339 {offsets = [0, 384], sizes = [2, 128], strides = [1, 1]} : vector<2x512xf32> to vector<2x128xf32>
    %355 = arith.negf %354 : vector<2x128xf32>
    %356 = math.exp %355 : vector<2x128xf32>
    %cst_89 = arith.constant 1.000000e+00 : f32
    %357 = vector.broadcast %cst_89 : f32 to vector<2x128xf32>
    %358 = arith.addf %357, %356 : vector<2x128xf32>
    %359 = arith.divf %357, %358 : vector<2x128xf32>
    %360 = arith.mulf %351, %298 : vector<2x128xf32>
    %361 = arith.mulf %345, %353 : vector<2x128xf32>
    %362 = arith.addf %360, %361 : vector<2x128xf32>
    %363 = math.tanh %362 : vector<2x128xf32>
    %364 = arith.mulf %359, %363 : vector<2x128xf32>
    %365 = arith.truncf %333 : vector<2x128xf32> to vector<2x128xbf16>
    %c0_90 = arith.constant 0 : index
    %c0_91 = arith.constant 0 : index
    %366 = vector.load %arg5[%c0_90, %c0_91] : memref<128x512xbf16, #tpu.memory_space<vmem>>, vector<128x512xbf16>
    %cst_92 = arith.constant dense<0.000000e+00> : vector<2x512xf32>
    %367 = tpu.matmul %365, %366, %cst_92 {dimension_numbers = #tpu.dot_dimension_numbers<[1], [0], [0], [1], [0, 0, 1, 1], [], []>} : vector<2x128xbf16>, vector<128x512xbf16>, vector<2x512xf32> -> vector<2x512xf32>
    %368 = arith.truncf %364 : vector<2x128xf32> to vector<2x128xbf16>
    %c0_93 = arith.constant 0 : index
    %c0_94 = arith.constant 0 : index
    %369 = vector.load %arg4[%c0_93, %c0_94] : memref<128x512xbf16, #tpu.memory_space<vmem>>, vector<128x512xbf16>
    %cst_95 = arith.constant dense<0.000000e+00> : vector<2x512xf32>
    %370 = tpu.matmul %368, %369, %cst_95 {dimension_numbers = #tpu.dot_dimension_numbers<[1], [0], [0], [1], [0, 0, 1, 1], [], []>} : vector<2x128xbf16>, vector<128x512xbf16>, vector<2x512xf32> -> vector<2x512xf32>
    %371 = arith.addf %367, %370 : vector<2x512xf32>
    %372 = arith.addf %371, %12 : vector<2x512xf32>
    %373 = vector.extract_strided_slice %372 {offsets = [0, 0], sizes = [2, 128], strides = [1, 1]} : vector<2x512xf32> to vector<2x128xf32>
    %374 = arith.negf %373 : vector<2x128xf32>
    %375 = math.exp %374 : vector<2x128xf32>
    %cst_96 = arith.constant 1.000000e+00 : f32
    %376 = vector.broadcast %cst_96 : f32 to vector<2x128xf32>
    %377 = arith.addf %376, %375 : vector<2x128xf32>
    %378 = arith.divf %376, %377 : vector<2x128xf32>
    %379 = vector.extract_strided_slice %372 {offsets = [0, 128], sizes = [2, 128], strides = [1, 1]} : vector<2x512xf32> to vector<2x128xf32>
    %380 = arith.negf %379 : vector<2x128xf32>
    %381 = math.exp %380 : vector<2x128xf32>
    %cst_97 = arith.constant 1.000000e+00 : f32
    %382 = vector.broadcast %cst_97 : f32 to vector<2x128xf32>
    %383 = arith.addf %382, %381 : vector<2x128xf32>
    %384 = arith.divf %382, %383 : vector<2x128xf32>
    %385 = vector.extract_strided_slice %372 {offsets = [0, 256], sizes = [2, 128], strides = [1, 1]} : vector<2x512xf32> to vector<2x128xf32>
    %386 = math.tanh %385 : vector<2x128xf32>
    %387 = vector.extract_strided_slice %372 {offsets = [0, 384], sizes = [2, 128], strides = [1, 1]} : vector<2x512xf32> to vector<2x128xf32>
    %388 = arith.negf %387 : vector<2x128xf32>
    %389 = math.exp %388 : vector<2x128xf32>
    %cst_98 = arith.constant 1.000000e+00 : f32
    %390 = vector.broadcast %cst_98 : f32 to vector<2x128xf32>
    %391 = arith.addf %390, %389 : vector<2x128xf32>
    %392 = arith.divf %390, %391 : vector<2x128xf32>
    %393 = arith.mulf %384, %331 : vector<2x128xf32>
    %394 = arith.mulf %378, %386 : vector<2x128xf32>
    %395 = arith.addf %393, %394 : vector<2x128xf32>
    %396 = math.tanh %395 : vector<2x128xf32>
    %397 = arith.mulf %392, %396 : vector<2x128xf32>
    %398 = vector.extract_strided_slice %9 {offsets = [6, 0, 0], sizes = [1, 2, 512], strides = [1, 1, 1]} : vector<8x2x512xf32> to vector<1x2x512xf32>
    %399 = vector.shape_cast %398 : vector<1x2x512xf32> to vector<2x512xf32>
    %400 = arith.truncf %364 : vector<2x128xf32> to vector<2x128xbf16>
    %c0_99 = arith.constant 0 : index
    %c0_100 = arith.constant 0 : index
    %401 = vector.load %arg2[%c0_99, %c0_100] : memref<128x512xbf16, #tpu.memory_space<vmem>>, vector<128x512xbf16>
    %cst_101 = arith.constant dense<0.000000e+00> : vector<2x512xf32>
    %402 = tpu.matmul %400, %401, %cst_101 {dimension_numbers = #tpu.dot_dimension_numbers<[1], [0], [0], [1], [0, 0, 1, 1], [], []>} : vector<2x128xbf16>, vector<128x512xbf16>, vector<2x512xf32> -> vector<2x512xf32>
    %403 = arith.addf %399, %402 : vector<2x512xf32>
    %404 = vector.extract_strided_slice %403 {offsets = [0, 0], sizes = [2, 128], strides = [1, 1]} : vector<2x512xf32> to vector<2x128xf32>
    %405 = arith.negf %404 : vector<2x128xf32>
    %406 = math.exp %405 : vector<2x128xf32>
    %cst_102 = arith.constant 1.000000e+00 : f32
    %407 = vector.broadcast %cst_102 : f32 to vector<2x128xf32>
    %408 = arith.addf %407, %406 : vector<2x128xf32>
    %409 = arith.divf %407, %408 : vector<2x128xf32>
    %410 = vector.extract_strided_slice %403 {offsets = [0, 128], sizes = [2, 128], strides = [1, 1]} : vector<2x512xf32> to vector<2x128xf32>
    %411 = arith.negf %410 : vector<2x128xf32>
    %412 = math.exp %411 : vector<2x128xf32>
    %cst_103 = arith.constant 1.000000e+00 : f32
    %413 = vector.broadcast %cst_103 : f32 to vector<2x128xf32>
    %414 = arith.addf %413, %412 : vector<2x128xf32>
    %415 = arith.divf %413, %414 : vector<2x128xf32>
    %416 = vector.extract_strided_slice %403 {offsets = [0, 256], sizes = [2, 128], strides = [1, 1]} : vector<2x512xf32> to vector<2x128xf32>
    %417 = math.tanh %416 : vector<2x128xf32>
    %418 = vector.extract_strided_slice %403 {offsets = [0, 384], sizes = [2, 128], strides = [1, 1]} : vector<2x512xf32> to vector<2x128xf32>
    %419 = arith.negf %418 : vector<2x128xf32>
    %420 = math.exp %419 : vector<2x128xf32>
    %cst_104 = arith.constant 1.000000e+00 : f32
    %421 = vector.broadcast %cst_104 : f32 to vector<2x128xf32>
    %422 = arith.addf %421, %420 : vector<2x128xf32>
    %423 = arith.divf %421, %422 : vector<2x128xf32>
    %424 = arith.mulf %415, %362 : vector<2x128xf32>
    %425 = arith.mulf %409, %417 : vector<2x128xf32>
    %426 = arith.addf %424, %425 : vector<2x128xf32>
    %427 = math.tanh %426 : vector<2x128xf32>
    %428 = arith.mulf %423, %427 : vector<2x128xf32>
    %429 = arith.truncf %397 : vector<2x128xf32> to vector<2x128xbf16>
    %c0_105 = arith.constant 0 : index
    %c0_106 = arith.constant 0 : index
    %430 = vector.load %arg5[%c0_105, %c0_106] : memref<128x512xbf16, #tpu.memory_space<vmem>>, vector<128x512xbf16>
    %cst_107 = arith.constant dense<0.000000e+00> : vector<2x512xf32>
    %431 = tpu.matmul %429, %430, %cst_107 {dimension_numbers = #tpu.dot_dimension_numbers<[1], [0], [0], [1], [0, 0, 1, 1], [], []>} : vector<2x128xbf16>, vector<128x512xbf16>, vector<2x512xf32> -> vector<2x512xf32>
    %432 = arith.truncf %428 : vector<2x128xf32> to vector<2x128xbf16>
    %c0_108 = arith.constant 0 : index
    %c0_109 = arith.constant 0 : index
    %433 = vector.load %arg4[%c0_108, %c0_109] : memref<128x512xbf16, #tpu.memory_space<vmem>>, vector<128x512xbf16>
    %cst_110 = arith.constant dense<0.000000e+00> : vector<2x512xf32>
    %434 = tpu.matmul %432, %433, %cst_110 {dimension_numbers = #tpu.dot_dimension_numbers<[1], [0], [0], [1], [0, 0, 1, 1], [], []>} : vector<2x128xbf16>, vector<128x512xbf16>, vector<2x512xf32> -> vector<2x512xf32>
    %435 = arith.addf %431, %434 : vector<2x512xf32>
    %436 = arith.addf %435, %12 : vector<2x512xf32>
    %437 = vector.extract_strided_slice %436 {offsets = [0, 0], sizes = [2, 128], strides = [1, 1]} : vector<2x512xf32> to vector<2x128xf32>
    %438 = arith.negf %437 : vector<2x128xf32>
    %439 = math.exp %438 : vector<2x128xf32>
    %cst_111 = arith.constant 1.000000e+00 : f32
    %440 = vector.broadcast %cst_111 : f32 to vector<2x128xf32>
    %441 = arith.addf %440, %439 : vector<2x128xf32>
    %442 = arith.divf %440, %441 : vector<2x128xf32>
    %443 = vector.extract_strided_slice %436 {offsets = [0, 128], sizes = [2, 128], strides = [1, 1]} : vector<2x512xf32> to vector<2x128xf32>
    %444 = arith.negf %443 : vector<2x128xf32>
    %445 = math.exp %444 : vector<2x128xf32>
    %cst_112 = arith.constant 1.000000e+00 : f32
    %446 = vector.broadcast %cst_112 : f32 to vector<2x128xf32>
    %447 = arith.addf %446, %445 : vector<2x128xf32>
    %448 = arith.divf %446, %447 : vector<2x128xf32>
    %449 = vector.extract_strided_slice %436 {offsets = [0, 256], sizes = [2, 128], strides = [1, 1]} : vector<2x512xf32> to vector<2x128xf32>
    %450 = math.tanh %449 : vector<2x128xf32>
    %451 = vector.extract_strided_slice %436 {offsets = [0, 384], sizes = [2, 128], strides = [1, 1]} : vector<2x512xf32> to vector<2x128xf32>
    %452 = arith.negf %451 : vector<2x128xf32>
    %453 = math.exp %452 : vector<2x128xf32>
    %cst_113 = arith.constant 1.000000e+00 : f32
    %454 = vector.broadcast %cst_113 : f32 to vector<2x128xf32>
    %455 = arith.addf %454, %453 : vector<2x128xf32>
    %456 = arith.divf %454, %455 : vector<2x128xf32>
    %457 = arith.mulf %448, %395 : vector<2x128xf32>
    %458 = arith.mulf %442, %450 : vector<2x128xf32>
    %459 = arith.addf %457, %458 : vector<2x128xf32>
    %460 = math.tanh %459 : vector<2x128xf32>
    %461 = arith.mulf %456, %460 : vector<2x128xf32>
    %462 = vector.extract_strided_slice %9 {offsets = [7, 0, 0], sizes = [1, 2, 512], strides = [1, 1, 1]} : vector<8x2x512xf32> to vector<1x2x512xf32>
    %463 = vector.shape_cast %462 : vector<1x2x512xf32> to vector<2x512xf32>
    %464 = arith.truncf %428 : vector<2x128xf32> to vector<2x128xbf16>
    %c0_114 = arith.constant 0 : index
    %c0_115 = arith.constant 0 : index
    %465 = vector.load %arg2[%c0_114, %c0_115] : memref<128x512xbf16, #tpu.memory_space<vmem>>, vector<128x512xbf16>
    %cst_116 = arith.constant dense<0.000000e+00> : vector<2x512xf32>
    %466 = tpu.matmul %464, %465, %cst_116 {dimension_numbers = #tpu.dot_dimension_numbers<[1], [0], [0], [1], [0, 0, 1, 1], [], []>} : vector<2x128xbf16>, vector<128x512xbf16>, vector<2x512xf32> -> vector<2x512xf32>
    %467 = arith.addf %463, %466 : vector<2x512xf32>
    %468 = vector.extract_strided_slice %467 {offsets = [0, 0], sizes = [2, 128], strides = [1, 1]} : vector<2x512xf32> to vector<2x128xf32>
    %469 = arith.negf %468 : vector<2x128xf32>
    %470 = math.exp %469 : vector<2x128xf32>
    %cst_117 = arith.constant 1.000000e+00 : f32
    %471 = vector.broadcast %cst_117 : f32 to vector<2x128xf32>
    %472 = arith.addf %471, %470 : vector<2x128xf32>
    %473 = arith.divf %471, %472 : vector<2x128xf32>
    %474 = vector.extract_strided_slice %467 {offsets = [0, 128], sizes = [2, 128], strides = [1, 1]} : vector<2x512xf32> to vector<2x128xf32>
    %475 = arith.negf %474 : vector<2x128xf32>
    %476 = math.exp %475 : vector<2x128xf32>
    %cst_118 = arith.constant 1.000000e+00 : f32
    %477 = vector.broadcast %cst_118 : f32 to vector<2x128xf32>
    %478 = arith.addf %477, %476 : vector<2x128xf32>
    %479 = arith.divf %477, %478 : vector<2x128xf32>
    %480 = vector.extract_strided_slice %467 {offsets = [0, 256], sizes = [2, 128], strides = [1, 1]} : vector<2x512xf32> to vector<2x128xf32>
    %481 = math.tanh %480 : vector<2x128xf32>
    %482 = vector.extract_strided_slice %467 {offsets = [0, 384], sizes = [2, 128], strides = [1, 1]} : vector<2x512xf32> to vector<2x128xf32>
    %483 = arith.negf %482 : vector<2x128xf32>
    %484 = math.exp %483 : vector<2x128xf32>
    %cst_119 = arith.constant 1.000000e+00 : f32
    %485 = vector.broadcast %cst_119 : f32 to vector<2x128xf32>
    %486 = arith.addf %485, %484 : vector<2x128xf32>
    %487 = arith.divf %485, %486 : vector<2x128xf32>
    %488 = arith.mulf %479, %426 : vector<2x128xf32>
    %489 = arith.mulf %473, %481 : vector<2x128xf32>
    %490 = arith.addf %488, %489 : vector<2x128xf32>
    %491 = math.tanh %490 : vector<2x128xf32>
    %492 = arith.mulf %487, %491 : vector<2x128xf32>
    %493 = arith.truncf %461 : vector<2x128xf32> to vector<2x128xbf16>
    %c0_120 = arith.constant 0 : index
    %c0_121 = arith.constant 0 : index
    %494 = vector.load %arg5[%c0_120, %c0_121] : memref<128x512xbf16, #tpu.memory_space<vmem>>, vector<128x512xbf16>
    %cst_122 = arith.constant dense<0.000000e+00> : vector<2x512xf32>
    %495 = tpu.matmul %493, %494, %cst_122 {dimension_numbers = #tpu.dot_dimension_numbers<[1], [0], [0], [1], [0, 0, 1, 1], [], []>} : vector<2x128xbf16>, vector<128x512xbf16>, vector<2x512xf32> -> vector<2x512xf32>
    %496 = arith.truncf %492 : vector<2x128xf32> to vector<2x128xbf16>
    %c0_123 = arith.constant 0 : index
    %c0_124 = arith.constant 0 : index
    %497 = vector.load %arg4[%c0_123, %c0_124] : memref<128x512xbf16, #tpu.memory_space<vmem>>, vector<128x512xbf16>
    %cst_125 = arith.constant dense<0.000000e+00> : vector<2x512xf32>
    %498 = tpu.matmul %496, %497, %cst_125 {dimension_numbers = #tpu.dot_dimension_numbers<[1], [0], [0], [1], [0, 0, 1, 1], [], []>} : vector<2x128xbf16>, vector<128x512xbf16>, vector<2x512xf32> -> vector<2x512xf32>
    %499 = arith.addf %495, %498 : vector<2x512xf32>
    %500 = arith.addf %499, %12 : vector<2x512xf32>
    %501 = vector.extract_strided_slice %500 {offsets = [0, 0], sizes = [2, 128], strides = [1, 1]} : vector<2x512xf32> to vector<2x128xf32>
    %502 = arith.negf %501 : vector<2x128xf32>
    %503 = math.exp %502 : vector<2x128xf32>
    %cst_126 = arith.constant 1.000000e+00 : f32
    %504 = vector.broadcast %cst_126 : f32 to vector<2x128xf32>
    %505 = arith.addf %504, %503 : vector<2x128xf32>
    %506 = arith.divf %504, %505 : vector<2x128xf32>
    %507 = vector.extract_strided_slice %500 {offsets = [0, 128], sizes = [2, 128], strides = [1, 1]} : vector<2x512xf32> to vector<2x128xf32>
    %508 = arith.negf %507 : vector<2x128xf32>
    %509 = math.exp %508 : vector<2x128xf32>
    %cst_127 = arith.constant 1.000000e+00 : f32
    %510 = vector.broadcast %cst_127 : f32 to vector<2x128xf32>
    %511 = arith.addf %510, %509 : vector<2x128xf32>
    %512 = arith.divf %510, %511 : vector<2x128xf32>
    %513 = vector.extract_strided_slice %500 {offsets = [0, 256], sizes = [2, 128], strides = [1, 1]} : vector<2x512xf32> to vector<2x128xf32>
    %514 = math.tanh %513 : vector<2x128xf32>
    %515 = vector.extract_strided_slice %500 {offsets = [0, 384], sizes = [2, 128], strides = [1, 1]} : vector<2x512xf32> to vector<2x128xf32>
    %516 = arith.negf %515 : vector<2x128xf32>
    %517 = math.exp %516 : vector<2x128xf32>
    %cst_128 = arith.constant 1.000000e+00 : f32
    %518 = vector.broadcast %cst_128 : f32 to vector<2x128xf32>
    %519 = arith.addf %518, %517 : vector<2x128xf32>
    %520 = arith.divf %518, %519 : vector<2x128xf32>
    %521 = arith.mulf %512, %459 : vector<2x128xf32>
    %522 = arith.mulf %506, %514 : vector<2x128xf32>
    %523 = arith.addf %521, %522 : vector<2x128xf32>
    %524 = math.tanh %523 : vector<2x128xf32>
    %525 = arith.mulf %520, %524 : vector<2x128xf32>
    %526 = arith.truncf %525 : vector<2x128xf32> to vector<2x128xbf16>
    %c0_129 = arith.constant 0 : index
    %c0_130 = arith.constant 0 : index
    %527 = vector.load %arg7[%c0_129, %c0_130] : memref<128x128xbf16, #tpu.memory_space<vmem>>, vector<128x128xbf16>
    %cst_131 = arith.constant dense<0.000000e+00> : vector<2x128xf32>
    %528 = tpu.matmul %526, %527, %cst_131 {dimension_numbers = #tpu.dot_dimension_numbers<[1], [0], [0], [1], [0, 0, 1, 1], [], []>} : vector<2x128xbf16>, vector<128x128xbf16>, vector<2x128xf32> -> vector<2x128xf32>
    %c0_132 = arith.constant 0 : index
    %c0_133 = arith.constant 0 : index
    %529 = vector.load %arg8[%c0_132, %c0_133] : memref<1x128xf32, #tpu.memory_space<vmem>>, vector<1x128xf32>
    %530 = vector.broadcast %529 : vector<1x128xf32> to vector<2x128xf32>
    %531 = arith.addf %528, %530 : vector<2x128xf32>
    %cst_134 = arith.constant 0.000000e+00 : f32
    %532 = vector.broadcast %cst_134 : f32 to vector<2x128xf32>
    %533 = arith.maximumf %531, %532 : vector<2x128xf32>
    %534 = arith.truncf %533 : vector<2x128xf32> to vector<2x128xbf16>
    %c0_135 = arith.constant 0 : index
    %c0_136 = arith.constant 0 : index
    %535 = vector.load %arg9[%c0_135, %c0_136] : memref<128x128xbf16, #tpu.memory_space<vmem>>, vector<128x128xbf16>
    %cst_137 = arith.constant dense<0.000000e+00> : vector<2x128xf32>
    %536 = tpu.matmul %534, %535, %cst_137 {dimension_numbers = #tpu.dot_dimension_numbers<[1], [0], [0], [1], [0, 0, 1, 1], [], []>} : vector<2x128xbf16>, vector<128x128xbf16>, vector<2x128xf32> -> vector<2x128xf32>
    %c0_138 = arith.constant 0 : index
    %c0_139 = arith.constant 0 : index
    %537 = vector.load %arg10[%c0_138, %c0_139] : memref<1x128xf32, #tpu.memory_space<vmem>>, vector<1x128xf32>
    %538 = vector.broadcast %537 : vector<1x128xf32> to vector<2x128xf32>
    %539 = arith.addf %536, %538 : vector<2x128xf32>
    %c0_140 = arith.constant 0 : index
    %c0_141 = arith.constant 0 : index
    %540 = vector.load %arg11[%c0_140, %c0_141] : memref<2x128xf32, #tpu.memory_space<vmem>>, vector<2x128xf32>
    tpu.vector_store %arg11[%c0_140, %c0_141], %539 {strides = array<i32>} : memref<2x128xf32, #tpu.memory_space<vmem>>, vector<2x128xf32>,
    return
  }
}

</mosaic_0001>

<llo_original>
// kernel: tpu_custom_call.1
$region0: #{tpu_custom_call.1}
  #allocation0 [shape = 'u32[]', space=smem, size = 0x4, offset = 0x4, fixed_abs, tag = 'smem constant byte address 0x4 - core index']
  #allocation1 [shape = 'u32[72,128]{1,0:T(1,128)}', space=vmem, size = 0x9000, scoped, tag = 'internal scratch']
  %s0 = inlined_call_operand.hbm [shape: f32[8,2,8], index: 0, kind: input, shape index: {}]
  %s1 = inlined_call_operand.hbm [shape: bf16[8,512], index: 1, kind: input, shape index: {}]
  %s2 = inlined_call_operand.hbm [shape: bf16[128,512], index: 2, kind: input, shape index: {}]
  %s3 = inlined_call_operand.hbm [shape: f32[1,512], index: 3, kind: input, shape index: {}]
  %s4 = inlined_call_operand.hbm [shape: bf16[128,512], index: 4, kind: input, shape index: {}]
  %s5 = inlined_call_operand.hbm [shape: bf16[128,512], index: 5, kind: input, shape index: {}]
  %s6 = inlined_call_operand.vmem [shape: f32[1,512], index: 6, kind: input, shape index: {}]
  %s7 = inlined_call_operand.hbm [shape: bf16[128,128], index: 7, kind: input, shape index: {}]
  %s8 = inlined_call_operand.vmem [shape: f32[1,128], index: 8, kind: input, shape index: {}]
  %s9 = inlined_call_operand.hbm [shape: bf16[128,128], index: 9, kind: input, shape index: {}]
  %s10 = inlined_call_operand.vmem [shape: f32[1,128], index: 10, kind: input, shape index: {}]
  %s11 = inlined_call_operand.hbm [shape: f32[2,128], index: 11, kind: output, shape index: {}]
  %s12 = sld [smem:[#allocation0]]
  $region86: #{tpu_custom_call.1} parent=0
    _
  %s14 = ssub.s32 1, %s12
  %s15 = scalar_select 0, %s14, %s12
  $region1: #{tpu_custom_call.1} parent=0
    #allocation2 [shape = 'u8[8192]{0}', space=vmem, size = 0x2000, scoped, tag = 'input window, operand 0, single buffered']
    #allocation3 [shape = 's32[1]{0}', space=sflag, size = 0x4, scoped, tag = 'scoped memory for tpu_custom_call.1']
    #allocation4 [shape = 's32[1]{0}', space=sflag, size = 0x4, scoped, tag = 'scoped memory for tpu_custom_call.1']
    #allocation5 [shape = 'u8[8192]{0}', space=vmem, size = 0x2000, scoped, tag = 'input window, operand 1, single buffered']
    #allocation6 [shape = 's32[1]{0}', space=sflag, size = 0x4, scoped, tag = 'scoped memory for tpu_custom_call.1']
    #allocation7 [shape = 'u8[131072]{0}', space=vmem, size = 0x20000, scoped, tag = 'input window, operand 2, single buffered']
    #allocation8 [shape = 'u8[2048]{0}', space=vmem, size = 0x800, scoped, tag = 'input window, operand 3, single buffered']
    #allocation9 [shape = 's32[1]{0}', space=sflag, size = 0x4, scoped, tag = 'scoped memory for tpu_custom_call.1']
    #allocation10 [shape = 'u8[131072]{0}', space=vmem, size = 0x20000, scoped, tag = 'input window, operand 4, single buffered']
    #allocation11 [shape = 'u8[131072]{0}', space=vmem, size = 0x20000, scoped, tag = 'input window, operand 5, single buffered']
    #allocation12 [shape = 's32[1]{0}', space=sflag, size = 0x4, scoped, tag = 'scoped memory for tpu_custom_call.1']
    #allocation13 [shape = 'u8[32768]{0}', space=vmem, size = 0x8000, scoped, tag = 'input window, operand 7, single buffered']
    #allocation14 [shape = 'u8[32768]{0}', space=vmem, size = 0x8000, scoped, tag = 'input window, operand 9, single buffered']
    #allocation15 [shape = 's32[1]{0}', space=sflag, size = 0x4, scoped, tag = 'scoped memory for tpu_custom_call.1']
    #allocation16 [shape = 'u8[1024]{0}', space=vmem, size = 0x400, scoped, tag = 'output window, operand 0, single buffered']
    %16 = vsyncpa [#allocation3], 0
    %17 = vsyncpa [#allocation6], 0
    %18 = vsyncpa [#allocation9], 0
    %19 = vsyncpa [#allocation12], 0
    %20 = vsyncpa [#allocation15], 0
    %21 = vsyncpa [#allocation4], 0
    // Predicated region
    $region2: #{tpu_custom_call.1} parent=1 // pred_check
      _
    $region3: #{tpu_custom_call.1} parent=1 // pred_check_branch
      %23 = sbr.rel (0) target = $region5
    $region4: #{tpu_custom_call.1} parent=1 // pred_region
      %25 = vsyncadd [#allocation3], 0
      %s26 = sshll.u32 %s0, 4
      %s27 = int_to_ptr.hbm [resolvable:$true] %s26
      %s28 = sshll.u32 [#allocation2], 4
      %s29 = int_to_ptr.vmem [resolvable:$true] %s28
      %34 = dma.hbm_to_vmem [thread:$0]  %s27, 256, %s29, [#allocation3], 32, 32, 2
    $region5: #{tpu_custom_call.1} parent=1 // pred_fallthru
      _
    // Predicated region
    $region6: #{tpu_custom_call.1} parent=1 // pred_check
      _
    $region7: #{tpu_custom_call.1} parent=1 // pred_check_branch
      %36 = sbr.rel (0) target = $region9
    $region8: #{tpu_custom_call.1} parent=1 // pred_region
      %38 = vsyncadd [#allocation6], 0
      %s40 = sshll.u32 %s1, 4
      %s41 = int_to_ptr.hbm [resolvable:$true] %s40
      %s42 = sshll.u32 [#allocation5], 4
      %s43 = int_to_ptr.vmem [resolvable:$true] %s42
      %45 = dma.hbm_to_vmem [thread:$0]  %s41, 256, %s43, [#allocation6]
    $region9: #{tpu_custom_call.1} parent=1 // pred_fallthru
      _
    // Predicated region
    $region10: #{tpu_custom_call.1} parent=1 // pred_check
      _
    $region11: #{tpu_custom_call.1} parent=1 // pred_check_branch
      %47 = sbr.rel (0) target = $region13
    $region12: #{tpu_custom_call.1} parent=1 // pred_region
      %49 = vsyncadd [#allocation6], 0
      %s50 = sshll.u32 %s2, 4
      %s51 = int_to_ptr.hbm [resolvable:$true] %s50
      %s52 = sshll.u32 [#allocation7], 4
      %s53 = int_to_ptr.vmem [resolvable:$true] %s52
      %58 = dma.hbm_to_vmem [thread:$0]  %s51, 4096, %s53, [#allocation6], 256, 256, 16
    $region13: #{tpu_custom_call.1} parent=1 // pred_fallthru
      _
    // Predicated region
    $region14: #{tpu_custom_call.1} parent=1 // pred_check
      _
    $region15: #{tpu_custom_call.1} parent=1 // pred_check_branch
      %60 = sbr.rel (0) target = $region17
    $region16: #{tpu_custom_call.1} parent=1 // pred_region
      %62 = vsyncadd [#allocation9], 0
      %s64 = sshll.u32 %s3, 4
      %s65 = int_to_ptr.hbm [resolvable:$true] %s64
      %s66 = sshll.u32 [#allocation8], 4
      %s67 = int_to_ptr.vmem [resolvable:$true] %s66
      %69 = dma.hbm_to_vmem [thread:$0]  %s65, 64, %s67, [#allocation9]
    $region17: #{tpu_custom_call.1} parent=1 // pred_fallthru
      _
    // Predicated region
    $region18: #{tpu_custom_call.1} parent=1 // pred_check
      _
    $region19: #{tpu_custom_call.1} parent=1 // pred_check_branch
      %71 = sbr.rel (0) target = $region21
    $region20: #{tpu_custom_call.1} parent=1 // pred_region
      %73 = vsyncadd [#allocation9], 0
      %s74 = sshll.u32 %s4, 4
      %s75 = int_to_ptr.hbm [resolvable:$true] %s74
      %s76 = sshll.u32 [#allocation10], 4
      %s77 = int_to_ptr.vmem [resolvable:$true] %s76
      %82 = dma.hbm_to_vmem [thread:$0]  %s75, 4096, %s77, [#allocation9], 256, 256, 16
    $region21: #{tpu_custom_call.1} parent=1 // pred_fallthru
      _
    // Predicated region
    $region22: #{tpu_custom_call.1} parent=1 // pred_check
      _
    $region23: #{tpu_custom_call.1} parent=1 // pred_check_branch
      %84 = sbr.rel (0) target = $region25
    $region24: #{tpu_custom_call.1} parent=1 // pred_region
      %86 = vsyncadd [#allocation12], 0
      %s87 = sshll.u32 %s5, 4
      %s88 = int_to_ptr.hbm [resolvable:$true] %s87
      %s89 = sshll.u32 [#allocation11], 4
      %s90 = int_to_ptr.vmem [resolvable:$true] %s89
      %95 = dma.hbm_to_vmem [thread:$0]  %s88, 4096, %s90, [#allocation12], 256, 256, 16
    $region25: #{tpu_custom_call.1} parent=1 // pred_fallthru
      _
    // Predicated region
    $region26: #{tpu_custom_call.1} parent=1 // pred_check
      _
    $region27: #{tpu_custom_call.1} parent=1 // pred_check_branch
      %97 = sbr.rel (0) target = $region29
    $region28: #{tpu_custom_call.1} parent=1 // pred_region
      _
    $region29: #{tpu_custom_call.1} parent=1 // pred_fallthru
      _
    // Predicated region
    $region30: #{tpu_custom_call.1} parent=1 // pred_check
      _
    $region31: #{tpu_custom_call.1} parent=1 // pred_check_branch
      %99 = sbr.rel (0) target = $region33
    $region32: #{tpu_custom_call.1} parent=1 // pred_region
      %101 = vsyncadd [#allocation12], 0
      %s102 = sshll.u32 %s7, 4
      %s103 = int_to_ptr.hbm [resolvable:$true] %s102
      %s104 = sshll.u32 [#allocation13], 4
      %s105 = int_to_ptr.vmem [resolvable:$true] %s104
      %110 = dma.hbm_to_vmem [thread:$0]  %s103, 1024, %s105, [#allocation12], 64, 64, 4
    $region33: #{tpu_custom_call.1} parent=1 // pred_fallthru
      _
    // Predicated region
    $region34: #{tpu_custom_call.1} parent=1 // pred_check
      _
    $region35: #{tpu_custom_call.1} parent=1 // pred_check_branch
      %112 = sbr.rel (0) target = $region37
    $region36: #{tpu_custom_call.1} parent=1 // pred_region
      _
    $region37: #{tpu_custom_call.1} parent=1 // pred_fallthru
      _
    // Predicated region
    $region38: #{tpu_custom_call.1} parent=1 // pred_check
      _
    $region39: #{tpu_custom_call.1} parent=1 // pred_check_branch
      %114 = sbr.rel (0) target = $region41
    $region40: #{tpu_custom_call.1} parent=1 // pred_region
      %116 = vsyncadd [#allocation15], 0
      %s117 = sshll.u32 %s9, 4
      %s118 = int_to_ptr.hbm [resolvable:$true] %s117
      %s119 = sshll.u32 [#allocation14], 4
      %s120 = int_to_ptr.vmem [resolvable:$true] %s119
      %125 = dma.hbm_to_vmem [thread:$0]  %s118, 1024, %s120, [#allocation15], 64, 64, 4
    $region41: #{tpu_custom_call.1} parent=1 // pred_fallthru
      _
    // Predicated region
    $region42: #{tpu_custom_call.1} parent=1 // pred_check
      _
    $region43: #{tpu_custom_call.1} parent=1 // pred_check_branch
      %127 = sbr.rel (0) target = $region45
    $region44: #{tpu_custom_call.1} parent=1 // pred_region
      _
    $region45: #{tpu_custom_call.1} parent=1 // pred_fallthru
      _
    // Predicated region
    $region46: #{tpu_custom_call.1} parent=1 // pred_check
      _
    $region47: #{tpu_custom_call.1} parent=1 // pred_check_branch
      %129 = sbr.rel (0) target = $region49
    $region48: #{tpu_custom_call.1} parent=1 // pred_region
      %131 = dma.done [#allocation3], 256
    $region49: #{tpu_custom_call.1} parent=1 // pred_fallthru
      _
    // Predicated region
    $region50: #{tpu_custom_call.1} parent=1 // pred_check
      _
    $region51: #{tpu_custom_call.1} parent=1 // pred_check_branch
      %133 = sbr.rel (0) target = $region53
    $region52: #{tpu_custom_call.1} parent=1 // pred_region
      %135 = dma.done [#allocation6], 256
    $region53: #{tpu_custom_call.1} parent=1 // pred_fallthru
      _
    // Predicated region
    $region54: #{tpu_custom_call.1} parent=1 // pred_check
      _
    $region55: #{tpu_custom_call.1} parent=1 // pred_check_branch
      %137 = sbr.rel (0) target = $region57
    $region56: #{tpu_custom_call.1} parent=1 // pred_region
      %139 = dma.done [#allocation6], 4096
    $region57: #{tpu_custom_call.1} parent=1 // pred_fallthru
      _
    // Predicated region
    $region58: #{tpu_custom_call.1} parent=1 // pred_check
      _
    $region59: #{tpu_custom_call.1} parent=1 // pred_check_branch
      %141 = sbr.rel (0) target = $region61
    $region60: #{tpu_custom_call.1} parent=1 // pred_region
      %143 = dma.done [#allocation9], 64
    $region61: #{tpu_custom_call.1} parent=1 // pred_fallthru
      _
    // Predicated region
    $region62: #{tpu_custom_call.1} parent=1 // pred_check
      _
    $region63: #{tpu_custom_call.1} parent=1 // pred_check_branch
      %145 = sbr.rel (0) target = $region65
    $region64: #{tpu_custom_call.1} parent=1 // pred_region
      %147 = dma.done [#allocation9], 4096
    $region65: #{tpu_custom_call.1} parent=1 // pred_fallthru
      _
    // Predicated region
    $region66: #{tpu_custom_call.1} parent=1 // pred_check
      _
    $region67: #{tpu_custom_call.1} parent=1 // pred_check_branch
      %149 = sbr.rel (0) target = $region69
    $region68: #{tpu_custom_call.1} parent=1 // pred_region
      %151 = dma.done [#allocation12], 4096
    $region69: #{tpu_custom_call.1} parent=1 // pred_fallthru
      _
    // Predicated region
    $region70: #{tpu_custom_call.1} parent=1 // pred_check
      _
    $region71: #{tpu_custom_call.1} parent=1 // pred_check_branch
      %153 = sbr.rel (0) target = $region73
    $region72: #{tpu_custom_call.1} parent=1 // pred_region
      %155 = dma.done [#allocation12], 1024
    $region73: #{tpu_custom_call.1} parent=1 // pred_fallthru
      _
    // Predicated region
    $region74: #{tpu_custom_call.1} parent=1 // pred_check
      _
    $region75: #{tpu_custom_call.1} parent=1 // pred_check_branch
      %157 = sbr.rel (0) target = $region77
    $region76: #{tpu_custom_call.1} parent=1 // pred_region
      %159 = dma.done [#allocation15], 1024
    $region77: #{tpu_custom_call.1} parent=1 // pred_fallthru
      _
    %v161 = vld [vmem:[#allocation2] sm:$0x3]
    %v162 = vld [vmem:[#allocation2 + $0x2] sm:$0x3]
    %v163 = vld [vmem:[#allocation2 + $0x4] sm:$0x3]
    %v164 = vld [vmem:[#allocation2 + $0x6] sm:$0x3]
    %v165 = vld [vmem:[#allocation2 + $0x8] sm:$0x3]
    %v166 = vld [vmem:[#allocation2 + $0xa] sm:$0x3]
    %v167 = vld [vmem:[#allocation2 + $0xc] sm:$0x3]
    %v168 = vld [vmem:[#allocation2 + $0xe] sm:$0x3]
    %177 = vst [vmem:[#allocation1] ss:$4 sm:$0xff] %v161
    %s178 = scalar_lea.vmem [#allocation1], 1
    %179 = vst [vmem:[%s178] ss:$4 sm:$0xff] %v162
    %s180 = scalar_lea.vmem [#allocation1], 2
    %181 = vst [vmem:[%s180] ss:$4 sm:$0xff] %v163
    %s182 = scalar_lea.vmem [#allocation1], 3
    %183 = vst [vmem:[%s182] ss:$4 sm:$0xff] %v164
    %s184 = scalar_lea.vmem [#allocation1], 32
    %185 = vst [vmem:[%s184] ss:$4 sm:$0xff] %v165
    %s186 = scalar_lea.vmem [#allocation1], 33
    %187 = vst [vmem:[%s186] ss:$4 sm:$0xff] %v166
    %s188 = scalar_lea.vmem [#allocation1], 34
    %189 = vst [vmem:[%s188] ss:$4 sm:$0xff] %v167
    %s190 = scalar_lea.vmem [#allocation1], 35
    %191 = vst [vmem:[%s190] ss:$4 sm:$0xff] %v168
    %v192 = vld.sshfl [vmem:[#allocation1] sm:$0xff pattern:$0x73625140]
    %v193 = vld.sshfl [vmem:[#allocation1 + $0x20] sm:$0xff pattern:$0x73625140]
    %v196 = vpack.c.bf16 %v193, %v192
    %v197 = vld [vmem:[#allocation5] sm:$0xff]
    %v198 = vld [vmem:[#allocation5 + $0x8] sm:$0xff]
    %v201 = vunpack.c.l.b16 %v197
    %v202 = vunpack.c.h.b16 %v197
    %v203 = vunpack.c.l.b16 %v198
    %v204 = vunpack.c.h.b16 %v198
    %v205 = vpack.c.b16 %v201, %v201
    %v206 = vpack.c.b16 %v202, %v202
    %v207 = vpack.c.b16 %v203, %v203
    %v208 = vpack.c.b16 %v204, %v204
    %vm209 = vcmask 64512
    %v211 = vsel %vm209, %v196, 0
    %vm213 = vcmask 1043456
    %v215 = vsel %vm213, %v205, 0
    %v218 = vsel %vm213, %v206, 0
    %v221 = vsel %vm213, %v207, 0
    %v224 = vsel %vm213, %v208, 0
    %226 = vmatpush.bf16.msra.mxu0 0
    %227 = vmatpush.bf16.msra.mxu0 0
    %228 = vmatpush.bf16.msra.mxu0 0
    %229 = vmatpush.bf16.msra.mxu0 0
    %230 = vmatpush.bf16.msra.mxu0 0
    %231 = vmatpush.bf16.msra.mxu0 0
    %232 = vmatpush.bf16.msra.mxu0 0
    %233 = vmatpush.bf16.msra.mxu0 %v215
    %234 = vmatmul.bf16.gmra.mxu0 %v211
    %v235 = vpop.f32.mrf.mxu0
    %v236 = vadd.f32 0.0, %v235
    %v237 = vpop.f32.mrf.mxu0
    %v238 = vadd.f32 0.0, %v237
    %239 = vdwg.mxu0
    %240 = vmatpush.bf16.msra.mxu0 0
    %241 = vmatpush.bf16.msra.mxu0 0
    %242 = vmatpush.bf16.msra.mxu0 0
    %243 = vmatpush.bf16.msra.mxu0 0
    %244 = vmatpush.bf16.msra.mxu0 0
    %245 = vmatpush.bf16.msra.mxu0 0
    %246 = vmatpush.bf16.msra.mxu0 0
    %247 = vmatpush.bf16.msra.mxu0 %v218
    %248 = vmatmul.bf16.gmra.mxu0 %v211
    %v249 = vpop.f32.mrf.mxu0
    %v250 = vadd.f32 0.0, %v249
    %v251 = vpop.f32.mrf.mxu0
    %v252 = vadd.f32 0.0, %v251
    %253 = vdwg.mxu0
    %254 = vmatpush.bf16.msra.mxu0 0
    %255 = vmatpush.bf16.msra.mxu0 0
    %256 = vmatpush.bf16.msra.mxu0 0
    %257 = vmatpush.bf16.msra.mxu0 0
    %258 = vmatpush.bf16.msra.mxu0 0
    %259 = vmatpush.bf16.msra.mxu0 0
    %260 = vmatpush.bf16.msra.mxu0 0
    %261 = vmatpush.bf16.msra.mxu0 %v221
    %262 = vmatmul.bf16.gmra.mxu0 %v211
    %v263 = vpop.f32.mrf.mxu0
    %v264 = vadd.f32 0.0, %v263
    %v265 = vpop.f32.mrf.mxu0
    %v266 = vadd.f32 0.0, %v265
    %267 = vdwg.mxu0
    %268 = vmatpush.bf16.msra.mxu0 0
    %269 = vmatpush.bf16.msra.mxu0 0
    %270 = vmatpush.bf16.msra.mxu0 0
    %271 = vmatpush.bf16.msra.mxu0 0
    %272 = vmatpush.bf16.msra.mxu0 0
    %273 = vmatpush.bf16.msra.mxu0 0
    %274 = vmatpush.bf16.msra.mxu0 0
    %275 = vmatpush.bf16.msra.mxu0 %v224
    %276 = vmatmul.bf16.gmra.mxu0 %v211
    %v277 = vpop.f32.mrf.mxu0
    %v278 = vadd.f32 0.0, %v277
    %v279 = vpop.f32.mrf.mxu0
    %v280 = vadd.f32 0.0, %v279
    %281 = vdwg.mxu0
    %v290 = vrot.slane %v250, 6
    %v291 = vrot.slane %v264, 4
    %v292 = vrot.slane %v278, 2
    %v293 = vrot.slane %v252, 6
    %v294 = vrot.slane %v266, 4
    %v295 = vrot.slane %v280, 2
    %vm296 = vcmask 1041408
    %v297 = vsel %vm296, %v236, %v290
    %vm298 = vcmask 1045508
    %v299 = vsel %vm298, %v291, %v292
    %v300 = vsel %vm213, %v297, %v299
    %vm301 = vcmask 1043458
    %v302 = vsel %vm301, %v236, %v290
    %vm303 = vcmask 1045504
    %v304 = vsel %vm303, %v292, %v291
    %vm305 = vcmask 1045506
    %v306 = vsel %vm305, %v302, %v304
    %v307 = vrot.slane %v306, 2
    %v308 = vsel %vm298, %v236, %v290
    %v309 = vsel %vm296, %v291, %v292
    %v310 = vsel %vm213, %v309, %v308
    %v311 = vrot.slane %v310, 4
    %v312 = vsel %vm303, %v290, %v236
    %v313 = vsel %vm301, %v291, %v292
    %v314 = vsel %vm305, %v313, %v312
    %v315 = vrot.slane %v314, 6
    %v316 = vsel %vm296, %v238, %v293
    %v317 = vsel %vm298, %v294, %v295
    %v318 = vsel %vm213, %v316, %v317
    %v319 = vsel %vm301, %v238, %v293
    %v320 = vsel %vm303, %v295, %v294
    %v321 = vsel %vm305, %v319, %v320
    %v322 = vrot.slane %v321, 2
    %v323 = vsel %vm298, %v238, %v293
    %v324 = vsel %vm296, %v294, %v295
    %v325 = vsel %vm213, %v324, %v323
    %v326 = vrot.slane %v325, 4
    %v327 = vsel %vm303, %v293, %v238
    %v328 = vsel %vm301, %v294, %v295
    %v329 = vsel %vm305, %v328, %v327
    %v330 = vrot.slane %v329, 6
    %v339 = vld [vmem:[#allocation8] sm:$0xf]
    %v341 = vperm.slane %v339, 0
    %v342 = vperm.slane %v339, 1
    %v343 = vperm.slane %v339, 2
    %v344 = vperm.slane %v339, 3
    %v345 = vrot.slane %v342, 6
    %v346 = vrot.slane %v343, 4
    %v347 = vrot.slane %v344, 2
    %v348 = vsel %vm296, %v341, %v345
    %v349 = vsel %vm298, %v346, %v347
    %v350 = vsel %vm213, %v348, %v349
    %v352 = vadd.f32 %v300, %v350
    %v353 = vadd.f32 %v307, %v350
    %v354 = vadd.f32 %v311, %v350
    %v355 = vadd.f32 %v315, %v350
    %v356 = vadd.f32 %v318, %v350
    %v357 = vadd.f32 %v322, %v350
    %v358 = vadd.f32 %v326, %v350
    %v359 = vadd.f32 %v330, %v350
    %v360 = vld [vmem:[%s6] sm:$0xf]
    %v362 = vperm.slane %v360, 0
    %v363 = vperm.slane %v360, 1
    %v364 = vperm.slane %v360, 2
    %v365 = vperm.slane %v360, 3
    %v370 = vld [vmem:[#allocation7] sm:$0xff]
    %v371 = vld [vmem:[#allocation7 + $0x8] sm:$0xff]
    %v372 = vld [vmem:[#allocation7 + $0x10] sm:$0xff]
    %v373 = vld [vmem:[#allocation7 + $0x18] sm:$0xff]
    %v374 = vld [vmem:[#allocation7 + $0x20] sm:$0xff]
    %v375 = vld [vmem:[#allocation7 + $0x28] sm:$0xff]
    %v376 = vld [vmem:[#allocation7 + $0x30] sm:$0xff]
    %v377 = vld [vmem:[#allocation7 + $0x38] sm:$0xff]
    %v378 = vld [vmem:[#allocation7 + $0x40] sm:$0xff]
    %v379 = vld [vmem:[#allocation7 + $0x48] sm:$0xff]
    %v380 = vld [vmem:[#allocation7 + $0x50] sm:$0xff]
    %v381 = vld [vmem:[#allocation7 + $0x58] sm:$0xff]
    %v382 = vld [vmem:[#allocation7 + $0x60] sm:$0xff]
    %v383 = vld [vmem:[#allocation7 + $0x68] sm:$0xff]
    %v384 = vld [vmem:[#allocation7 + $0x70] sm:$0xff]
    %v385 = vld [vmem:[#allocation7 + $0x78] sm:$0xff]
    %v386 = vld [vmem:[#allocation7 + $0x80] sm:$0xff]
    %v387 = vld [vmem:[#allocation7 + $0x88] sm:$0xff]
    %v388 = vld [vmem:[#allocation7 + $0x90] sm:$0xff]
    %v389 = vld [vmem:[#allocation7 + $0x98] sm:$0xff]
    %v390 = vld [vmem:[#allocation7 + $0xa0] sm:$0xff]
    %v391 = vld [vmem:[#allocation7 + $0xa8] sm:$0xff]
    %v392 = vld [vmem:[#allocation7 + $0xb0] sm:$0xff]
    %v393 = vld [vmem:[#allocation7 + $0xb8] sm:$0xff]
    %v394 = vld [vmem:[#allocation7 + $0xc0] sm:$0xff]
    %v395 = vld [vmem:[#allocation7 + $0xc8] sm:$0xff]
    %v396 = vld [vmem:[#allocation7 + $0xd0] sm:$0xff]
    %v397 = vld [vmem:[#allocation7 + $0xd8] sm:$0xff]
    %v398 = vld [vmem:[#allocation7 + $0xe0] sm:$0xff]
    %v399 = vld [vmem:[#allocation7 + $0xe8] sm:$0xff]
    %v400 = vld [vmem:[#allocation7 + $0xf0] sm:$0xff]
    %v401 = vld [vmem:[#allocation7 + $0xf8] sm:$0xff]
    %v434 = vunpack.c.l.b16 %v370
    %v435 = vunpack.c.h.b16 %v370
    %v436 = vunpack.c.l.b16 %v371
    %v437 = vunpack.c.h.b16 %v371
    %v438 = vunpack.c.l.b16 %v372
    %v439 = vunpack.c.h.b16 %v372
    %v440 = vunpack.c.l.b16 %v373
    %v441 = vunpack.c.h.b16 %v373
    %v442 = vunpack.c.l.b16 %v374
    %v443 = vunpack.c.h.b16 %v374
    %v444 = vunpack.c.l.b16 %v375
    %v445 = vunpack.c.h.b16 %v375
    %v446 = vunpack.c.l.b16 %v376
    %v447 = vunpack.c.h.b16 %v376
    %v448 = vunpack.c.l.b16 %v377
    %v449 = vunpack.c.h.b16 %v377
    %v450 = vunpack.c.l.b16 %v378
    %v451 = vunpack.c.h.b16 %v378
    %v452 = vunpack.c.l.b16 %v379
    %v453 = vunpack.c.h.b16 %v379
    %v454 = vunpack.c.l.b16 %v380
    %v455 = vunpack.c.h.b16 %v380
    %v456 = vunpack.c.l.b16 %v381
    %v457 = vunpack.c.h.b16 %v381
    %v458 = vunpack.c.l.b16 %v382
    %v459 = vunpack.c.h.b16 %v382
    %v460 = vunpack.c.l.b16 %v383
    %v461 = vunpack.c.h.b16 %v383
    %v462 = vunpack.c.l.b16 %v384
    %v463 = vunpack.c.h.b16 %v384
    %v464 = vunpack.c.l.b16 %v385
    %v465 = vunpack.c.h.b16 %v385
    %v466 = vunpack.c.l.b16 %v386
    %v467 = vunpack.c.h.b16 %v386
    %v468 = vunpack.c.l.b16 %v387
    %v469 = vunpack.c.h.b16 %v387
    %v470 = vunpack.c.l.b16 %v388
    %v471 = vunpack.c.h.b16 %v388
    %v472 = vunpack.c.l.b16 %v389
    %v473 = vunpack.c.h.b16 %v389
    %v474 = vunpack.c.l.b16 %v390
    %v475 = vunpack.c.h.b16 %v390
    %v476 = vunpack.c.l.b16 %v391
    %v477 = vunpack.c.h.b16 %v391
    %v478 = vunpack.c.l.b16 %v392
    %v479 = vunpack.c.h.b16 %v392
    %v480 = vunpack.c.l.b16 %v393
    %v481 = vunpack.c.h.b16 %v393
    %v482 = vunpack.c.l.b16 %v394
    %v483 = vunpack.c.h.b16 %v394
    %v484 = vunpack.c.l.b16 %v395
    %v485 = vunpack.c.h.b16 %v395
    %v486 = vunpack.c.l.b16 %v396
    %v487 = vunpack.c.h.b16 %v396
    %v488 = vunpack.c.l.b16 %v397
    %v489 = vunpack.c.h.b16 %v397
    %v490 = vunpack.c.l.b16 %v398
    %v491 = vunpack.c.h.b16 %v398
    %v492 = vunpack.c.l.b16 %v399
    %v493 = vunpack.c.h.b16 %v399
    %v494 = vunpack.c.l.b16 %v400
    %v495 = vunpack.c.h.b16 %v400
    %v496 = vunpack.c.l.b16 %v401
    %v497 = vunpack.c.h.b16 %v401
    %v498 = vpack.c.b16 %v438, %v434
    %v499 = vpack.c.b16 %v439, %v435
    %v500 = vpack.c.b16 %v440, %v436
    %v501 = vpack.c.b16 %v441, %v437
    %v502 = vpack.c.b16 %v446, %v442
    %v503 = vpack.c.b16 %v447, %v443
    %v504 = vpack.c.b16 %v448, %v444
    %v505 = vpack.c.b16 %v449, %v445
    %v506 = vpack.c.b16 %v454, %v450
    %v507 = vpack.c.b16 %v455, %v451
    %v508 = vpack.c.b16 %v456, %v452
    %v509 = vpack.c.b16 %v457, %v453
    %v510 = vpack.c.b16 %v462, %v458
    %v511 = vpack.c.b16 %v463, %v459
    %v512 = vpack.c.b16 %v464, %v460
    %v513 = vpack.c.b16 %v465, %v461
    %v514 = vpack.c.b16 %v470, %v466
    %v515 = vpack.c.b16 %v471, %v467
    %v516 = vpack.c.b16 %v472, %v468
    %v517 = vpack.c.b16 %v473, %v469
    %v518 = vpack.c.b16 %v478, %v474
    %v519 = vpack.c.b16 %v479, %v475
    %v520 = vpack.c.b16 %v480, %v476
    %v521 = vpack.c.b16 %v481, %v477
    %v522 = vpack.c.b16 %v486, %v482
    %v523 = vpack.c.b16 %v487, %v483
    %v524 = vpack.c.b16 %v488, %v484
    %v525 = vpack.c.b16 %v489, %v485
    %v526 = vpack.c.b16 %v494, %v490
    %v527 = vpack.c.b16 %v495, %v491
    %v528 = vpack.c.b16 %v496, %v492
    %v529 = vpack.c.b16 %v497, %v493
    %562 = vmatpush.bf16.msra.mxu0 %v526
    %563 = vmatpush.bf16.msra.mxu0 %v522
    %564 = vmatpush.bf16.msra.mxu0 %v518
    %565 = vmatpush.bf16.msra.mxu0 %v514
    %566 = vmatpush.bf16.msra.mxu0 %v510
    %567 = vmatpush.bf16.msra.mxu0 %v506
    %568 = vmatpush.bf16.msra.mxu0 %v502
    %569 = vmatpush.bf16.msra.mxu0 %v498
    %570 = vmatmul.bf16.gmra.mxu0 0
    %v571 = vpop.f32.mrf.mxu0
    %v572 = vadd.f32 0.0, %v571
    %v573 = vpop.f32.mrf.mxu0
    %574 = vdwg.mxu0
    %575 = vmatpush.bf16.msra.mxu0 %v527
    %576 = vmatpush.bf16.msra.mxu0 %v523
    %577 = vmatpush.bf16.msra.mxu0 %v519
    %578 = vmatpush.bf16.msra.mxu0 %v515
    %579 = vmatpush.bf16.msra.mxu0 %v511
    %580 = vmatpush.bf16.msra.mxu0 %v507
    %581 = vmatpush.bf16.msra.mxu0 %v503
    %582 = vmatpush.bf16.msra.mxu0 %v499
    %583 = vmatmul.bf16.gmra.mxu0 0
    %v584 = vpop.f32.mrf.mxu0
    %v585 = vadd.f32 0.0, %v584
    %v586 = vpop.f32.mrf.mxu0
    %587 = vdwg.mxu0
    %588 = vmatpush.bf16.msra.mxu0 %v528
    %589 = vmatpush.bf16.msra.mxu0 %v524
    %590 = vmatpush.bf16.msra.mxu0 %v520
    %591 = vmatpush.bf16.msra.mxu0 %v516
    %592 = vmatpush.bf16.msra.mxu0 %v512
    %593 = vmatpush.bf16.msra.mxu0 %v508
    %594 = vmatpush.bf16.msra.mxu0 %v504
    %595 = vmatpush.bf16.msra.mxu0 %v500
    %596 = vmatmul.bf16.gmra.mxu0 0
    %v597 = vpop.f32.mrf.mxu0
    %v598 = vadd.f32 0.0, %v597
    %v599 = vpop.f32.mrf.mxu0
    %600 = vdwg.mxu0
    %601 = vmatpush.bf16.msra.mxu0 %v529
    %602 = vmatpush.bf16.msra.mxu0 %v525
    %603 = vmatpush.bf16.msra.mxu0 %v521
    %604 = vmatpush.bf16.msra.mxu0 %v517
    %605 = vmatpush.bf16.msra.mxu0 %v513
    %606 = vmatpush.bf16.msra.mxu0 %v509
    %607 = vmatpush.bf16.msra.mxu0 %v505
    %608 = vmatpush.bf16.msra.mxu0 %v501
    %609 = vmatmul.bf16.gmra.mxu0 0
    %v610 = vpop.f32.mrf.mxu0
    %v611 = vadd.f32 0.0, %v610
    %v612 = vpop.f32.mrf.mxu0
    %613 = vdwg.mxu0
    %v618 = vrot.slane %v585, 6
    %v619 = vrot.slane %v598, 4
    %v620 = vrot.slane %v611, 2
    %v621 = vsel %vm296, %v572, %v618
    %v622 = vsel %vm298, %v619, %v620
    %v623 = vsel %vm213, %v621, %v622
    %v625 = vadd.f32 %v352, %v623
    %v626 = vxor.u32 %v625, 2147483648
    %v627 = vmul.f32 %v626, 1.442695
    %v628 = vpow.pop %v627
    %v629 = vadd.f32 %v628, 1.0
    %v630 = vrcp.pop %v629
    %v631 = vmul.f32 %v629, %v630
    %v632 = vsub.f32 1.0, %v631
    %v633 = vmul.f32 %v630, %v632
    %v634 = vadd.f32 %v630, %v633
    %vm635 = vweird.f32 %v629
    %vm636 = vweird.f32 %v630
    %vm637 = vmor %vm635, %vm636
    %v638 = vsel %vm637, %v630, %v634
    %v639 = vand.u32 2147483647, %v629
    %vm640 = vcmp.eq.f32.partialorder %v639, 8.507059e+37
    %v641 = vand.u32 %v629, 2147483648
    %v642 = vor.u32 1.1754944e-38, %v641
    %v643 = vsel %vm640, %v642, %v638
    %v644 = vmul.f32 1.0, %v643
    %v646 = vrot.slane %v625, 2
    %v648 = vxor.u32 %v646, 2147483648
    %v649 = vmul.f32 %v648, 1.442695
    %v650 = vpow.pop %v649
    %v651 = vadd.f32 %v650, 1.0
    %v652 = vrcp.pop %v651
    %v653 = vmul.f32 %v651, %v652
    %v654 = vsub.f32 1.0, %v653
    %v655 = vmul.f32 %v652, %v654
    %v656 = vadd.f32 %v652, %v655
    %vm657 = vweird.f32 %v651
    %vm658 = vweird.f32 %v652
    %vm659 = vmor %vm657, %vm658
    %v660 = vsel %vm659, %v652, %v656
    %v661 = vand.u32 2147483647, %v651
    %vm662 = vcmp.eq.f32.partialorder %v661, 8.507059e+37
    %v663 = vand.u32 %v651, 2147483648
    %v664 = vor.u32 1.1754944e-38, %v663
    %v665 = vsel %vm662, %v664, %v660
    %v666 = vmul.f32 1.0, %v665
    %v667 = vrot.slane %v625, 4
    %v669 = vtanh.pop %v667
    %v670 = vrot.slane %v625, 6
    %v672 = vxor.u32 %v670, 2147483648
    %v673 = vmul.f32 %v672, 1.442695
    %v674 = vpow.pop %v673
    %v675 = vadd.f32 %v674, 1.0
    %v676 = vrcp.pop %v675
    %v677 = vmul.f32 %v675, %v676
    %v678 = vsub.f32 1.0, %v677
    %v679 = vmul.f32 %v676, %v678
    %v680 = vadd.f32 %v676, %v679
    %vm681 = vweird.f32 %v675
    %vm682 = vweird.f32 %v676
    %vm683 = vmor %vm681, %vm682
    %v684 = vsel %vm683, %v676, %v680
    %v685 = vand.u32 2147483647, %v675
    %vm686 = vcmp.eq.f32.partialorder %v685, 8.507059e+37
    %v687 = vand.u32 %v675, 2147483648
    %v688 = vor.u32 1.1754944e-38, %v687
    %v689 = vsel %vm686, %v688, %v684
    %v690 = vmul.f32 1.0, %v689
    %v691 = vmul.f32 %v666, 0.0
    %v692 = vmul.f32 %v644, %v669
    %v693 = vadd.f32 %v691, %v692
    %v694 = vtanh.pop %v693
    %v695 = vmul.f32 %v690, %v694
    %v696 = vld [vmem:[#allocation11] sm:$0xff]
    %v697 = vld [vmem:[#allocation11 + $0x8] sm:$0xff]
    %v698 = vld [vmem:[#allocation11 + $0x10] sm:$0xff]
    %v699 = vld [vmem:[#allocation11 + $0x18] sm:$0xff]
    %v700 = vld [vmem:[#allocation11 + $0x20] sm:$0xff]
    %v701 = vld [vmem:[#allocation11 + $0x28] sm:$0xff]
    %v702 = vld [vmem:[#allocation11 + $0x30] sm:$0xff]
    %v703 = vld [vmem:[#allocation11 + $0x38] sm:$0xff]
    %v704 = vld [vmem:[#allocation11 + $0x40] sm:$0xff]
    %v705 = vld [vmem:[#allocation11 + $0x48] sm:$0xff]
    %v706 = vld [vmem:[#allocation11 + $0x50] sm:$0xff]
    %v707 = vld [vmem:[#allocation11 + $0x58] sm:$0xff]
    %v708 = vld [vmem:[#allocation11 + $0x60] sm:$0xff]
    %v709 = vld [vmem:[#allocation11 + $0x68] sm:$0xff]
    %v710 = vld [vmem:[#allocation11 + $0x70] sm:$0xff]
    %v711 = vld [vmem:[#allocation11 + $0x78] sm:$0xff]
    %v712 = vld [vmem:[#allocation11 + $0x80] sm:$0xff]
    %v713 = vld [vmem:[#allocation11 + $0x88] sm:$0xff]
    %v714 = vld [vmem:[#allocation11 + $0x90] sm:$0xff]
    %v715 = vld [vmem:[#allocation11 + $0x98] sm:$0xff]
    %v716 = vld [vmem:[#allocation11 + $0xa0] sm:$0xff]
    %v717 = vld [vmem:[#allocation11 + $0xa8] sm:$0xff]
    %v718 = vld [vmem:[#allocation11 + $0xb0] sm:$0xff]
    %v719 = vld [vmem:[#allocation11 + $0xb8] sm:$0xff]
    %v720 = vld [vmem:[#allocation11 + $0xc0] sm:$0xff]
    %v721 = vld [vmem:[#allocation11 + $0xc8] sm:$0xff]
    %v722 = vld [vmem:[#allocation11 + $0xd0] sm:$0xff]
    %v723 = vld [vmem:[#allocation11 + $0xd8] sm:$0xff]
    %v724 = vld [vmem:[#allocation11 + $0xe0] sm:$0xff]
    %v725 = vld [vmem:[#allocation11 + $0xe8] sm:$0xff]
    %v726 = vld [vmem:[#allocation11 + $0xf0] sm:$0xff]
    %v727 = vld [vmem:[#allocation11 + $0xf8] sm:$0xff]
    %v728 = vpack.c.bf16 %v695, %v695
    %v729 = vld [vmem:[#allocation10] sm:$0xff]
    %v730 = vld [vmem:[#allocation10 + $0x8] sm:$0xff]
    %v731 = vld [vmem:[#allocation10 + $0x10] sm:$0xff]
    %v732 = vld [vmem:[#allocation10 + $0x18] sm:$0xff]
    %v733 = vld [vmem:[#allocation10 + $0x20] sm:$0xff]
    %v734 = vld [vmem:[#allocation10 + $0x28] sm:$0xff]
    %v735 = vld [vmem:[#allocation10 + $0x30] sm:$0xff]
    %v736 = vld [vmem:[#allocation10 + $0x38] sm:$0xff]
    %v737 = vld [vmem:[#allocation10 + $0x40] sm:$0xff]
    %v738 = vld [vmem:[#allocation10 + $0x48] sm:$0xff]
    %v739 = vld [vmem:[#allocation10 + $0x50] sm:$0xff]
    %v740 = vld [vmem:[#allocation10 + $0x58] sm:$0xff]
    %v741 = vld [vmem:[#allocation10 + $0x60] sm:$0xff]
    %v742 = vld [vmem:[#allocation10 + $0x68] sm:$0xff]
    %v743 = vld [vmem:[#allocation10 + $0x70] sm:$0xff]
    %v744 = vld [vmem:[#allocation10 + $0x78] sm:$0xff]
    %v745 = vld [vmem:[#allocation10 + $0x80] sm:$0xff]
    %v746 = vld [vmem:[#allocation10 + $0x88] sm:$0xff]
    %v747 = vld [vmem:[#allocation10 + $0x90] sm:$0xff]
    %v748 = vld [vmem:[#allocation10 + $0x98] sm:$0xff]
    %v749 = vld [vmem:[#allocation10 + $0xa0] sm:$0xff]
    %v750 = vld [vmem:[#allocation10 + $0xa8] sm:$0xff]
    %v751 = vld [vmem:[#allocation10 + $0xb0] sm:$0xff]
    %v752 = vld [vmem:[#allocation10 + $0xb8] sm:$0xff]
    %v753 = vld [vmem:[#allocation10 + $0xc0] sm:$0xff]
    %v754 = vld [vmem:[#allocation10 + $0xc8] sm:$0xff]
    %v755 = vld [vmem:[#allocation10 + $0xd0] sm:$0xff]
    %v756 = vld [vmem:[#allocation10 + $0xd8] sm:$0xff]
    %v757 = vld [vmem:[#allocation10 + $0xe0] sm:$0xff]
    %v758 = vld [vmem:[#allocation10 + $0xe8] sm:$0xff]
    %v759 = vld [vmem:[#allocation10 + $0xf0] sm:$0xff]
    %v760 = vld [vmem:[#allocation10 + $0xf8] sm:$0xff]
    %v793 = vunpack.c.l.b16 %v729
    %v794 = vunpack.c.h.b16 %v729
    %v795 = vunpack.c.l.b16 %v730
    %v796 = vunpack.c.h.b16 %v730
    %v797 = vunpack.c.l.b16 %v731
    %v798 = vunpack.c.h.b16 %v731
    %v799 = vunpack.c.l.b16 %v732
    %v800 = vunpack.c.h.b16 %v732
    %v801 = vunpack.c.l.b16 %v733
    %v802 = vunpack.c.h.b16 %v733
    %v803 = vunpack.c.l.b16 %v734
    %v804 = vunpack.c.h.b16 %v734
    %v805 = vunpack.c.l.b16 %v735
    %v806 = vunpack.c.h.b16 %v735
    %v807 = vunpack.c.l.b16 %v736
    %v808 = vunpack.c.h.b16 %v736
    %v809 = vunpack.c.l.b16 %v737
    %v810 = vunpack.c.h.b16 %v737
    %v811 = vunpack.c.l.b16 %v738
    %v812 = vunpack.c.h.b16 %v738
    %v813 = vunpack.c.l.b16 %v739
    %v814 = vunpack.c.h.b16 %v739
    %v815 = vunpack.c.l.b16 %v740
    %v816 = vunpack.c.h.b16 %v740
    %v817 = vunpack.c.l.b16 %v741
    %v818 = vunpack.c.h.b16 %v741
    %v819 = vunpack.c.l.b16 %v742
    %v820 = vunpack.c.h.b16 %v742
    %v821 = vunpack.c.l.b16 %v743
    %v822 = vunpack.c.h.b16 %v743
    %v823 = vunpack.c.l.b16 %v744
    %v824 = vunpack.c.h.b16 %v744
    %v825 = vunpack.c.l.b16 %v745
    %v826 = vunpack.c.h.b16 %v745
    %v827 = vunpack.c.l.b16 %v746
    %v828 = vunpack.c.h.b16 %v746
    %v829 = vunpack.c.l.b16 %v747
    %v830 = vunpack.c.h.b16 %v747
    %v831 = vunpack.c.l.b16 %v748
    %v832 = vunpack.c.h.b16 %v748
    %v833 = vunpack.c.l.b16 %v749
    %v834 = vunpack.c.h.b16 %v749
    %v835 = vunpack.c.l.b16 %v750
    %v836 = vunpack.c.h.b16 %v750
    %v837 = vunpack.c.l.b16 %v751
    %v838 = vunpack.c.h.b16 %v751
    %v839 = vunpack.c.l.b16 %v752
    %v840 = vunpack.c.h.b16 %v752
    %v841 = vunpack.c.l.b16 %v753
    %v842 = vunpack.c.h.b16 %v753
    %v843 = vunpack.c.l.b16 %v754
    %v844 = vunpack.c.h.b16 %v754
    %v845 = vunpack.c.l.b16 %v755
    %v846 = vunpack.c.h.b16 %v755
    %v847 = vunpack.c.l.b16 %v756
    %v848 = vunpack.c.h.b16 %v756
    %v849 = vunpack.c.l.b16 %v757
    %v850 = vunpack.c.h.b16 %v757
    %v851 = vunpack.c.l.b16 %v758
    %v852 = vunpack.c.h.b16 %v758
    %v853 = vunpack.c.l.b16 %v759
    %v854 = vunpack.c.h.b16 %v759
    %v855 = vunpack.c.l.b16 %v760
    %v856 = vunpack.c.h.b16 %v760
    %v857 = vpack.c.b16 %v797, %v793
    %v858 = vpack.c.b16 %v798, %v794
    %v859 = vpack.c.b16 %v799, %v795
    %v860 = vpack.c.b16 %v800, %v796
    %v861 = vpack.c.b16 %v805, %v801
    %v862 = vpack.c.b16 %v806, %v802
    %v863 = vpack.c.b16 %v807, %v803
    %v864 = vpack.c.b16 %v808, %v804
    %v865 = vpack.c.b16 %v813, %v809
    %v866 = vpack.c.b16 %v814, %v810
    %v867 = vpack.c.b16 %v815, %v811
    %v868 = vpack.c.b16 %v816, %v812
    %v869 = vpack.c.b16 %v821, %v817
    %v870 = vpack.c.b16 %v822, %v818
    %v871 = vpack.c.b16 %v823, %v819
    %v872 = vpack.c.b16 %v824, %v820
    %v873 = vpack.c.b16 %v829, %v825
    %v874 = vpack.c.b16 %v830, %v826
    %v875 = vpack.c.b16 %v831, %v827
    %v876 = vpack.c.b16 %v832, %v828
    %v877 = vpack.c.b16 %v837, %v833
    %v878 = vpack.c.b16 %v838, %v834
    %v879 = vpack.c.b16 %v839, %v835
    %v880 = vpack.c.b16 %v840, %v836
    %v881 = vpack.c.b16 %v845, %v841
    %v882 = vpack.c.b16 %v846, %v842
    %v883 = vpack.c.b16 %v847, %v843
    %v884 = vpack.c.b16 %v848, %v844
    %v885 = vpack.c.b16 %v853, %v849
    %v886 = vpack.c.b16 %v854, %v850
    %v887 = vpack.c.b16 %v855, %v851
    %v888 = vpack.c.b16 %v856, %v852
    %921 = vmatpush.bf16.msra.mxu0 %v885
    %922 = vmatpush.bf16.msra.mxu0 %v881
    %923 = vmatpush.bf16.msra.mxu0 %v877
    %924 = vmatpush.bf16.msra.mxu0 %v873
    %925 = vmatpush.bf16.msra.mxu0 %v869
    %926 = vmatpush.bf16.msra.mxu0 %v865
    %927 = vmatpush.bf16.msra.mxu0 %v861
    %928 = vmatpush.bf16.msra.mxu0 %v857
    %929 = vmatmul.bf16.gmra.mxu0 %v728
    %v930 = vpop.f32.mrf.mxu0
    %v931 = vadd.f32 0.0, %v930
    %v932 = vpop.f32.mrf.mxu0
    %933 = vdwg.mxu0
    %934 = vmatpush.bf16.msra.mxu0 %v886
    %935 = vmatpush.bf16.msra.mxu0 %v882
    %936 = vmatpush.bf16.msra.mxu0 %v878
    %937 = vmatpush.bf16.msra.mxu0 %v874
    %938 = vmatpush.bf16.msra.mxu0 %v870
    %939 = vmatpush.bf16.msra.mxu0 %v866
    %940 = vmatpush.bf16.msra.mxu0 %v862
    %941 = vmatpush.bf16.msra.mxu0 %v858
    %942 = vmatmul.bf16.gmra.mxu0 %v728
    %v943 = vpop.f32.mrf.mxu0
    %v944 = vadd.f32 0.0, %v943
    %v945 = vpop.f32.mrf.mxu0
    %946 = vdwg.mxu0
    %947 = vmatpush.bf16.msra.mxu0 %v887
    %948 = vmatpush.bf16.msra.mxu0 %v883
    %949 = vmatpush.bf16.msra.mxu0 %v879
    %950 = vmatpush.bf16.msra.mxu0 %v875
    %951 = vmatpush.bf16.msra.mxu0 %v871
    %952 = vmatpush.bf16.msra.mxu0 %v867
    %953 = vmatpush.bf16.msra.mxu0 %v863
    %954 = vmatpush.bf16.msra.mxu0 %v859
    %955 = vmatmul.bf16.gmra.mxu0 %v728
    %v956 = vpop.f32.mrf.mxu0
    %v957 = vadd.f32 0.0, %v956
    %v958 = vpop.f32.mrf.mxu0
    %959 = vdwg.mxu0
    %960 = vmatpush.bf16.msra.mxu0 %v888
    %961 = vmatpush.bf16.msra.mxu0 %v884
    %962 = vmatpush.bf16.msra.mxu0 %v880
    %963 = vmatpush.bf16.msra.mxu0 %v876
    %964 = vmatpush.bf16.msra.mxu0 %v872
    %965 = vmatpush.bf16.msra.mxu0 %v868
    %966 = vmatpush.bf16.msra.mxu0 %v864
    %967 = vmatpush.bf16.msra.mxu0 %v860
    %968 = vmatmul.bf16.gmra.mxu0 %v728
    %v969 = vpop.f32.mrf.mxu0
    %v970 = vadd.f32 0.0, %v969
    %v971 = vpop.f32.mrf.mxu0
    %972 = vdwg.mxu0
    %v1005 = vunpack.c.l.b16 %v696
    %v1006 = vunpack.c.h.b16 %v696
    %v1007 = vunpack.c.l.b16 %v697
    %v1008 = vunpack.c.h.b16 %v697
    %v1009 = vunpack.c.l.b16 %v698
    %v1010 = vunpack.c.h.b16 %v698
    %v1011 = vunpack.c.l.b16 %v699
    %v1012 = vunpack.c.h.b16 %v699
    %v1013 = vunpack.c.l.b16 %v700
    %v1014 = vunpack.c.h.b16 %v700
    %v1015 = vunpack.c.l.b16 %v701
    %v1016 = vunpack.c.h.b16 %v701
    %v1017 = vunpack.c.l.b16 %v702
    %v1018 = vunpack.c.h.b16 %v702
    %v1019 = vunpack.c.l.b16 %v703
    %v1020 = vunpack.c.h.b16 %v703
    %v1021 = vunpack.c.l.b16 %v704
    %v1022 = vunpack.c.h.b16 %v704
    %v1023 = vunpack.c.l.b16 %v705
    %v1024 = vunpack.c.h.b16 %v705
    %v1025 = vunpack.c.l.b16 %v706
    %v1026 = vunpack.c.h.b16 %v706
    %v1027 = vunpack.c.l.b16 %v707
    %v1028 = vunpack.c.h.b16 %v707
    %v1029 = vunpack.c.l.b16 %v708
    %v1030 = vunpack.c.h.b16 %v708
    %v1031 = vunpack.c.l.b16 %v709
    %v1032 = vunpack.c.h.b16 %v709
    %v1033 = vunpack.c.l.b16 %v710
    %v1034 = vunpack.c.h.b16 %v710
    %v1035 = vunpack.c.l.b16 %v711
    %v1036 = vunpack.c.h.b16 %v711
    %v1037 = vunpack.c.l.b16 %v712
    %v1038 = vunpack.c.h.b16 %v712
    %v1039 = vunpack.c.l.b16 %v713
    %v1040 = vunpack.c.h.b16 %v713
    %v1041 = vunpack.c.l.b16 %v714
    %v1042 = vunpack.c.h.b16 %v714
    %v1043 = vunpack.c.l.b16 %v715
    %v1044 = vunpack.c.h.b16 %v715
    %v1045 = vunpack.c.l.b16 %v716
    %v1046 = vunpack.c.h.b16 %v716
    %v1047 = vunpack.c.l.b16 %v717
    %v1048 = vunpack.c.h.b16 %v717
    %v1049 = vunpack.c.l.b16 %v718
    %v1050 = vunpack.c.h.b16 %v718
    %v1051 = vunpack.c.l.b16 %v719
    %v1052 = vunpack.c.h.b16 %v719
    %v1053 = vunpack.c.l.b16 %v720
    %v1054 = vunpack.c.h.b16 %v720
    %v1055 = vunpack.c.l.b16 %v721
    %v1056 = vunpack.c.h.b16 %v721
    %v1057 = vunpack.c.l.b16 %v722
    %v1058 = vunpack.c.h.b16 %v722
    %v1059 = vunpack.c.l.b16 %v723
    %v1060 = vunpack.c.h.b16 %v723
    %v1061 = vunpack.c.l.b16 %v724
    %v1062 = vunpack.c.h.b16 %v724
    %v1063 = vunpack.c.l.b16 %v725
    %v1064 = vunpack.c.h.b16 %v725
    %v1065 = vunpack.c.l.b16 %v726
    %v1066 = vunpack.c.h.b16 %v726
    %v1067 = vunpack.c.l.b16 %v727
    %v1068 = vunpack.c.h.b16 %v727
    %v1069 = vpack.c.b16 %v1009, %v1005
    %v1070 = vpack.c.b16 %v1010, %v1006
    %v1071 = vpack.c.b16 %v1011, %v1007
    %v1072 = vpack.c.b16 %v1012, %v1008
    %v1073 = vpack.c.b16 %v1017, %v1013
    %v1074 = vpack.c.b16 %v1018, %v1014
    %v1075 = vpack.c.b16 %v1019, %v1015
    %v1076 = vpack.c.b16 %v1020, %v1016
    %v1077 = vpack.c.b16 %v1025, %v1021
    %v1078 = vpack.c.b16 %v1026, %v1022
    %v1079 = vpack.c.b16 %v1027, %v1023
    %v1080 = vpack.c.b16 %v1028, %v1024
    %v1081 = vpack.c.b16 %v1033, %v1029
    %v1082 = vpack.c.b16 %v1034, %v1030
    %v1083 = vpack.c.b16 %v1035, %v1031
    %v1084 = vpack.c.b16 %v1036, %v1032
    %v1085 = vpack.c.b16 %v1041, %v1037
    %v1086 = vpack.c.b16 %v1042, %v1038
    %v1087 = vpack.c.b16 %v1043, %v1039
    %v1088 = vpack.c.b16 %v1044, %v1040
    %v1089 = vpack.c.b16 %v1049, %v1045
    %v1090 = vpack.c.b16 %v1050, %v1046
    %v1091 = vpack.c.b16 %v1051, %v1047
    %v1092 = vpack.c.b16 %v1052, %v1048
    %v1093 = vpack.c.b16 %v1057, %v1053
    %v1094 = vpack.c.b16 %v1058, %v1054
    %v1095 = vpack.c.b16 %v1059, %v1055
    %v1096 = vpack.c.b16 %v1060, %v1056
    %v1097 = vpack.c.b16 %v1065, %v1061
    %v1098 = vpack.c.b16 %v1066, %v1062
    %v1099 = vpack.c.b16 %v1067, %v1063
    %v1100 = vpack.c.b16 %v1068, %v1064
    %1133 = vmatpush.bf16.msra.mxu0 %v1097
    %1134 = vmatpush.bf16.msra.mxu0 %v1093
    %1135 = vmatpush.bf16.msra.mxu0 %v1089
    %1136 = vmatpush.bf16.msra.mxu0 %v1085
    %1137 = vmatpush.bf16.msra.mxu0 %v1081
    %1138 = vmatpush.bf16.msra.mxu0 %v1077
    %1139 = vmatpush.bf16.msra.mxu0 %v1073
    %1140 = vmatpush.bf16.msra.mxu0 %v1069
    %1141 = vmatmul.bf16.gmra.mxu0 0
    %v1142 = vpop.f32.mrf.mxu0
    %v1143 = vadd.f32 %v931, %v1142
    %v1144 = vpop.f32.mrf.mxu0
    %1145 = vdwg.mxu0
    %1146 = vmatpush.bf16.msra.mxu0 %v1098
    %1147 = vmatpush.bf16.msra.mxu0 %v1094
    %1148 = vmatpush.bf16.msra.mxu0 %v1090
    %1149 = vmatpush.bf16.msra.mxu0 %v1086
    %1150 = vmatpush.bf16.msra.mxu0 %v1082
    %1151 = vmatpush.bf16.msra.mxu0 %v1078
    %1152 = vmatpush.bf16.msra.mxu0 %v1074
    %1153 = vmatpush.bf16.msra.mxu0 %v1070
    %1154 = vmatmul.bf16.gmra.mxu0 0
    %v1155 = vpop.f32.mrf.mxu0
    %v1156 = vadd.f32 %v944, %v1155
    %v1157 = vpop.f32.mrf.mxu0
    %1158 = vdwg.mxu0
    %1159 = vmatpush.bf16.msra.mxu0 %v1099
    %1160 = vmatpush.bf16.msra.mxu0 %v1095
    %1161 = vmatpush.bf16.msra.mxu0 %v1091
    %1162 = vmatpush.bf16.msra.mxu0 %v1087
    %1163 = vmatpush.bf16.msra.mxu0 %v1083
    %1164 = vmatpush.bf16.msra.mxu0 %v1079
    %1165 = vmatpush.bf16.msra.mxu0 %v1075
    %1166 = vmatpush.bf16.msra.mxu0 %v1071
    %1167 = vmatmul.bf16.gmra.mxu0 0
    %v1168 = vpop.f32.mrf.mxu0
    %v1169 = vadd.f32 %v957, %v1168
    %v1170 = vpop.f32.mrf.mxu0
    %1171 = vdwg.mxu0
    %1172 = vmatpush.bf16.msra.mxu0 %v1100
    %1173 = vmatpush.bf16.msra.mxu0 %v1096
    %1174 = vmatpush.bf16.msra.mxu0 %v1092
    %1175 = vmatpush.bf16.msra.mxu0 %v1088
    %1176 = vmatpush.bf16.msra.mxu0 %v1084
    %1177 = vmatpush.bf16.msra.mxu0 %v1080
    %1178 = vmatpush.bf16.msra.mxu0 %v1076
    %1179 = vmatpush.bf16.msra.mxu0 %v1072
    %1180 = vmatmul.bf16.gmra.mxu0 0
    %v1181 = vpop.f32.mrf.mxu0
    %v1182 = vadd.f32 %v970, %v1181
    %v1183 = vpop.f32.mrf.mxu0
    %1184 = vdwg.mxu0
    %v1185 = vadd.f32 %v1143, %v362
    %v1186 = vadd.f32 %v1156, %v363
    %v1187 = vadd.f32 %v1169, %v364
    %v1188 = vadd.f32 %v1182, %v365
    %v1189 = vxor.u32 %v1185, 2147483648
    %v1190 = vmul.f32 %v1189, 1.442695
    %v1191 = vpow.pop %v1190
    %v1192 = vadd.f32 %v1191, 1.0
    %v1193 = vrcp.pop %v1192
    %v1194 = vmul.f32 %v1192, %v1193
    %v1195 = vsub.f32 1.0, %v1194
    %v1196 = vmul.f32 %v1193, %v1195
    %v1197 = vadd.f32 %v1193, %v1196
    %vm1198 = vweird.f32 %v1192
    %vm1199 = vweird.f32 %v1193
    %vm1200 = vmor %vm1198, %vm1199
    %v1201 = vsel %vm1200, %v1193, %v1197
    %v1202 = vand.u32 2147483647, %v1192
    %vm1203 = vcmp.eq.f32.partialorder %v1202, 8.507059e+37
    %v1204 = vand.u32 %v1192, 2147483648
    %v1205 = vor.u32 1.1754944e-38, %v1204
    %v1206 = vsel %vm1203, %v1205, %v1201
    %v1207 = vmul.f32 1.0, %v1206
    %v1208 = vxor.u32 %v1186, 2147483648
    %v1209 = vmul.f32 %v1208, 1.442695
    %v1210 = vpow.pop %v1209
    %v1211 = vadd.f32 %v1210, 1.0
    %v1212 = vrcp.pop %v1211
    %v1213 = vmul.f32 %v1211, %v1212
    %v1214 = vsub.f32 1.0, %v1213
    %v1215 = vmul.f32 %v1212, %v1214
    %v1216 = vadd.f32 %v1212, %v1215
    %vm1217 = vweird.f32 %v1211
    %vm1218 = vweird.f32 %v1212
    %vm1219 = vmor %vm1217, %vm1218
    %v1220 = vsel %vm1219, %v1212, %v1216
    %v1221 = vand.u32 2147483647, %v1211
    %vm1222 = vcmp.eq.f32.partialorder %v1221, 8.507059e+37
    %v1223 = vand.u32 %v1211, 2147483648
    %v1224 = vor.u32 1.1754944e-38, %v1223
    %v1225 = vsel %vm1222, %v1224, %v1220
    %v1226 = vmul.f32 1.0, %v1225
    %v1227 = vtanh.pop %v1187
    %v1228 = vxor.u32 %v1188, 2147483648
    %v1229 = vmul.f32 %v1228, 1.442695
    %v1230 = vpow.pop %v1229
    %v1231 = vadd.f32 %v1230, 1.0
    %v1232 = vrcp.pop %v1231
    %v1233 = vmul.f32 %v1231, %v1232
    %v1234 = vsub.f32 1.0, %v1233
    %v1235 = vmul.f32 %v1232, %v1234
    %v1236 = vadd.f32 %v1232, %v1235
    %vm1237 = vweird.f32 %v1231
    %vm1238 = vweird.f32 %v1232
    %vm1239 = vmor %vm1237, %vm1238
    %v1240 = vsel %vm1239, %v1232, %v1236
    %v1241 = vand.u32 2147483647, %v1231
    %vm1242 = vcmp.eq.f32.partialorder %v1241, 8.507059e+37
    %v1243 = vand.u32 %v1231, 2147483648
    %v1244 = vor.u32 1.1754944e-38, %v1243
    %v1245 = vsel %vm1242, %v1244, %v1240
    %v1246 = vmul.f32 1.0, %v1245
    %v1247 = vmul.f32 %v1226, 0.0
    %v1248 = vmul.f32 %v1207, %v1227
    %v1249 = vadd.f32 %v1247, %v1248
    %v1250 = vtanh.pop %v1249
    %v1251 = vmul.f32 %v1246, %v1250
    %1252 = vmatpush.bf16.msra.mxu0 %v526
    %1253 = vmatpush.bf16.msra.mxu0 %v522
    %1254 = vmatpush.bf16.msra.mxu0 %v518
    %1255 = vmatpush.bf16.msra.mxu0 %v514
    %1256 = vmatpush.bf16.msra.mxu0 %v510
    %1257 = vmatpush.bf16.msra.mxu0 %v506
    %1258 = vmatpush.bf16.msra.mxu0 %v502
    %1259 = vmatpush.bf16.msra.mxu0 %v498
    %1260 = vmatmul.bf16.gmra.mxu0 %v728
    %v1261 = vpop.f32.mrf.mxu0
    %v1262 = vadd.f32 0.0, %v1261
    %v1263 = vpop.f32.mrf.mxu0
    %1264 = vdwg.mxu0
    %1265 = vmatpush.bf16.msra.mxu0 %v527
    %1266 = vmatpush.bf16.msra.mxu0 %v523
    %1267 = vmatpush.bf16.msra.mxu0 %v519
    %1268 = vmatpush.bf16.msra.mxu0 %v515
    %1269 = vmatpush.bf16.msra.mxu0 %v511
    %1270 = vmatpush.bf16.msra.mxu0 %v507
    %1271 = vmatpush.bf16.msra.mxu0 %v503
    %1272 = vmatpush.bf16.msra.mxu0 %v499
    %1273 = vmatmul.bf16.gmra.mxu0 %v728
    %v1274 = vpop.f32.mrf.mxu0
    %v1275 = vadd.f32 0.0, %v1274
    %v1276 = vpop.f32.mrf.mxu0
    %1277 = vdwg.mxu0
    %1278 = vmatpush.bf16.msra.mxu0 %v528
    %1279 = vmatpush.bf16.msra.mxu0 %v524
    %1280 = vmatpush.bf16.msra.mxu0 %v520
    %1281 = vmatpush.bf16.msra.mxu0 %v516
    %1282 = vmatpush.bf16.msra.mxu0 %v512
    %1283 = vmatpush.bf16.msra.mxu0 %v508
    %1284 = vmatpush.bf16.msra.mxu0 %v504
    %1285 = vmatpush.bf16.msra.mxu0 %v500
    %1286 = vmatmul.bf16.gmra.mxu0 %v728
    %v1287 = vpop.f32.mrf.mxu0
    %v1288 = vadd.f32 0.0, %v1287
    %v1289 = vpop.f32.mrf.mxu0
    %1290 = vdwg.mxu0
    %1291 = vmatpush.bf16.msra.mxu0 %v529
    %1292 = vmatpush.bf16.msra.mxu0 %v525
    %1293 = vmatpush.bf16.msra.mxu0 %v521
    %1294 = vmatpush.bf16.msra.mxu0 %v517
    %1295 = vmatpush.bf16.msra.mxu0 %v513
    %1296 = vmatpush.bf16.msra.mxu0 %v509
    %1297 = vmatpush.bf16.msra.mxu0 %v505
    %1298 = vmatpush.bf16.msra.mxu0 %v501
    %1299 = vmatmul.bf16.gmra.mxu0 %v728
    %v1300 = vpop.f32.mrf.mxu0
    %v1301 = vadd.f32 0.0, %v1300
    %v1302 = vpop.f32.mrf.mxu0
    %1303 = vdwg.mxu0
    %v1308 = vrot.slane %v1275, 6
    %v1309 = vrot.slane %v1288, 4
    %v1310 = vrot.slane %v1301, 2
    %v1311 = vsel %vm296, %v1262, %v1308
    %v1312 = vsel %vm298, %v1309, %v1310
    %v1313 = vsel %vm213, %v1311, %v1312
    %v1315 = vadd.f32 %v353, %v1313
    %v1316 = vxor.u32 %v1315, 2147483648
    %v1317 = vmul.f32 %v1316, 1.442695
    %v1318 = vpow.pop %v1317
    %v1319 = vadd.f32 %v1318, 1.0
    %v1320 = vrcp.pop %v1319
    %v1321 = vmul.f32 %v1319, %v1320
    %v1322 = vsub.f32 1.0, %v1321
    %v1323 = vmul.f32 %v1320, %v1322
    %v1324 = vadd.f32 %v1320, %v1323
    %vm1325 = vweird.f32 %v1319
    %vm1326 = vweird.f32 %v1320
    %vm1327 = vmor %vm1325, %vm1326
    %v1328 = vsel %vm1327, %v1320, %v1324
    %v1329 = vand.u32 2147483647, %v1319
    %vm1330 = vcmp.eq.f32.partialorder %v1329, 8.507059e+37
    %v1331 = vand.u32 %v1319, 2147483648
    %v1332 = vor.u32 1.1754944e-38, %v1331
    %v1333 = vsel %vm1330, %v1332, %v1328
    %v1334 = vmul.f32 1.0, %v1333
    %v1336 = vrot.slane %v1315, 2
    %v1338 = vxor.u32 %v1336, 2147483648
    %v1339 = vmul.f32 %v1338, 1.442695
    %v1340 = vpow.pop %v1339
    %v1341 = vadd.f32 %v1340, 1.0
    %v1342 = vrcp.pop %v1341
    %v1343 = vmul.f32 %v1341, %v1342
    %v1344 = vsub.f32 1.0, %v1343
    %v1345 = vmul.f32 %v1342, %v1344
    %v1346 = vadd.f32 %v1342, %v1345
    %vm1347 = vweird.f32 %v1341
    %vm1348 = vweird.f32 %v1342
    %vm1349 = vmor %vm1347, %vm1348
    %v1350 = vsel %vm1349, %v1342, %v1346
    %v1351 = vand.u32 2147483647, %v1341
    %vm1352 = vcmp.eq.f32.partialorder %v1351, 8.507059e+37
    %v1353 = vand.u32 %v1341, 2147483648
    %v1354 = vor.u32 1.1754944e-38, %v1353
    %v1355 = vsel %vm1352, %v1354, %v1350
    %v1356 = vmul.f32 1.0, %v1355
    %v1357 = vrot.slane %v1315, 4
    %v1359 = vtanh.pop %v1357
    %v1360 = vrot.slane %v1315, 6
    %v1362 = vxor.u32 %v1360, 2147483648
    %v1363 = vmul.f32 %v1362, 1.442695
    %v1364 = vpow.pop %v1363
    %v1365 = vadd.f32 %v1364, 1.0
    %v1366 = vrcp.pop %v1365
    %v1367 = vmul.f32 %v1365, %v1366
    %v1368 = vsub.f32 1.0, %v1367
    %v1369 = vmul.f32 %v1366, %v1368
    %v1370 = vadd.f32 %v1366, %v1369
    %vm1371 = vweird.f32 %v1365
    %vm1372 = vweird.f32 %v1366
    %vm1373 = vmor %vm1371, %vm1372
    %v1374 = vsel %vm1373, %v1366, %v1370
    %v1375 = vand.u32 2147483647, %v1365
    %vm1376 = vcmp.eq.f32.partialorder %v1375, 8.507059e+37
    %v1377 = vand.u32 %v1365, 2147483648
    %v1378 = vor.u32 1.1754944e-38, %v1377
    %v1379 = vsel %vm1376, %v1378, %v1374
    %v1380 = vmul.f32 1.0, %v1379
    %v1381 = vmul.f32 %v1356, %v693
    %v1382 = vmul.f32 %v1334, %v1359
    %v1383 = vadd.f32 %v1381, %v1382
    %v1384 = vtanh.pop %v1383
    %v1385 = vmul.f32 %v1380, %v1384
    %v1386 = vpack.c.bf16 %v1251, %v1251
    %v1387 = vpack.c.bf16 %v1385, %v1385
    %1388 = vmatpush.bf16.msra.mxu0 %v885
    %1389 = vmatpush.bf16.msra.mxu0 %v881
    %1390 = vmatpush.bf16.msra.mxu0 %v877
    %1391 = vmatpush.bf16.msra.mxu0 %v873
    %1392 = vmatpush.bf16.msra.mxu0 %v869
    %1393 = vmatpush.bf16.msra.mxu0 %v865
    %1394 = vmatpush.bf16.msra.mxu0 %v861
    %1395 = vmatpush.bf16.msra.mxu0 %v857
    %1396 = vmatmul.bf16.gmra.mxu0 %v1387
    %v1397 = vpop.f32.mrf.mxu0
    %v1398 = vadd.f32 0.0, %v1397
    %v1399 = vpop.f32.mrf.mxu0
    %1400 = vdwg.mxu0
    %1401 = vmatpush.bf16.msra.mxu0 %v886
    %1402 = vmatpush.bf16.msra.mxu0 %v882
    %1403 = vmatpush.bf16.msra.mxu0 %v878
    %1404 = vmatpush.bf16.msra.mxu0 %v874
    %1405 = vmatpush.bf16.msra.mxu0 %v870
    %1406 = vmatpush.bf16.msra.mxu0 %v866
    %1407 = vmatpush.bf16.msra.mxu0 %v862
    %1408 = vmatpush.bf16.msra.mxu0 %v858
    %1409 = vmatmul.bf16.gmra.mxu0 %v1387
    %v1410 = vpop.f32.mrf.mxu0
    %v1411 = vadd.f32 0.0, %v1410
    %v1412 = vpop.f32.mrf.mxu0
    %1413 = vdwg.mxu0
    %1414 = vmatpush.bf16.msra.mxu0 %v887
    %1415 = vmatpush.bf16.msra.mxu0 %v883
    %1416 = vmatpush.bf16.msra.mxu0 %v879
    %1417 = vmatpush.bf16.msra.mxu0 %v875
    %1418 = vmatpush.bf16.msra.mxu0 %v871
    %1419 = vmatpush.bf16.msra.mxu0 %v867
    %1420 = vmatpush.bf16.msra.mxu0 %v863
    %1421 = vmatpush.bf16.msra.mxu0 %v859
    %1422 = vmatmul.bf16.gmra.mxu0 %v1387
    %v1423 = vpop.f32.mrf.mxu0
    %v1424 = vadd.f32 0.0, %v1423
    %v1425 = vpop.f32.mrf.mxu0
    %1426 = vdwg.mxu0
    %1427 = vmatpush.bf16.msra.mxu0 %v888
    %1428 = vmatpush.bf16.msra.mxu0 %v884
    %1429 = vmatpush.bf16.msra.mxu0 %v880
    %1430 = vmatpush.bf16.msra.mxu0 %v876
    %1431 = vmatpush.bf16.msra.mxu0 %v872
    %1432 = vmatpush.bf16.msra.mxu0 %v868
    %1433 = vmatpush.bf16.msra.mxu0 %v864
    %1434 = vmatpush.bf16.msra.mxu0 %v860
    %1435 = vmatmul.bf16.gmra.mxu0 %v1387
    %v1436 = vpop.f32.mrf.mxu0
    %v1437 = vadd.f32 0.0, %v1436
    %v1438 = vpop.f32.mrf.mxu0
    %1439 = vdwg.mxu0
    %1440 = vmatpush.bf16.msra.mxu0 %v1097
    %1441 = vmatpush.bf16.msra.mxu0 %v1093
    %1442 = vmatpush.bf16.msra.mxu0 %v1089
    %1443 = vmatpush.bf16.msra.mxu0 %v1085
    %1444 = vmatpush.bf16.msra.mxu0 %v1081
    %1445 = vmatpush.bf16.msra.mxu0 %v1077
    %1446 = vmatpush.bf16.msra.mxu0 %v1073
    %1447 = vmatpush.bf16.msra.mxu0 %v1069
    %1448 = vmatmul.bf16.gmra.mxu0 %v1386
    %v1449 = vpop.f32.mrf.mxu0
    %v1450 = vadd.f32 %v1398, %v1449
    %v1451 = vpop.f32.mrf.mxu0
    %1452 = vdwg.mxu0
    %1453 = vmatpush.bf16.msra.mxu0 %v1098
    %1454 = vmatpush.bf16.msra.mxu0 %v1094
    %1455 = vmatpush.bf16.msra.mxu0 %v1090
    %1456 = vmatpush.bf16.msra.mxu0 %v1086
    %1457 = vmatpush.bf16.msra.mxu0 %v1082
    %1458 = vmatpush.bf16.msra.mxu0 %v1078
    %1459 = vmatpush.bf16.msra.mxu0 %v1074
    %1460 = vmatpush.bf16.msra.mxu0 %v1070
    %1461 = vmatmul.bf16.gmra.mxu0 %v1386
    %v1462 = vpop.f32.mrf.mxu0
    %v1463 = vadd.f32 %v1411, %v1462
    %v1464 = vpop.f32.mrf.mxu0
    %1465 = vdwg.mxu0
    %1466 = vmatpush.bf16.msra.mxu0 %v1099
    %1467 = vmatpush.bf16.msra.mxu0 %v1095
    %1468 = vmatpush.bf16.msra.mxu0 %v1091
    %1469 = vmatpush.bf16.msra.mxu0 %v1087
    %1470 = vmatpush.bf16.msra.mxu0 %v1083
    %1471 = vmatpush.bf16.msra.mxu0 %v1079
    %1472 = vmatpush.bf16.msra.mxu0 %v1075
    %1473 = vmatpush.bf16.msra.mxu0 %v1071
    %1474 = vmatmul.bf16.gmra.mxu0 %v1386
    %v1475 = vpop.f32.mrf.mxu0
    %v1476 = vadd.f32 %v1424, %v1475
    %v1477 = vpop.f32.mrf.mxu0
    %1478 = vdwg.mxu0
    %1479 = vmatpush.bf16.msra.mxu0 %v1100
    %1480 = vmatpush.bf16.msra.mxu0 %v1096
    %1481 = vmatpush.bf16.msra.mxu0 %v1092
    %1482 = vmatpush.bf16.msra.mxu0 %v1088
    %1483 = vmatpush.bf16.msra.mxu0 %v1084
    %1484 = vmatpush.bf16.msra.mxu0 %v1080
    %1485 = vmatpush.bf16.msra.mxu0 %v1076
    %1486 = vmatpush.bf16.msra.mxu0 %v1072
    %1487 = vmatmul.bf16.gmra.mxu0 %v1386
    %v1488 = vpop.f32.mrf.mxu0
    %v1489 = vadd.f32 %v1437, %v1488
    %v1490 = vpop.f32.mrf.mxu0
    %1491 = vdwg.mxu0
    %v1492 = vadd.f32 %v1450, %v362
    %v1493 = vadd.f32 %v1463, %v363
    %v1494 = vadd.f32 %v1476, %v364
    %v1495 = vadd.f32 %v1489, %v365
    %v1496 = vxor.u32 %v1492, 2147483648
    %v1497 = vmul.f32 %v1496, 1.442695
    %v1498 = vpow.pop %v1497
    %v1499 = vadd.f32 %v1498, 1.0
    %v1500 = vrcp.pop %v1499
    %v1501 = vmul.f32 %v1499, %v1500
    %v1502 = vsub.f32 1.0, %v1501
    %v1503 = vmul.f32 %v1500, %v1502
    %v1504 = vadd.f32 %v1500, %v1503
    %vm1505 = vweird.f32 %v1499
    %vm1506 = vweird.f32 %v1500
    %vm1507 = vmor %vm1505, %vm1506
    %v1508 = vsel %vm1507, %v1500, %v1504
    %v1509 = vand.u32 2147483647, %v1499
    %vm1510 = vcmp.eq.f32.partialorder %v1509, 8.507059e+37
    %v1511 = vand.u32 %v1499, 2147483648
    %v1512 = vor.u32 1.1754944e-38, %v1511
    %v1513 = vsel %vm1510, %v1512, %v1508
    %v1514 = vmul.f32 1.0, %v1513
    %v1515 = vxor.u32 %v1493, 2147483648
    %v1516 = vmul.f32 %v1515, 1.442695
    %v1517 = vpow.pop %v1516
    %v1518 = vadd.f32 %v1517, 1.0
    %v1519 = vrcp.pop %v1518
    %v1520 = vmul.f32 %v1518, %v1519
    %v1521 = vsub.f32 1.0, %v1520
    %v1522 = vmul.f32 %v1519, %v1521
    %v1523 = vadd.f32 %v1519, %v1522
    %vm1524 = vweird.f32 %v1518
    %vm1525 = vweird.f32 %v1519
    %vm1526 = vmor %vm1524, %vm1525
    %v1527 = vsel %vm1526, %v1519, %v1523
    %v1528 = vand.u32 2147483647, %v1518
    %vm1529 = vcmp.eq.f32.partialorder %v1528, 8.507059e+37
    %v1530 = vand.u32 %v1518, 2147483648
    %v1531 = vor.u32 1.1754944e-38, %v1530
    %v1532 = vsel %vm1529, %v1531, %v1527
    %v1533 = vmul.f32 1.0, %v1532
    %v1534 = vtanh.pop %v1494
    %v1535 = vxor.u32 %v1495, 2147483648
    %v1536 = vmul.f32 %v1535, 1.442695
    %v1537 = vpow.pop %v1536
    %v1538 = vadd.f32 %v1537, 1.0
    %v1539 = vrcp.pop %v1538
    %v1540 = vmul.f32 %v1538, %v1539
    %v1541 = vsub.f32 1.0, %v1540
    %v1542 = vmul.f32 %v1539, %v1541
    %v1543 = vadd.f32 %v1539, %v1542
    %vm1544 = vweird.f32 %v1538
    %vm1545 = vweird.f32 %v1539
    %vm1546 = vmor %vm1544, %vm1545
    %v1547 = vsel %vm1546, %v1539, %v1543
    %v1548 = vand.u32 2147483647, %v1538
    %vm1549 = vcmp.eq.f32.partialorder %v1548, 8.507059e+37
    %v1550 = vand.u32 %v1538, 2147483648
    %v1551 = vor.u32 1.1754944e-38, %v1550
    %v1552 = vsel %vm1549, %v1551, %v1547
    %v1553 = vmul.f32 1.0, %v1552
    %v1554 = vmul.f32 %v1533, %v1249
    %v1555 = vmul.f32 %v1514, %v1534
    %v1556 = vadd.f32 %v1554, %v1555
    %v1557 = vtanh.pop %v1556
    %v1558 = vmul.f32 %v1553, %v1557
    %1559 = vmatpush.bf16.msra.mxu0 %v526
    %1560 = vmatpush.bf16.msra.mxu0 %v522
    %1561 = vmatpush.bf16.msra.mxu0 %v518
    %1562 = vmatpush.bf16.msra.mxu0 %v514
    %1563 = vmatpush.bf16.msra.mxu0 %v510
    %1564 = vmatpush.bf16.msra.mxu0 %v506
    %1565 = vmatpush.bf16.msra.mxu0 %v502
    %1566 = vmatpush.bf16.msra.mxu0 %v498
    %1567 = vmatmul.bf16.gmra.mxu0 %v1387
    %v1568 = vpop.f32.mrf.mxu0
    %v1569 = vadd.f32 0.0, %v1568
    %v1570 = vpop.f32.mrf.mxu0
    %1571 = vdwg.mxu0
    %1572 = vmatpush.bf16.msra.mxu0 %v527
    %1573 = vmatpush.bf16.msra.mxu0 %v523
    %1574 = vmatpush.bf16.msra.mxu0 %v519
    %1575 = vmatpush.bf16.msra.mxu0 %v515
    %1576 = vmatpush.bf16.msra.mxu0 %v511
    %1577 = vmatpush.bf16.msra.mxu0 %v507
    %1578 = vmatpush.bf16.msra.mxu0 %v503
    %1579 = vmatpush.bf16.msra.mxu0 %v499
    %1580 = vmatmul.bf16.gmra.mxu0 %v1387
    %v1581 = vpop.f32.mrf.mxu0
    %v1582 = vadd.f32 0.0, %v1581
    %v1583 = vpop.f32.mrf.mxu0
    %1584 = vdwg.mxu0
    %1585 = vmatpush.bf16.msra.mxu0 %v528
    %1586 = vmatpush.bf16.msra.mxu0 %v524
    %1587 = vmatpush.bf16.msra.mxu0 %v520
    %1588 = vmatpush.bf16.msra.mxu0 %v516
    %1589 = vmatpush.bf16.msra.mxu0 %v512
    %1590 = vmatpush.bf16.msra.mxu0 %v508
    %1591 = vmatpush.bf16.msra.mxu0 %v504
    %1592 = vmatpush.bf16.msra.mxu0 %v500
    %1593 = vmatmul.bf16.gmra.mxu0 %v1387
    %v1594 = vpop.f32.mrf.mxu0
    %v1595 = vadd.f32 0.0, %v1594
    %v1596 = vpop.f32.mrf.mxu0
    %1597 = vdwg.mxu0
    %1598 = vmatpush.bf16.msra.mxu0 %v529
    %1599 = vmatpush.bf16.msra.mxu0 %v525
    %1600 = vmatpush.bf16.msra.mxu0 %v521
    %1601 = vmatpush.bf16.msra.mxu0 %v517
    %1602 = vmatpush.bf16.msra.mxu0 %v513
    %1603 = vmatpush.bf16.msra.mxu0 %v509
    %1604 = vmatpush.bf16.msra.mxu0 %v505
    %1605 = vmatpush.bf16.msra.mxu0 %v501
    %1606 = vmatmul.bf16.gmra.mxu0 %v1387
    %v1607 = vpop.f32.mrf.mxu0
    %v1608 = vadd.f32 0.0, %v1607
    %v1609 = vpop.f32.mrf.mxu0
    %1610 = vdwg.mxu0
    %v1615 = vrot.slane %v1582, 6
    %v1616 = vrot.slane %v1595, 4
    %v1617 = vrot.slane %v1608, 2
    %v1618 = vsel %vm296, %v1569, %v1615
    %v1619 = vsel %vm298, %v1616, %v1617
    %v1620 = vsel %vm213, %v1618, %v1619
    %v1622 = vadd.f32 %v354, %v1620
    %v1623 = vxor.u32 %v1622, 2147483648
    %v1624 = vmul.f32 %v1623, 1.442695
    %v1625 = vpow.pop %v1624
    %v1626 = vadd.f32 %v1625, 1.0
    %v1627 = vrcp.pop %v1626
    %v1628 = vmul.f32 %v1626, %v1627
    %v1629 = vsub.f32 1.0, %v1628
    %v1630 = vmul.f32 %v1627, %v1629
    %v1631 = vadd.f32 %v1627, %v1630
    %vm1632 = vweird.f32 %v1626
    %vm1633 = vweird.f32 %v1627
    %vm1634 = vmor %vm1632, %vm1633
    %v1635 = vsel %vm1634, %v1627, %v1631
    %v1636 = vand.u32 2147483647, %v1626
    %vm1637 = vcmp.eq.f32.partialorder %v1636, 8.507059e+37
    %v1638 = vand.u32 %v1626, 2147483648
    %v1639 = vor.u32 1.1754944e-38, %v1638
    %v1640 = vsel %vm1637, %v1639, %v1635
    %v1641 = vmul.f32 1.0, %v1640
    %v1643 = vrot.slane %v1622, 2
    %v1645 = vxor.u32 %v1643, 2147483648
    %v1646 = vmul.f32 %v1645, 1.442695
    %v1647 = vpow.pop %v1646
    %v1648 = vadd.f32 %v1647, 1.0
    %v1649 = vrcp.pop %v1648
    %v1650 = vmul.f32 %v1648, %v1649
    %v1651 = vsub.f32 1.0, %v1650
    %v1652 = vmul.f32 %v1649, %v1651
    %v1653 = vadd.f32 %v1649, %v1652
    %vm1654 = vweird.f32 %v1648
    %vm1655 = vweird.f32 %v1649
    %vm1656 = vmor %vm1654, %vm1655
    %v1657 = vsel %vm1656, %v1649, %v1653
    %v1658 = vand.u32 2147483647, %v1648
    %vm1659 = vcmp.eq.f32.partialorder %v1658, 8.507059e+37
    %v1660 = vand.u32 %v1648, 2147483648
    %v1661 = vor.u32 1.1754944e-38, %v1660
    %v1662 = vsel %vm1659, %v1661, %v1657
    %v1663 = vmul.f32 1.0, %v1662
    %v1664 = vrot.slane %v1622, 4
    %v1666 = vtanh.pop %v1664
    %v1667 = vrot.slane %v1622, 6
    %v1669 = vxor.u32 %v1667, 2147483648
    %v1670 = vmul.f32 %v1669, 1.442695
    %v1671 = vpow.pop %v1670
    %v1672 = vadd.f32 %v1671, 1.0
    %v1673 = vrcp.pop %v1672
    %v1674 = vmul.f32 %v1672, %v1673
    %v1675 = vsub.f32 1.0, %v1674
    %v1676 = vmul.f32 %v1673, %v1675
    %v1677 = vadd.f32 %v1673, %v1676
    %vm1678 = vweird.f32 %v1672
    %vm1679 = vweird.f32 %v1673
    %vm1680 = vmor %vm1678, %vm1679
    %v1681 = vsel %vm1680, %v1673, %v1677
    %v1682 = vand.u32 2147483647, %v1672
    %vm1683 = vcmp.eq.f32.partialorder %v1682, 8.507059e+37
    %v1684 = vand.u32 %v1672, 2147483648
    %v1685 = vor.u32 1.1754944e-38, %v1684
    %v1686 = vsel %vm1683, %v1685, %v1681
    %v1687 = vmul.f32 1.0, %v1686
    %v1688 = vmul.f32 %v1663, %v1383
    %v1689 = vmul.f32 %v1641, %v1666
    %v1690 = vadd.f32 %v1688, %v1689
    %v1691 = vtanh.pop %v1690
    %v1692 = vmul.f32 %v1687, %v1691
    %v1693 = vpack.c.bf16 %v1558, %v1558
    %v1694 = vpack.c.bf16 %v1692, %v1692
    %1695 = vmatpush.bf16.msra.mxu0 %v885
    %1696 = vmatpush.bf16.msra.mxu0 %v881
    %1697 = vmatpush.bf16.msra.mxu0 %v877
    %1698 = vmatpush.bf16.msra.mxu0 %v873
    %1699 = vmatpush.bf16.msra.mxu0 %v869
    %1700 = vmatpush.bf16.msra.mxu0 %v865
    %1701 = vmatpush.bf16.msra.mxu0 %v861
    %1702 = vmatpush.bf16.msra.mxu0 %v857
    %1703 = vmatmul.bf16.gmra.mxu0 %v1694
    %v1704 = vpop.f32.mrf.mxu0
    %v1705 = vadd.f32 0.0, %v1704
    %v1706 = vpop.f32.mrf.mxu0
    %1707 = vdwg.mxu0
    %1708 = vmatpush.bf16.msra.mxu0 %v886
    %1709 = vmatpush.bf16.msra.mxu0 %v882
    %1710 = vmatpush.bf16.msra.mxu0 %v878
    %1711 = vmatpush.bf16.msra.mxu0 %v874
    %1712 = vmatpush.bf16.msra.mxu0 %v870
    %1713 = vmatpush.bf16.msra.mxu0 %v866
    %1714 = vmatpush.bf16.msra.mxu0 %v862
    %1715 = vmatpush.bf16.msra.mxu0 %v858
    %1716 = vmatmul.bf16.gmra.mxu0 %v1694
    %v1717 = vpop.f32.mrf.mxu0
    %v1718 = vadd.f32 0.0, %v1717
    %v1719 = vpop.f32.mrf.mxu0
    %1720 = vdwg.mxu0
    %1721 = vmatpush.bf16.msra.mxu0 %v887
    %1722 = vmatpush.bf16.msra.mxu0 %v883
    %1723 = vmatpush.bf16.msra.mxu0 %v879
    %1724 = vmatpush.bf16.msra.mxu0 %v875
    %1725 = vmatpush.bf16.msra.mxu0 %v871
    %1726 = vmatpush.bf16.msra.mxu0 %v867
    %1727 = vmatpush.bf16.msra.mxu0 %v863
    %1728 = vmatpush.bf16.msra.mxu0 %v859
    %1729 = vmatmul.bf16.gmra.mxu0 %v1694
    %v1730 = vpop.f32.mrf.mxu0
    %v1731 = vadd.f32 0.0, %v1730
    %v1732 = vpop.f32.mrf.mxu0
    %1733 = vdwg.mxu0
    %1734 = vmatpush.bf16.msra.mxu0 %v888
    %1735 = vmatpush.bf16.msra.mxu0 %v884
    %1736 = vmatpush.bf16.msra.mxu0 %v880
    %1737 = vmatpush.bf16.msra.mxu0 %v876
    %1738 = vmatpush.bf16.msra.mxu0 %v872
    %1739 = vmatpush.bf16.msra.mxu0 %v868
    %1740 = vmatpush.bf16.msra.mxu0 %v864
    %1741 = vmatpush.bf16.msra.mxu0 %v860
    %1742 = vmatmul.bf16.gmra.mxu0 %v1694
    %v1743 = vpop.f32.mrf.mxu0
    %v1744 = vadd.f32 0.0, %v1743
    %v1745 = vpop.f32.mrf.mxu0
    %1746 = vdwg.mxu0
    %1747 = vmatpush.bf16.msra.mxu0 %v1097
    %1748 = vmatpush.bf16.msra.mxu0 %v1093
    %1749 = vmatpush.bf16.msra.mxu0 %v1089
    %1750 = vmatpush.bf16.msra.mxu0 %v1085
    %1751 = vmatpush.bf16.msra.mxu0 %v1081
    %1752 = vmatpush.bf16.msra.mxu0 %v1077
    %1753 = vmatpush.bf16.msra.mxu0 %v1073
    %1754 = vmatpush.bf16.msra.mxu0 %v1069
    %1755 = vmatmul.bf16.gmra.mxu0 %v1693
    %v1756 = vpop.f32.mrf.mxu0
    %v1757 = vadd.f32 %v1705, %v1756
    %v1758 = vpop.f32.mrf.mxu0
    %1759 = vdwg.mxu0
    %1760 = vmatpush.bf16.msra.mxu0 %v1098
    %1761 = vmatpush.bf16.msra.mxu0 %v1094
    %1762 = vmatpush.bf16.msra.mxu0 %v1090
    %1763 = vmatpush.bf16.msra.mxu0 %v1086
    %1764 = vmatpush.bf16.msra.mxu0 %v1082
    %1765 = vmatpush.bf16.msra.mxu0 %v1078
    %1766 = vmatpush.bf16.msra.mxu0 %v1074
    %1767 = vmatpush.bf16.msra.mxu0 %v1070
    %1768 = vmatmul.bf16.gmra.mxu0 %v1693
    %v1769 = vpop.f32.mrf.mxu0
    %v1770 = vadd.f32 %v1718, %v1769
    %v1771 = vpop.f32.mrf.mxu0
    %1772 = vdwg.mxu0
    %1773 = vmatpush.bf16.msra.mxu0 %v1099
    %1774 = vmatpush.bf16.msra.mxu0 %v1095
    %1775 = vmatpush.bf16.msra.mxu0 %v1091
    %1776 = vmatpush.bf16.msra.mxu0 %v1087
    %1777 = vmatpush.bf16.msra.mxu0 %v1083
    %1778 = vmatpush.bf16.msra.mxu0 %v1079
    %1779 = vmatpush.bf16.msra.mxu0 %v1075
    %1780 = vmatpush.bf16.msra.mxu0 %v1071
    %1781 = vmatmul.bf16.gmra.mxu0 %v1693
    %v1782 = vpop.f32.mrf.mxu0
    %v1783 = vadd.f32 %v1731, %v1782
    %v1784 = vpop.f32.mrf.mxu0
    %1785 = vdwg.mxu0
    %1786 = vmatpush.bf16.msra.mxu0 %v1100
    %1787 = vmatpush.bf16.msra.mxu0 %v1096
    %1788 = vmatpush.bf16.msra.mxu0 %v1092
    %1789 = vmatpush.bf16.msra.mxu0 %v1088
    %1790 = vmatpush.bf16.msra.mxu0 %v1084
    %1791 = vmatpush.bf16.msra.mxu0 %v1080
    %1792 = vmatpush.bf16.msra.mxu0 %v1076
    %1793 = vmatpush.bf16.msra.mxu0 %v1072
    %1794 = vmatmul.bf16.gmra.mxu0 %v1693
    %v1795 = vpop.f32.mrf.mxu0
    %v1796 = vadd.f32 %v1744, %v1795
    %v1797 = vpop.f32.mrf.mxu0
    %1798 = vdwg.mxu0
    %v1799 = vadd.f32 %v1757, %v362
    %v1800 = vadd.f32 %v1770, %v363
    %v1801 = vadd.f32 %v1783, %v364
    %v1802 = vadd.f32 %v1796, %v365
    %v1803 = vxor.u32 %v1799, 2147483648
    %v1804 = vmul.f32 %v1803, 1.442695
    %v1805 = vpow.pop %v1804
    %v1806 = vadd.f32 %v1805, 1.0
    %v1807 = vrcp.pop %v1806
    %v1808 = vmul.f32 %v1806, %v1807
    %v1809 = vsub.f32 1.0, %v1808
    %v1810 = vmul.f32 %v1807, %v1809
    %v1811 = vadd.f32 %v1807, %v1810
    %vm1812 = vweird.f32 %v1806
    %vm1813 = vweird.f32 %v1807
    %vm1814 = vmor %vm1812, %vm1813
    %v1815 = vsel %vm1814, %v1807, %v1811
    %v1816 = vand.u32 2147483647, %v1806
    %vm1817 = vcmp.eq.f32.partialorder %v1816, 8.507059e+37
    %v1818 = vand.u32 %v1806, 2147483648
    %v1819 = vor.u32 1.1754944e-38, %v1818
    %v1820 = vsel %vm1817, %v1819, %v1815
    %v1821 = vmul.f32 1.0, %v1820
    %v1822 = vxor.u32 %v1800, 2147483648
    %v1823 = vmul.f32 %v1822, 1.442695
    %v1824 = vpow.pop %v1823
    %v1825 = vadd.f32 %v1824, 1.0
    %v1826 = vrcp.pop %v1825
    %v1827 = vmul.f32 %v1825, %v1826
    %v1828 = vsub.f32 1.0, %v1827
    %v1829 = vmul.f32 %v1826, %v1828
    %v1830 = vadd.f32 %v1826, %v1829
    %vm1831 = vweird.f32 %v1825
    %vm1832 = vweird.f32 %v1826
    %vm1833 = vmor %vm1831, %vm1832
    %v1834 = vsel %vm1833, %v1826, %v1830
    %v1835 = vand.u32 2147483647, %v1825
    %vm1836 = vcmp.eq.f32.partialorder %v1835, 8.507059e+37
    %v1837 = vand.u32 %v1825, 2147483648
    %v1838 = vor.u32 1.1754944e-38, %v1837
    %v1839 = vsel %vm1836, %v1838, %v1834
    %v1840 = vmul.f32 1.0, %v1839
    %v1841 = vtanh.pop %v1801
    %v1842 = vxor.u32 %v1802, 2147483648
    %v1843 = vmul.f32 %v1842, 1.442695
    %v1844 = vpow.pop %v1843
    %v1845 = vadd.f32 %v1844, 1.0
    %v1846 = vrcp.pop %v1845
    %v1847 = vmul.f32 %v1845, %v1846
    %v1848 = vsub.f32 1.0, %v1847
    %v1849 = vmul.f32 %v1846, %v1848
    %v1850 = vadd.f32 %v1846, %v1849
    %vm1851 = vweird.f32 %v1845
    %vm1852 = vweird.f32 %v1846
    %vm1853 = vmor %vm1851, %vm1852
    %v1854 = vsel %vm1853, %v1846, %v1850
    %v1855 = vand.u32 2147483647, %v1845
    %vm1856 = vcmp.eq.f32.partialorder %v1855, 8.507059e+37
    %v1857 = vand.u32 %v1845, 2147483648
    %v1858 = vor.u32 1.1754944e-38, %v1857
    %v1859 = vsel %vm1856, %v1858, %v1854
    %v1860 = vmul.f32 1.0, %v1859
    %v1861 = vmul.f32 %v1840, %v1556
    %v1862 = vmul.f32 %v1821, %v1841
    %v1863 = vadd.f32 %v1861, %v1862
    %v1864 = vtanh.pop %v1863
    %v1865 = vmul.f32 %v1860, %v1864
    %1866 = vmatpush.bf16.msra.mxu0 %v526
    %1867 = vmatpush.bf16.msra.mxu0 %v522
    %1868 = vmatpush.bf16.msra.mxu0 %v518
    %1869 = vmatpush.bf16.msra.mxu0 %v514
    %1870 = vmatpush.bf16.msra.mxu0 %v510
    %1871 = vmatpush.bf16.msra.mxu0 %v506
    %1872 = vmatpush.bf16.msra.mxu0 %v502
    %1873 = vmatpush.bf16.msra.mxu0 %v498
    %1874 = vmatmul.bf16.gmra.mxu0 %v1694
    %v1875 = vpop.f32.mrf.mxu0
    %v1876 = vadd.f32 0.0, %v1875
    %v1877 = vpop.f32.mrf.mxu0
    %1878 = vdwg.mxu0
    %1879 = vmatpush.bf16.msra.mxu0 %v527
    %1880 = vmatpush.bf16.msra.mxu0 %v523
    %1881 = vmatpush.bf16.msra.mxu0 %v519
    %1882 = vmatpush.bf16.msra.mxu0 %v515
    %1883 = vmatpush.bf16.msra.mxu0 %v511
    %1884 = vmatpush.bf16.msra.mxu0 %v507
    %1885 = vmatpush.bf16.msra.mxu0 %v503
    %1886 = vmatpush.bf16.msra.mxu0 %v499
    %1887 = vmatmul.bf16.gmra.mxu0 %v1694
    %v1888 = vpop.f32.mrf.mxu0
    %v1889 = vadd.f32 0.0, %v1888
    %v1890 = vpop.f32.mrf.mxu0
    %1891 = vdwg.mxu0
    %1892 = vmatpush.bf16.msra.mxu0 %v528
    %1893 = vmatpush.bf16.msra.mxu0 %v524
    %1894 = vmatpush.bf16.msra.mxu0 %v520
    %1895 = vmatpush.bf16.msra.mxu0 %v516
    %1896 = vmatpush.bf16.msra.mxu0 %v512
    %1897 = vmatpush.bf16.msra.mxu0 %v508
    %1898 = vmatpush.bf16.msra.mxu0 %v504
    %1899 = vmatpush.bf16.msra.mxu0 %v500
    %1900 = vmatmul.bf16.gmra.mxu0 %v1694
    %v1901 = vpop.f32.mrf.mxu0
    %v1902 = vadd.f32 0.0, %v1901
    %v1903 = vpop.f32.mrf.mxu0
    %1904 = vdwg.mxu0
    %1905 = vmatpush.bf16.msra.mxu0 %v529
    %1906 = vmatpush.bf16.msra.mxu0 %v525
    %1907 = vmatpush.bf16.msra.mxu0 %v521
    %1908 = vmatpush.bf16.msra.mxu0 %v517
    %1909 = vmatpush.bf16.msra.mxu0 %v513
    %1910 = vmatpush.bf16.msra.mxu0 %v509
    %1911 = vmatpush.bf16.msra.mxu0 %v505
    %1912 = vmatpush.bf16.msra.mxu0 %v501
    %1913 = vmatmul.bf16.gmra.mxu0 %v1694
    %v1914 = vpop.f32.mrf.mxu0
    %v1915 = vadd.f32 0.0, %v1914
    %v1916 = vpop.f32.mrf.mxu0
    %1917 = vdwg.mxu0
    %v1922 = vrot.slane %v1889, 6
    %v1923 = vrot.slane %v1902, 4
    %v1924 = vrot.slane %v1915, 2
    %v1925 = vsel %vm296, %v1876, %v1922
    %v1926 = vsel %vm298, %v1923, %v1924
    %v1927 = vsel %vm213, %v1925, %v1926
    %v1929 = vadd.f32 %v355, %v1927
    %v1930 = vxor.u32 %v1929, 2147483648
    %v1931 = vmul.f32 %v1930, 1.442695
    %v1932 = vpow.pop %v1931
    %v1933 = vadd.f32 %v1932, 1.0
    %v1934 = vrcp.pop %v1933
    %v1935 = vmul.f32 %v1933, %v1934
    %v1936 = vsub.f32 1.0, %v1935
    %v1937 = vmul.f32 %v1934, %v1936
    %v1938 = vadd.f32 %v1934, %v1937
    %vm1939 = vweird.f32 %v1933
    %vm1940 = vweird.f32 %v1934
    %vm1941 = vmor %vm1939, %vm1940
    %v1942 = vsel %vm1941, %v1934, %v1938
    %v1943 = vand.u32 2147483647, %v1933
    %vm1944 = vcmp.eq.f32.partialorder %v1943, 8.507059e+37
    %v1945 = vand.u32 %v1933, 2147483648
    %v1946 = vor.u32 1.1754944e-38, %v1945
    %v1947 = vsel %vm1944, %v1946, %v1942
    %v1948 = vmul.f32 1.0, %v1947
    %v1950 = vrot.slane %v1929, 2
    %v1952 = vxor.u32 %v1950, 2147483648
    %v1953 = vmul.f32 %v1952, 1.442695
    %v1954 = vpow.pop %v1953
    %v1955 = vadd.f32 %v1954, 1.0
    %v1956 = vrcp.pop %v1955
    %v1957 = vmul.f32 %v1955, %v1956
    %v1958 = vsub.f32 1.0, %v1957
    %v1959 = vmul.f32 %v1956, %v1958
    %v1960 = vadd.f32 %v1956, %v1959
    %vm1961 = vweird.f32 %v1955
    %vm1962 = vweird.f32 %v1956
    %vm1963 = vmor %vm1961, %vm1962
    %v1964 = vsel %vm1963, %v1956, %v1960
    %v1965 = vand.u32 2147483647, %v1955
    %vm1966 = vcmp.eq.f32.partialorder %v1965, 8.507059e+37
    %v1967 = vand.u32 %v1955, 2147483648
    %v1968 = vor.u32 1.1754944e-38, %v1967
    %v1969 = vsel %vm1966, %v1968, %v1964
    %v1970 = vmul.f32 1.0, %v1969
    %v1971 = vrot.slane %v1929, 4
    %v1973 = vtanh.pop %v1971
    %v1974 = vrot.slane %v1929, 6
    %v1976 = vxor.u32 %v1974, 2147483648
    %v1977 = vmul.f32 %v1976, 1.442695
    %v1978 = vpow.pop %v1977
    %v1979 = vadd.f32 %v1978, 1.0
    %v1980 = vrcp.pop %v1979
    %v1981 = vmul.f32 %v1979, %v1980
    %v1982 = vsub.f32 1.0, %v1981
    %v1983 = vmul.f32 %v1980, %v1982
    %v1984 = vadd.f32 %v1980, %v1983
    %vm1985 = vweird.f32 %v1979
    %vm1986 = vweird.f32 %v1980
    %vm1987 = vmor %vm1985, %vm1986
    %v1988 = vsel %vm1987, %v1980, %v1984
    %v1989 = vand.u32 2147483647, %v1979
    %vm1990 = vcmp.eq.f32.partialorder %v1989, 8.507059e+37
    %v1991 = vand.u32 %v1979, 2147483648
    %v1992 = vor.u32 1.1754944e-38, %v1991
    %v1993 = vsel %vm1990, %v1992, %v1988
    %v1994 = vmul.f32 1.0, %v1993
    %v1995 = vmul.f32 %v1970, %v1690
    %v1996 = vmul.f32 %v1948, %v1973
    %v1997 = vadd.f32 %v1995, %v1996
    %v1998 = vtanh.pop %v1997
    %v1999 = vmul.f32 %v1994, %v1998
    %v2000 = vpack.c.bf16 %v1865, %v1865
    %v2001 = vpack.c.bf16 %v1999, %v1999
    %2002 = vmatpush.bf16.msra.mxu0 %v885
    %2003 = vmatpush.bf16.msra.mxu0 %v881
    %2004 = vmatpush.bf16.msra.mxu0 %v877
    %2005 = vmatpush.bf16.msra.mxu0 %v873
    %2006 = vmatpush.bf16.msra.mxu0 %v869
    %2007 = vmatpush.bf16.msra.mxu0 %v865
    %2008 = vmatpush.bf16.msra.mxu0 %v861
    %2009 = vmatpush.bf16.msra.mxu0 %v857
    %2010 = vmatmul.bf16.gmra.mxu0 %v2001
    %v2011 = vpop.f32.mrf.mxu0
    %v2012 = vadd.f32 0.0, %v2011
    %v2013 = vpop.f32.mrf.mxu0
    %2014 = vdwg.mxu0
    %2015 = vmatpush.bf16.msra.mxu0 %v886
    %2016 = vmatpush.bf16.msra.mxu0 %v882
    %2017 = vmatpush.bf16.msra.mxu0 %v878
    %2018 = vmatpush.bf16.msra.mxu0 %v874
    %2019 = vmatpush.bf16.msra.mxu0 %v870
    %2020 = vmatpush.bf16.msra.mxu0 %v866
    %2021 = vmatpush.bf16.msra.mxu0 %v862
    %2022 = vmatpush.bf16.msra.mxu0 %v858
    %2023 = vmatmul.bf16.gmra.mxu0 %v2001
    %v2024 = vpop.f32.mrf.mxu0
    %v2025 = vadd.f32 0.0, %v2024
    %v2026 = vpop.f32.mrf.mxu0
    %2027 = vdwg.mxu0
    %2028 = vmatpush.bf16.msra.mxu0 %v887
    %2029 = vmatpush.bf16.msra.mxu0 %v883
    %2030 = vmatpush.bf16.msra.mxu0 %v879
    %2031 = vmatpush.bf16.msra.mxu0 %v875
    %2032 = vmatpush.bf16.msra.mxu0 %v871
    %2033 = vmatpush.bf16.msra.mxu0 %v867
    %2034 = vmatpush.bf16.msra.mxu0 %v863
    %2035 = vmatpush.bf16.msra.mxu0 %v859
    %2036 = vmatmul.bf16.gmra.mxu0 %v2001
    %v2037 = vpop.f32.mrf.mxu0
    %v2038 = vadd.f32 0.0, %v2037
    %v2039 = vpop.f32.mrf.mxu0
    %2040 = vdwg.mxu0
    %2041 = vmatpush.bf16.msra.mxu0 %v888
    %2042 = vmatpush.bf16.msra.mxu0 %v884
    %2043 = vmatpush.bf16.msra.mxu0 %v880
    %2044 = vmatpush.bf16.msra.mxu0 %v876
    %2045 = vmatpush.bf16.msra.mxu0 %v872
    %2046 = vmatpush.bf16.msra.mxu0 %v868
    %2047 = vmatpush.bf16.msra.mxu0 %v864
    %2048 = vmatpush.bf16.msra.mxu0 %v860
    %2049 = vmatmul.bf16.gmra.mxu0 %v2001
    %v2050 = vpop.f32.mrf.mxu0
    %v2051 = vadd.f32 0.0, %v2050
    %v2052 = vpop.f32.mrf.mxu0
    %2053 = vdwg.mxu0
    %2054 = vmatpush.bf16.msra.mxu0 %v1097
    %2055 = vmatpush.bf16.msra.mxu0 %v1093
    %2056 = vmatpush.bf16.msra.mxu0 %v1089
    %2057 = vmatpush.bf16.msra.mxu0 %v1085
    %2058 = vmatpush.bf16.msra.mxu0 %v1081
    %2059 = vmatpush.bf16.msra.mxu0 %v1077
    %2060 = vmatpush.bf16.msra.mxu0 %v1073
    %2061 = vmatpush.bf16.msra.mxu0 %v1069
    %2062 = vmatmul.bf16.gmra.mxu0 %v2000
    %v2063 = vpop.f32.mrf.mxu0
    %v2064 = vadd.f32 %v2012, %v2063
    %v2065 = vpop.f32.mrf.mxu0
    %2066 = vdwg.mxu0
    %2067 = vmatpush.bf16.msra.mxu0 %v1098
    %2068 = vmatpush.bf16.msra.mxu0 %v1094
    %2069 = vmatpush.bf16.msra.mxu0 %v1090
    %2070 = vmatpush.bf16.msra.mxu0 %v1086
    %2071 = vmatpush.bf16.msra.mxu0 %v1082
    %2072 = vmatpush.bf16.msra.mxu0 %v1078
    %2073 = vmatpush.bf16.msra.mxu0 %v1074
    %2074 = vmatpush.bf16.msra.mxu0 %v1070
    %2075 = vmatmul.bf16.gmra.mxu0 %v2000
    %v2076 = vpop.f32.mrf.mxu0
    %v2077 = vadd.f32 %v2025, %v2076
    %v2078 = vpop.f32.mrf.mxu0
    %2079 = vdwg.mxu0
    %2080 = vmatpush.bf16.msra.mxu0 %v1099
    %2081 = vmatpush.bf16.msra.mxu0 %v1095
    %2082 = vmatpush.bf16.msra.mxu0 %v1091
    %2083 = vmatpush.bf16.msra.mxu0 %v1087
    %2084 = vmatpush.bf16.msra.mxu0 %v1083
    %2085 = vmatpush.bf16.msra.mxu0 %v1079
    %2086 = vmatpush.bf16.msra.mxu0 %v1075
    %2087 = vmatpush.bf16.msra.mxu0 %v1071
    %2088 = vmatmul.bf16.gmra.mxu0 %v2000
    %v2089 = vpop.f32.mrf.mxu0
    %v2090 = vadd.f32 %v2038, %v2089
    %v2091 = vpop.f32.mrf.mxu0
    %2092 = vdwg.mxu0
    %2093 = vmatpush.bf16.msra.mxu0 %v1100
    %2094 = vmatpush.bf16.msra.mxu0 %v1096
    %2095 = vmatpush.bf16.msra.mxu0 %v1092
    %2096 = vmatpush.bf16.msra.mxu0 %v1088
    %2097 = vmatpush.bf16.msra.mxu0 %v1084
    %2098 = vmatpush.bf16.msra.mxu0 %v1080
    %2099 = vmatpush.bf16.msra.mxu0 %v1076
    %2100 = vmatpush.bf16.msra.mxu0 %v1072
    %2101 = vmatmul.bf16.gmra.mxu0 %v2000
    %v2102 = vpop.f32.mrf.mxu0
    %v2103 = vadd.f32 %v2051, %v2102
    %v2104 = vpop.f32.mrf.mxu0
    %2105 = vdwg.mxu0
    %v2106 = vadd.f32 %v2064, %v362
    %v2107 = vadd.f32 %v2077, %v363
    %v2108 = vadd.f32 %v2090, %v364
    %v2109 = vadd.f32 %v2103, %v365
    %v2110 = vxor.u32 %v2106, 2147483648
    %v2111 = vmul.f32 %v2110, 1.442695
    %v2112 = vpow.pop %v2111
    %v2113 = vadd.f32 %v2112, 1.0
    %v2114 = vrcp.pop %v2113
    %v2115 = vmul.f32 %v2113, %v2114
    %v2116 = vsub.f32 1.0, %v2115
    %v2117 = vmul.f32 %v2114, %v2116
    %v2118 = vadd.f32 %v2114, %v2117
    %vm2119 = vweird.f32 %v2113
    %vm2120 = vweird.f32 %v2114
    %vm2121 = vmor %vm2119, %vm2120
    %v2122 = vsel %vm2121, %v2114, %v2118
    %v2123 = vand.u32 2147483647, %v2113
    %vm2124 = vcmp.eq.f32.partialorder %v2123, 8.507059e+37
    %v2125 = vand.u32 %v2113, 2147483648
    %v2126 = vor.u32 1.1754944e-38, %v2125
    %v2127 = vsel %vm2124, %v2126, %v2122
    %v2128 = vmul.f32 1.0, %v2127
    %v2129 = vxor.u32 %v2107, 2147483648
    %v2130 = vmul.f32 %v2129, 1.442695
    %v2131 = vpow.pop %v2130
    %v2132 = vadd.f32 %v2131, 1.0
    %v2133 = vrcp.pop %v2132
    %v2134 = vmul.f32 %v2132, %v2133
    %v2135 = vsub.f32 1.0, %v2134
    %v2136 = vmul.f32 %v2133, %v2135
    %v2137 = vadd.f32 %v2133, %v2136
    %vm2138 = vweird.f32 %v2132
    %vm2139 = vweird.f32 %v2133
    %vm2140 = vmor %vm2138, %vm2139
    %v2141 = vsel %vm2140, %v2133, %v2137
    %v2142 = vand.u32 2147483647, %v2132
    %vm2143 = vcmp.eq.f32.partialorder %v2142, 8.507059e+37
    %v2144 = vand.u32 %v2132, 2147483648
    %v2145 = vor.u32 1.1754944e-38, %v2144
    %v2146 = vsel %vm2143, %v2145, %v2141
    %v2147 = vmul.f32 1.0, %v2146
    %v2148 = vtanh.pop %v2108
    %v2149 = vxor.u32 %v2109, 2147483648
    %v2150 = vmul.f32 %v2149, 1.442695
    %v2151 = vpow.pop %v2150
    %v2152 = vadd.f32 %v2151, 1.0
    %v2153 = vrcp.pop %v2152
    %v2154 = vmul.f32 %v2152, %v2153
    %v2155 = vsub.f32 1.0, %v2154
    %v2156 = vmul.f32 %v2153, %v2155
    %v2157 = vadd.f32 %v2153, %v2156
    %vm2158 = vweird.f32 %v2152
    %vm2159 = vweird.f32 %v2153
    %vm2160 = vmor %vm2158, %vm2159
    %v2161 = vsel %vm2160, %v2153, %v2157
    %v2162 = vand.u32 2147483647, %v2152
    %vm2163 = vcmp.eq.f32.partialorder %v2162, 8.507059e+37
    %v2164 = vand.u32 %v2152, 2147483648
    %v2165 = vor.u32 1.1754944e-38, %v2164
    %v2166 = vsel %vm2163, %v2165, %v2161
    %v2167 = vmul.f32 1.0, %v2166
    %v2168 = vmul.f32 %v2147, %v1863
    %v2169 = vmul.f32 %v2128, %v2148
    %v2170 = vadd.f32 %v2168, %v2169
    %v2171 = vtanh.pop %v2170
    %v2172 = vmul.f32 %v2167, %v2171
    %2173 = vmatpush.bf16.msra.mxu0 %v526
    %2174 = vmatpush.bf16.msra.mxu0 %v522
    %2175 = vmatpush.bf16.msra.mxu0 %v518
    %2176 = vmatpush.bf16.msra.mxu0 %v514
    %2177 = vmatpush.bf16.msra.mxu0 %v510
    %2178 = vmatpush.bf16.msra.mxu0 %v506
    %2179 = vmatpush.bf16.msra.mxu0 %v502
    %2180 = vmatpush.bf16.msra.mxu0 %v498
    %2181 = vmatmul.bf16.gmra.mxu0 %v2001
    %v2182 = vpop.f32.mrf.mxu0
    %v2183 = vadd.f32 0.0, %v2182
    %v2184 = vpop.f32.mrf.mxu0
    %2185 = vdwg.mxu0
    %2186 = vmatpush.bf16.msra.mxu0 %v527
    %2187 = vmatpush.bf16.msra.mxu0 %v523
    %2188 = vmatpush.bf16.msra.mxu0 %v519
    %2189 = vmatpush.bf16.msra.mxu0 %v515
    %2190 = vmatpush.bf16.msra.mxu0 %v511
    %2191 = vmatpush.bf16.msra.mxu0 %v507
    %2192 = vmatpush.bf16.msra.mxu0 %v503
    %2193 = vmatpush.bf16.msra.mxu0 %v499
    %2194 = vmatmul.bf16.gmra.mxu0 %v2001
    %v2195 = vpop.f32.mrf.mxu0
    %v2196 = vadd.f32 0.0, %v2195
    %v2197 = vpop.f32.mrf.mxu0
    %2198 = vdwg.mxu0
    %2199 = vmatpush.bf16.msra.mxu0 %v528
    %2200 = vmatpush.bf16.msra.mxu0 %v524
    %2201 = vmatpush.bf16.msra.mxu0 %v520
    %2202 = vmatpush.bf16.msra.mxu0 %v516
    %2203 = vmatpush.bf16.msra.mxu0 %v512
    %2204 = vmatpush.bf16.msra.mxu0 %v508
    %2205 = vmatpush.bf16.msra.mxu0 %v504
    %2206 = vmatpush.bf16.msra.mxu0 %v500
    %2207 = vmatmul.bf16.gmra.mxu0 %v2001
    %v2208 = vpop.f32.mrf.mxu0
    %v2209 = vadd.f32 0.0, %v2208
    %v2210 = vpop.f32.mrf.mxu0
    %2211 = vdwg.mxu0
    %2212 = vmatpush.bf16.msra.mxu0 %v529
    %2213 = vmatpush.bf16.msra.mxu0 %v525
    %2214 = vmatpush.bf16.msra.mxu0 %v521
    %2215 = vmatpush.bf16.msra.mxu0 %v517
    %2216 = vmatpush.bf16.msra.mxu0 %v513
    %2217 = vmatpush.bf16.msra.mxu0 %v509
    %2218 = vmatpush.bf16.msra.mxu0 %v505
    %2219 = vmatpush.bf16.msra.mxu0 %v501
    %2220 = vmatmul.bf16.gmra.mxu0 %v2001
    %v2221 = vpop.f32.mrf.mxu0
    %v2222 = vadd.f32 0.0, %v2221
    %v2223 = vpop.f32.mrf.mxu0
    %2224 = vdwg.mxu0
    %v2229 = vrot.slane %v2196, 6
    %v2230 = vrot.slane %v2209, 4
    %v2231 = vrot.slane %v2222, 2
    %v2232 = vsel %vm296, %v2183, %v2229
    %v2233 = vsel %vm298, %v2230, %v2231
    %v2234 = vsel %vm213, %v2232, %v2233
    %v2236 = vadd.f32 %v356, %v2234
    %v2237 = vxor.u32 %v2236, 2147483648
    %v2238 = vmul.f32 %v2237, 1.442695
    %v2239 = vpow.pop %v2238
    %v2240 = vadd.f32 %v2239, 1.0
    %v2241 = vrcp.pop %v2240
    %v2242 = vmul.f32 %v2240, %v2241
    %v2243 = vsub.f32 1.0, %v2242
    %v2244 = vmul.f32 %v2241, %v2243
    %v2245 = vadd.f32 %v2241, %v2244
    %vm2246 = vweird.f32 %v2240
    %vm2247 = vweird.f32 %v2241
    %vm2248 = vmor %vm2246, %vm2247
    %v2249 = vsel %vm2248, %v2241, %v2245
    %v2250 = vand.u32 2147483647, %v2240
    %vm2251 = vcmp.eq.f32.partialorder %v2250, 8.507059e+37
    %v2252 = vand.u32 %v2240, 2147483648
    %v2253 = vor.u32 1.1754944e-38, %v2252
    %v2254 = vsel %vm2251, %v2253, %v2249
    %v2255 = vmul.f32 1.0, %v2254
    %v2257 = vrot.slane %v2236, 2
    %v2259 = vxor.u32 %v2257, 2147483648
    %v2260 = vmul.f32 %v2259, 1.442695
    %v2261 = vpow.pop %v2260
    %v2262 = vadd.f32 %v2261, 1.0
    %v2263 = vrcp.pop %v2262
    %v2264 = vmul.f32 %v2262, %v2263
    %v2265 = vsub.f32 1.0, %v2264
    %v2266 = vmul.f32 %v2263, %v2265
    %v2267 = vadd.f32 %v2263, %v2266
    %vm2268 = vweird.f32 %v2262
    %vm2269 = vweird.f32 %v2263
    %vm2270 = vmor %vm2268, %vm2269
    %v2271 = vsel %vm2270, %v2263, %v2267
    %v2272 = vand.u32 2147483647, %v2262
    %vm2273 = vcmp.eq.f32.partialorder %v2272, 8.507059e+37
    %v2274 = vand.u32 %v2262, 2147483648
    %v2275 = vor.u32 1.1754944e-38, %v2274
    %v2276 = vsel %vm2273, %v2275, %v2271
    %v2277 = vmul.f32 1.0, %v2276
    %v2278 = vrot.slane %v2236, 4
    %v2280 = vtanh.pop %v2278
    %v2281 = vrot.slane %v2236, 6
    %v2283 = vxor.u32 %v2281, 2147483648
    %v2284 = vmul.f32 %v2283, 1.442695
    %v2285 = vpow.pop %v2284
    %v2286 = vadd.f32 %v2285, 1.0
    %v2287 = vrcp.pop %v2286
    %v2288 = vmul.f32 %v2286, %v2287
    %v2289 = vsub.f32 1.0, %v2288
    %v2290 = vmul.f32 %v2287, %v2289
    %v2291 = vadd.f32 %v2287, %v2290
    %vm2292 = vweird.f32 %v2286
    %vm2293 = vweird.f32 %v2287
    %vm2294 = vmor %vm2292, %vm2293
    %v2295 = vsel %vm2294, %v2287, %v2291
    %v2296 = vand.u32 2147483647, %v2286
    %vm2297 = vcmp.eq.f32.partialorder %v2296, 8.507059e+37
    %v2298 = vand.u32 %v2286, 2147483648
    %v2299 = vor.u32 1.1754944e-38, %v2298
    %v2300 = vsel %vm2297, %v2299, %v2295
    %v2301 = vmul.f32 1.0, %v2300
    %v2302 = vmul.f32 %v2277, %v1997
    %v2303 = vmul.f32 %v2255, %v2280
    %v2304 = vadd.f32 %v2302, %v2303
    %v2305 = vtanh.pop %v2304
    %v2306 = vmul.f32 %v2301, %v2305
    %v2307 = vpack.c.bf16 %v2172, %v2172
    %v2308 = vpack.c.bf16 %v2306, %v2306
    %2309 = vmatpush.bf16.msra.mxu0 %v885
    %2310 = vmatpush.bf16.msra.mxu0 %v881
    %2311 = vmatpush.bf16.msra.mxu0 %v877
    %2312 = vmatpush.bf16.msra.mxu0 %v873
    %2313 = vmatpush.bf16.msra.mxu0 %v869
    %2314 = vmatpush.bf16.msra.mxu0 %v865
    %2315 = vmatpush.bf16.msra.mxu0 %v861
    %2316 = vmatpush.bf16.msra.mxu0 %v857
    %2317 = vmatmul.bf16.gmra.mxu0 %v2308
    %v2318 = vpop.f32.mrf.mxu0
    %v2319 = vadd.f32 0.0, %v2318
    %v2320 = vpop.f32.mrf.mxu0
    %2321 = vdwg.mxu0
    %2322 = vmatpush.bf16.msra.mxu0 %v886
    %2323 = vmatpush.bf16.msra.mxu0 %v882
    %2324 = vmatpush.bf16.msra.mxu0 %v878
    %2325 = vmatpush.bf16.msra.mxu0 %v874
    %2326 = vmatpush.bf16.msra.mxu0 %v870
    %2327 = vmatpush.bf16.msra.mxu0 %v866
    %2328 = vmatpush.bf16.msra.mxu0 %v862
    %2329 = vmatpush.bf16.msra.mxu0 %v858
    %2330 = vmatmul.bf16.gmra.mxu0 %v2308
    %v2331 = vpop.f32.mrf.mxu0
    %v2332 = vadd.f32 0.0, %v2331
    %v2333 = vpop.f32.mrf.mxu0
    %2334 = vdwg.mxu0
    %2335 = vmatpush.bf16.msra.mxu0 %v887
    %2336 = vmatpush.bf16.msra.mxu0 %v883
    %2337 = vmatpush.bf16.msra.mxu0 %v879
    %2338 = vmatpush.bf16.msra.mxu0 %v875
    %2339 = vmatpush.bf16.msra.mxu0 %v871
    %2340 = vmatpush.bf16.msra.mxu0 %v867
    %2341 = vmatpush.bf16.msra.mxu0 %v863
    %2342 = vmatpush.bf16.msra.mxu0 %v859
    %2343 = vmatmul.bf16.gmra.mxu0 %v2308
    %v2344 = vpop.f32.mrf.mxu0
    %v2345 = vadd.f32 0.0, %v2344
    %v2346 = vpop.f32.mrf.mxu0
    %2347 = vdwg.mxu0
    %2348 = vmatpush.bf16.msra.mxu0 %v888
    %2349 = vmatpush.bf16.msra.mxu0 %v884
    %2350 = vmatpush.bf16.msra.mxu0 %v880
    %2351 = vmatpush.bf16.msra.mxu0 %v876
    %2352 = vmatpush.bf16.msra.mxu0 %v872
    %2353 = vmatpush.bf16.msra.mxu0 %v868
    %2354 = vmatpush.bf16.msra.mxu0 %v864
    %2355 = vmatpush.bf16.msra.mxu0 %v860
    %2356 = vmatmul.bf16.gmra.mxu0 %v2308
    %v2357 = vpop.f32.mrf.mxu0
    %v2358 = vadd.f32 0.0, %v2357
    %v2359 = vpop.f32.mrf.mxu0
    %2360 = vdwg.mxu0
    %2361 = vmatpush.bf16.msra.mxu0 %v1097
    %2362 = vmatpush.bf16.msra.mxu0 %v1093
    %2363 = vmatpush.bf16.msra.mxu0 %v1089
    %2364 = vmatpush.bf16.msra.mxu0 %v1085
    %2365 = vmatpush.bf16.msra.mxu0 %v1081
    %2366 = vmatpush.bf16.msra.mxu0 %v1077
    %2367 = vmatpush.bf16.msra.mxu0 %v1073
    %2368 = vmatpush.bf16.msra.mxu0 %v1069
    %2369 = vmatmul.bf16.gmra.mxu0 %v2307
    %v2370 = vpop.f32.mrf.mxu0
    %v2371 = vadd.f32 %v2319, %v2370
    %v2372 = vpop.f32.mrf.mxu0
    %2373 = vdwg.mxu0
    %2374 = vmatpush.bf16.msra.mxu0 %v1098
    %2375 = vmatpush.bf16.msra.mxu0 %v1094
    %2376 = vmatpush.bf16.msra.mxu0 %v1090
    %2377 = vmatpush.bf16.msra.mxu0 %v1086
    %2378 = vmatpush.bf16.msra.mxu0 %v1082
    %2379 = vmatpush.bf16.msra.mxu0 %v1078
    %2380 = vmatpush.bf16.msra.mxu0 %v1074
    %2381 = vmatpush.bf16.msra.mxu0 %v1070
    %2382 = vmatmul.bf16.gmra.mxu0 %v2307
    %v2383 = vpop.f32.mrf.mxu0
    %v2384 = vadd.f32 %v2332, %v2383
    %v2385 = vpop.f32.mrf.mxu0
    %2386 = vdwg.mxu0
    %2387 = vmatpush.bf16.msra.mxu0 %v1099
    %2388 = vmatpush.bf16.msra.mxu0 %v1095
    %2389 = vmatpush.bf16.msra.mxu0 %v1091
    %2390 = vmatpush.bf16.msra.mxu0 %v1087
    %2391 = vmatpush.bf16.msra.mxu0 %v1083
    %2392 = vmatpush.bf16.msra.mxu0 %v1079
    %2393 = vmatpush.bf16.msra.mxu0 %v1075
    %2394 = vmatpush.bf16.msra.mxu0 %v1071
    %2395 = vmatmul.bf16.gmra.mxu0 %v2307
    %v2396 = vpop.f32.mrf.mxu0
    %v2397 = vadd.f32 %v2345, %v2396
    %v2398 = vpop.f32.mrf.mxu0
    %2399 = vdwg.mxu0
    %2400 = vmatpush.bf16.msra.mxu0 %v1100
    %2401 = vmatpush.bf16.msra.mxu0 %v1096
    %2402 = vmatpush.bf16.msra.mxu0 %v1092
    %2403 = vmatpush.bf16.msra.mxu0 %v1088
    %2404 = vmatpush.bf16.msra.mxu0 %v1084
    %2405 = vmatpush.bf16.msra.mxu0 %v1080
    %2406 = vmatpush.bf16.msra.mxu0 %v1076
    %2407 = vmatpush.bf16.msra.mxu0 %v1072
    %2408 = vmatmul.bf16.gmra.mxu0 %v2307
    %v2409 = vpop.f32.mrf.mxu0
    %v2410 = vadd.f32 %v2358, %v2409
    %v2411 = vpop.f32.mrf.mxu0
    %2412 = vdwg.mxu0
    %v2413 = vadd.f32 %v2371, %v362
    %v2414 = vadd.f32 %v2384, %v363
    %v2415 = vadd.f32 %v2397, %v364
    %v2416 = vadd.f32 %v2410, %v365
    %v2417 = vxor.u32 %v2413, 2147483648
    %v2418 = vmul.f32 %v2417, 1.442695
    %v2419 = vpow.pop %v2418
    %v2420 = vadd.f32 %v2419, 1.0
    %v2421 = vrcp.pop %v2420
    %v2422 = vmul.f32 %v2420, %v2421
    %v2423 = vsub.f32 1.0, %v2422
    %v2424 = vmul.f32 %v2421, %v2423
    %v2425 = vadd.f32 %v2421, %v2424
    %vm2426 = vweird.f32 %v2420
    %vm2427 = vweird.f32 %v2421
    %vm2428 = vmor %vm2426, %vm2427
    %v2429 = vsel %vm2428, %v2421, %v2425
    %v2430 = vand.u32 2147483647, %v2420
    %vm2431 = vcmp.eq.f32.partialorder %v2430, 8.507059e+37
    %v2432 = vand.u32 %v2420, 2147483648
    %v2433 = vor.u32 1.1754944e-38, %v2432
    %v2434 = vsel %vm2431, %v2433, %v2429
    %v2435 = vmul.f32 1.0, %v2434
    %v2436 = vxor.u32 %v2414, 2147483648
    %v2437 = vmul.f32 %v2436, 1.442695
    %v2438 = vpow.pop %v2437
    %v2439 = vadd.f32 %v2438, 1.0
    %v2440 = vrcp.pop %v2439
    %v2441 = vmul.f32 %v2439, %v2440
    %v2442 = vsub.f32 1.0, %v2441
    %v2443 = vmul.f32 %v2440, %v2442
    %v2444 = vadd.f32 %v2440, %v2443
    %vm2445 = vweird.f32 %v2439
    %vm2446 = vweird.f32 %v2440
    %vm2447 = vmor %vm2445, %vm2446
    %v2448 = vsel %vm2447, %v2440, %v2444
    %v2449 = vand.u32 2147483647, %v2439
    %vm2450 = vcmp.eq.f32.partialorder %v2449, 8.507059e+37
    %v2451 = vand.u32 %v2439, 2147483648
    %v2452 = vor.u32 1.1754944e-38, %v2451
    %v2453 = vsel %vm2450, %v2452, %v2448
    %v2454 = vmul.f32 1.0, %v2453
    %v2455 = vtanh.pop %v2415
    %v2456 = vxor.u32 %v2416, 2147483648
    %v2457 = vmul.f32 %v2456, 1.442695
    %v2458 = vpow.pop %v2457
    %v2459 = vadd.f32 %v2458, 1.0
    %v2460 = vrcp.pop %v2459
    %v2461 = vmul.f32 %v2459, %v2460
    %v2462 = vsub.f32 1.0, %v2461
    %v2463 = vmul.f32 %v2460, %v2462
    %v2464 = vadd.f32 %v2460, %v2463
    %vm2465 = vweird.f32 %v2459
    %vm2466 = vweird.f32 %v2460
    %vm2467 = vmor %vm2465, %vm2466
    %v2468 = vsel %vm2467, %v2460, %v2464
    %v2469 = vand.u32 2147483647, %v2459
    %vm2470 = vcmp.eq.f32.partialorder %v2469, 8.507059e+37
    %v2471 = vand.u32 %v2459, 2147483648
    %v2472 = vor.u32 1.1754944e-38, %v2471
    %v2473 = vsel %vm2470, %v2472, %v2468
    %v2474 = vmul.f32 1.0, %v2473
    %v2475 = vmul.f32 %v2454, %v2170
    %v2476 = vmul.f32 %v2435, %v2455
    %v2477 = vadd.f32 %v2475, %v2476
    %v2478 = vtanh.pop %v2477
    %v2479 = vmul.f32 %v2474, %v2478
    %2480 = vmatpush.bf16.msra.mxu0 %v526
    %2481 = vmatpush.bf16.msra.mxu0 %v522
    %2482 = vmatpush.bf16.msra.mxu0 %v518
    %2483 = vmatpush.bf16.msra.mxu0 %v514
    %2484 = vmatpush.bf16.msra.mxu0 %v510
    %2485 = vmatpush.bf16.msra.mxu0 %v506
    %2486 = vmatpush.bf16.msra.mxu0 %v502
    %2487 = vmatpush.bf16.msra.mxu0 %v498
    %2488 = vmatmul.bf16.gmra.mxu0 %v2308
    %v2489 = vpop.f32.mrf.mxu0
    %v2490 = vadd.f32 0.0, %v2489
    %v2491 = vpop.f32.mrf.mxu0
    %2492 = vdwg.mxu0
    %2493 = vmatpush.bf16.msra.mxu0 %v527
    %2494 = vmatpush.bf16.msra.mxu0 %v523
    %2495 = vmatpush.bf16.msra.mxu0 %v519
    %2496 = vmatpush.bf16.msra.mxu0 %v515
    %2497 = vmatpush.bf16.msra.mxu0 %v511
    %2498 = vmatpush.bf16.msra.mxu0 %v507
    %2499 = vmatpush.bf16.msra.mxu0 %v503
    %2500 = vmatpush.bf16.msra.mxu0 %v499
    %2501 = vmatmul.bf16.gmra.mxu0 %v2308
    %v2502 = vpop.f32.mrf.mxu0
    %v2503 = vadd.f32 0.0, %v2502
    %v2504 = vpop.f32.mrf.mxu0
    %2505 = vdwg.mxu0
    %2506 = vmatpush.bf16.msra.mxu0 %v528
    %2507 = vmatpush.bf16.msra.mxu0 %v524
    %2508 = vmatpush.bf16.msra.mxu0 %v520
    %2509 = vmatpush.bf16.msra.mxu0 %v516
    %2510 = vmatpush.bf16.msra.mxu0 %v512
    %2511 = vmatpush.bf16.msra.mxu0 %v508
    %2512 = vmatpush.bf16.msra.mxu0 %v504
    %2513 = vmatpush.bf16.msra.mxu0 %v500
    %2514 = vmatmul.bf16.gmra.mxu0 %v2308
    %v2515 = vpop.f32.mrf.mxu0
    %v2516 = vadd.f32 0.0, %v2515
    %v2517 = vpop.f32.mrf.mxu0
    %2518 = vdwg.mxu0
    %2519 = vmatpush.bf16.msra.mxu0 %v529
    %2520 = vmatpush.bf16.msra.mxu0 %v525
    %2521 = vmatpush.bf16.msra.mxu0 %v521
    %2522 = vmatpush.bf16.msra.mxu0 %v517
    %2523 = vmatpush.bf16.msra.mxu0 %v513
    %2524 = vmatpush.bf16.msra.mxu0 %v509
    %2525 = vmatpush.bf16.msra.mxu0 %v505
    %2526 = vmatpush.bf16.msra.mxu0 %v501
    %2527 = vmatmul.bf16.gmra.mxu0 %v2308
    %v2528 = vpop.f32.mrf.mxu0
    %v2529 = vadd.f32 0.0, %v2528
    %v2530 = vpop.f32.mrf.mxu0
    %2531 = vdwg.mxu0
    %v2536 = vrot.slane %v2503, 6
    %v2537 = vrot.slane %v2516, 4
    %v2538 = vrot.slane %v2529, 2
    %v2539 = vsel %vm296, %v2490, %v2536
    %v2540 = vsel %vm298, %v2537, %v2538
    %v2541 = vsel %vm213, %v2539, %v2540
    %v2543 = vadd.f32 %v357, %v2541
    %v2544 = vxor.u32 %v2543, 2147483648
    %v2545 = vmul.f32 %v2544, 1.442695
    %v2546 = vpow.pop %v2545
    %v2547 = vadd.f32 %v2546, 1.0
    %v2548 = vrcp.pop %v2547
    %v2549 = vmul.f32 %v2547, %v2548
    %v2550 = vsub.f32 1.0, %v2549
    %v2551 = vmul.f32 %v2548, %v2550
    %v2552 = vadd.f32 %v2548, %v2551
    %vm2553 = vweird.f32 %v2547
    %vm2554 = vweird.f32 %v2548
    %vm2555 = vmor %vm2553, %vm2554
    %v2556 = vsel %vm2555, %v2548, %v2552
    %v2557 = vand.u32 2147483647, %v2547
    %vm2558 = vcmp.eq.f32.partialorder %v2557, 8.507059e+37
    %v2559 = vand.u32 %v2547, 2147483648
    %v2560 = vor.u32 1.1754944e-38, %v2559
    %v2561 = vsel %vm2558, %v2560, %v2556
    %v2562 = vmul.f32 1.0, %v2561
    %v2564 = vrot.slane %v2543, 2
    %v2566 = vxor.u32 %v2564, 2147483648
    %v2567 = vmul.f32 %v2566, 1.442695
    %v2568 = vpow.pop %v2567
    %v2569 = vadd.f32 %v2568, 1.0
    %v2570 = vrcp.pop %v2569
    %v2571 = vmul.f32 %v2569, %v2570
    %v2572 = vsub.f32 1.0, %v2571
    %v2573 = vmul.f32 %v2570, %v2572
    %v2574 = vadd.f32 %v2570, %v2573
    %vm2575 = vweird.f32 %v2569
    %vm2576 = vweird.f32 %v2570
    %vm2577 = vmor %vm2575, %vm2576
    %v2578 = vsel %vm2577, %v2570, %v2574
    %v2579 = vand.u32 2147483647, %v2569
    %vm2580 = vcmp.eq.f32.partialorder %v2579, 8.507059e+37
    %v2581 = vand.u32 %v2569, 2147483648
    %v2582 = vor.u32 1.1754944e-38, %v2581
    %v2583 = vsel %vm2580, %v2582, %v2578
    %v2584 = vmul.f32 1.0, %v2583
    %v2585 = vrot.slane %v2543, 4
    %v2587 = vtanh.pop %v2585
    %v2588 = vrot.slane %v2543, 6
    %v2590 = vxor.u32 %v2588, 2147483648
    %v2591 = vmul.f32 %v2590, 1.442695
    %v2592 = vpow.pop %v2591
    %v2593 = vadd.f32 %v2592, 1.0
    %v2594 = vrcp.pop %v2593
    %v2595 = vmul.f32 %v2593, %v2594
    %v2596 = vsub.f32 1.0, %v2595
    %v2597 = vmul.f32 %v2594, %v2596
    %v2598 = vadd.f32 %v2594, %v2597
    %vm2599 = vweird.f32 %v2593
    %vm2600 = vweird.f32 %v2594
    %vm2601 = vmor %vm2599, %vm2600
    %v2602 = vsel %vm2601, %v2594, %v2598
    %v2603 = vand.u32 2147483647, %v2593
    %vm2604 = vcmp.eq.f32.partialorder %v2603, 8.507059e+37
    %v2605 = vand.u32 %v2593, 2147483648
    %v2606 = vor.u32 1.1754944e-38, %v2605
    %v2607 = vsel %vm2604, %v2606, %v2602
    %v2608 = vmul.f32 1.0, %v2607
    %v2609 = vmul.f32 %v2584, %v2304
    %v2610 = vmul.f32 %v2562, %v2587
    %v2611 = vadd.f32 %v2609, %v2610
    %v2612 = vtanh.pop %v2611
    %v2613 = vmul.f32 %v2608, %v2612
    %v2614 = vpack.c.bf16 %v2479, %v2479
    %v2615 = vpack.c.bf16 %v2613, %v2613
    %2616 = vmatpush.bf16.msra.mxu0 %v885
    %2617 = vmatpush.bf16.msra.mxu0 %v881
    %2618 = vmatpush.bf16.msra.mxu0 %v877
    %2619 = vmatpush.bf16.msra.mxu0 %v873
    %2620 = vmatpush.bf16.msra.mxu0 %v869
    %2621 = vmatpush.bf16.msra.mxu0 %v865
    %2622 = vmatpush.bf16.msra.mxu0 %v861
    %2623 = vmatpush.bf16.msra.mxu0 %v857
    %2624 = vmatmul.bf16.gmra.mxu0 %v2615
    %v2625 = vpop.f32.mrf.mxu0
    %v2626 = vadd.f32 0.0, %v2625
    %v2627 = vpop.f32.mrf.mxu0
    %2628 = vdwg.mxu0
    %2629 = vmatpush.bf16.msra.mxu0 %v886
    %2630 = vmatpush.bf16.msra.mxu0 %v882
    %2631 = vmatpush.bf16.msra.mxu0 %v878
    %2632 = vmatpush.bf16.msra.mxu0 %v874
    %2633 = vmatpush.bf16.msra.mxu0 %v870
    %2634 = vmatpush.bf16.msra.mxu0 %v866
    %2635 = vmatpush.bf16.msra.mxu0 %v862
    %2636 = vmatpush.bf16.msra.mxu0 %v858
    %2637 = vmatmul.bf16.gmra.mxu0 %v2615
    %v2638 = vpop.f32.mrf.mxu0
    %v2639 = vadd.f32 0.0, %v2638
    %v2640 = vpop.f32.mrf.mxu0
    %2641 = vdwg.mxu0
    %2642 = vmatpush.bf16.msra.mxu0 %v887
    %2643 = vmatpush.bf16.msra.mxu0 %v883
    %2644 = vmatpush.bf16.msra.mxu0 %v879
    %2645 = vmatpush.bf16.msra.mxu0 %v875
    %2646 = vmatpush.bf16.msra.mxu0 %v871
    %2647 = vmatpush.bf16.msra.mxu0 %v867
    %2648 = vmatpush.bf16.msra.mxu0 %v863
    %2649 = vmatpush.bf16.msra.mxu0 %v859
    %2650 = vmatmul.bf16.gmra.mxu0 %v2615
    %v2651 = vpop.f32.mrf.mxu0
    %v2652 = vadd.f32 0.0, %v2651
    %v2653 = vpop.f32.mrf.mxu0
    %2654 = vdwg.mxu0
    %2655 = vmatpush.bf16.msra.mxu0 %v888
    %2656 = vmatpush.bf16.msra.mxu0 %v884
    %2657 = vmatpush.bf16.msra.mxu0 %v880
    %2658 = vmatpush.bf16.msra.mxu0 %v876
    %2659 = vmatpush.bf16.msra.mxu0 %v872
    %2660 = vmatpush.bf16.msra.mxu0 %v868
    %2661 = vmatpush.bf16.msra.mxu0 %v864
    %2662 = vmatpush.bf16.msra.mxu0 %v860
    %2663 = vmatmul.bf16.gmra.mxu0 %v2615
    %v2664 = vpop.f32.mrf.mxu0
    %v2665 = vadd.f32 0.0, %v2664
    %v2666 = vpop.f32.mrf.mxu0
    %2667 = vdwg.mxu0
    %2668 = vmatpush.bf16.msra.mxu0 %v1097
    %2669 = vmatpush.bf16.msra.mxu0 %v1093
    %2670 = vmatpush.bf16.msra.mxu0 %v1089
    %2671 = vmatpush.bf16.msra.mxu0 %v1085
    %2672 = vmatpush.bf16.msra.mxu0 %v1081
    %2673 = vmatpush.bf16.msra.mxu0 %v1077
    %2674 = vmatpush.bf16.msra.mxu0 %v1073
    %2675 = vmatpush.bf16.msra.mxu0 %v1069
    %2676 = vmatmul.bf16.gmra.mxu0 %v2614
    %v2677 = vpop.f32.mrf.mxu0
    %v2678 = vadd.f32 %v2626, %v2677
    %v2679 = vpop.f32.mrf.mxu0
    %2680 = vdwg.mxu0
    %2681 = vmatpush.bf16.msra.mxu0 %v1098
    %2682 = vmatpush.bf16.msra.mxu0 %v1094
    %2683 = vmatpush.bf16.msra.mxu0 %v1090
    %2684 = vmatpush.bf16.msra.mxu0 %v1086
    %2685 = vmatpush.bf16.msra.mxu0 %v1082
    %2686 = vmatpush.bf16.msra.mxu0 %v1078
    %2687 = vmatpush.bf16.msra.mxu0 %v1074
    %2688 = vmatpush.bf16.msra.mxu0 %v1070
    %2689 = vmatmul.bf16.gmra.mxu0 %v2614
    %v2690 = vpop.f32.mrf.mxu0
    %v2691 = vadd.f32 %v2639, %v2690
    %v2692 = vpop.f32.mrf.mxu0
    %2693 = vdwg.mxu0
    %2694 = vmatpush.bf16.msra.mxu0 %v1099
    %2695 = vmatpush.bf16.msra.mxu0 %v1095
    %2696 = vmatpush.bf16.msra.mxu0 %v1091
    %2697 = vmatpush.bf16.msra.mxu0 %v1087
    %2698 = vmatpush.bf16.msra.mxu0 %v1083
    %2699 = vmatpush.bf16.msra.mxu0 %v1079
    %2700 = vmatpush.bf16.msra.mxu0 %v1075
    %2701 = vmatpush.bf16.msra.mxu0 %v1071
    %2702 = vmatmul.bf16.gmra.mxu0 %v2614
    %v2703 = vpop.f32.mrf.mxu0
    %v2704 = vadd.f32 %v2652, %v2703
    %v2705 = vpop.f32.mrf.mxu0
    %2706 = vdwg.mxu0
    %2707 = vmatpush.bf16.msra.mxu0 %v1100
    %2708 = vmatpush.bf16.msra.mxu0 %v1096
    %2709 = vmatpush.bf16.msra.mxu0 %v1092
    %2710 = vmatpush.bf16.msra.mxu0 %v1088
    %2711 = vmatpush.bf16.msra.mxu0 %v1084
    %2712 = vmatpush.bf16.msra.mxu0 %v1080
    %2713 = vmatpush.bf16.msra.mxu0 %v1076
    %2714 = vmatpush.bf16.msra.mxu0 %v1072
    %2715 = vmatmul.bf16.gmra.mxu0 %v2614
    %v2716 = vpop.f32.mrf.mxu0
    %v2717 = vadd.f32 %v2665, %v2716
    %v2718 = vpop.f32.mrf.mxu0
    %2719 = vdwg.mxu0
    %v2720 = vadd.f32 %v2678, %v362
    %v2721 = vadd.f32 %v2691, %v363
    %v2722 = vadd.f32 %v2704, %v364
    %v2723 = vadd.f32 %v2717, %v365
    %v2724 = vxor.u32 %v2720, 2147483648
    %v2725 = vmul.f32 %v2724, 1.442695
    %v2726 = vpow.pop %v2725
    %v2727 = vadd.f32 %v2726, 1.0
    %v2728 = vrcp.pop %v2727
    %v2729 = vmul.f32 %v2727, %v2728
    %v2730 = vsub.f32 1.0, %v2729
    %v2731 = vmul.f32 %v2728, %v2730
    %v2732 = vadd.f32 %v2728, %v2731
    %vm2733 = vweird.f32 %v2727
    %vm2734 = vweird.f32 %v2728
    %vm2735 = vmor %vm2733, %vm2734
    %v2736 = vsel %vm2735, %v2728, %v2732
    %v2737 = vand.u32 2147483647, %v2727
    %vm2738 = vcmp.eq.f32.partialorder %v2737, 8.507059e+37
    %v2739 = vand.u32 %v2727, 2147483648
    %v2740 = vor.u32 1.1754944e-38, %v2739
    %v2741 = vsel %vm2738, %v2740, %v2736
    %v2742 = vmul.f32 1.0, %v2741
    %v2743 = vxor.u32 %v2721, 2147483648
    %v2744 = vmul.f32 %v2743, 1.442695
    %v2745 = vpow.pop %v2744
    %v2746 = vadd.f32 %v2745, 1.0
    %v2747 = vrcp.pop %v2746
    %v2748 = vmul.f32 %v2746, %v2747
    %v2749 = vsub.f32 1.0, %v2748
    %v2750 = vmul.f32 %v2747, %v2749
    %v2751 = vadd.f32 %v2747, %v2750
    %vm2752 = vweird.f32 %v2746
    %vm2753 = vweird.f32 %v2747
    %vm2754 = vmor %vm2752, %vm2753
    %v2755 = vsel %vm2754, %v2747, %v2751
    %v2756 = vand.u32 2147483647, %v2746
    %vm2757 = vcmp.eq.f32.partialorder %v2756, 8.507059e+37
    %v2758 = vand.u32 %v2746, 2147483648
    %v2759 = vor.u32 1.1754944e-38, %v2758
    %v2760 = vsel %vm2757, %v2759, %v2755
    %v2761 = vmul.f32 1.0, %v2760
    %v2762 = vtanh.pop %v2722
    %v2763 = vxor.u32 %v2723, 2147483648
    %v2764 = vmul.f32 %v2763, 1.442695
    %v2765 = vpow.pop %v2764
    %v2766 = vadd.f32 %v2765, 1.0
    %v2767 = vrcp.pop %v2766
    %v2768 = vmul.f32 %v2766, %v2767
    %v2769 = vsub.f32 1.0, %v2768
    %v2770 = vmul.f32 %v2767, %v2769
    %v2771 = vadd.f32 %v2767, %v2770
    %vm2772 = vweird.f32 %v2766
    %vm2773 = vweird.f32 %v2767
    %vm2774 = vmor %vm2772, %vm2773
    %v2775 = vsel %vm2774, %v2767, %v2771
    %v2776 = vand.u32 2147483647, %v2766
    %vm2777 = vcmp.eq.f32.partialorder %v2776, 8.507059e+37
    %v2778 = vand.u32 %v2766, 2147483648
    %v2779 = vor.u32 1.1754944e-38, %v2778
    %v2780 = vsel %vm2777, %v2779, %v2775
    %v2781 = vmul.f32 1.0, %v2780
    %v2782 = vmul.f32 %v2761, %v2477
    %v2783 = vmul.f32 %v2742, %v2762
    %v2784 = vadd.f32 %v2782, %v2783
    %v2785 = vtanh.pop %v2784
    %v2786 = vmul.f32 %v2781, %v2785
    %2787 = vmatpush.bf16.msra.mxu0 %v526
    %2788 = vmatpush.bf16.msra.mxu0 %v522
    %2789 = vmatpush.bf16.msra.mxu0 %v518
    %2790 = vmatpush.bf16.msra.mxu0 %v514
    %2791 = vmatpush.bf16.msra.mxu0 %v510
    %2792 = vmatpush.bf16.msra.mxu0 %v506
    %2793 = vmatpush.bf16.msra.mxu0 %v502
    %2794 = vmatpush.bf16.msra.mxu0 %v498
    %2795 = vmatmul.bf16.gmra.mxu0 %v2615
    %v2796 = vpop.f32.mrf.mxu0
    %v2797 = vadd.f32 0.0, %v2796
    %v2798 = vpop.f32.mrf.mxu0
    %2799 = vdwg.mxu0
    %2800 = vmatpush.bf16.msra.mxu0 %v527
    %2801 = vmatpush.bf16.msra.mxu0 %v523
    %2802 = vmatpush.bf16.msra.mxu0 %v519
    %2803 = vmatpush.bf16.msra.mxu0 %v515
    %2804 = vmatpush.bf16.msra.mxu0 %v511
    %2805 = vmatpush.bf16.msra.mxu0 %v507
    %2806 = vmatpush.bf16.msra.mxu0 %v503
    %2807 = vmatpush.bf16.msra.mxu0 %v499
    %2808 = vmatmul.bf16.gmra.mxu0 %v2615
    %v2809 = vpop.f32.mrf.mxu0
    %v2810 = vadd.f32 0.0, %v2809
    %v2811 = vpop.f32.mrf.mxu0
    %2812 = vdwg.mxu0
    %2813 = vmatpush.bf16.msra.mxu0 %v528
    %2814 = vmatpush.bf16.msra.mxu0 %v524
    %2815 = vmatpush.bf16.msra.mxu0 %v520
    %2816 = vmatpush.bf16.msra.mxu0 %v516
    %2817 = vmatpush.bf16.msra.mxu0 %v512
    %2818 = vmatpush.bf16.msra.mxu0 %v508
    %2819 = vmatpush.bf16.msra.mxu0 %v504
    %2820 = vmatpush.bf16.msra.mxu0 %v500
    %2821 = vmatmul.bf16.gmra.mxu0 %v2615
    %v2822 = vpop.f32.mrf.mxu0
    %v2823 = vadd.f32 0.0, %v2822
    %v2824 = vpop.f32.mrf.mxu0
    %2825 = vdwg.mxu0
    %2826 = vmatpush.bf16.msra.mxu0 %v529
    %2827 = vmatpush.bf16.msra.mxu0 %v525
    %2828 = vmatpush.bf16.msra.mxu0 %v521
    %2829 = vmatpush.bf16.msra.mxu0 %v517
    %2830 = vmatpush.bf16.msra.mxu0 %v513
    %2831 = vmatpush.bf16.msra.mxu0 %v509
    %2832 = vmatpush.bf16.msra.mxu0 %v505
    %2833 = vmatpush.bf16.msra.mxu0 %v501
    %2834 = vmatmul.bf16.gmra.mxu0 %v2615
    %v2835 = vpop.f32.mrf.mxu0
    %v2836 = vadd.f32 0.0, %v2835
    %v2837 = vpop.f32.mrf.mxu0
    %2838 = vdwg.mxu0
    %v2843 = vrot.slane %v2810, 6
    %v2844 = vrot.slane %v2823, 4
    %v2845 = vrot.slane %v2836, 2
    %v2846 = vsel %vm296, %v2797, %v2843
    %v2847 = vsel %vm298, %v2844, %v2845
    %v2848 = vsel %vm213, %v2846, %v2847
    %v2850 = vadd.f32 %v358, %v2848
    %v2851 = vxor.u32 %v2850, 2147483648
    %v2852 = vmul.f32 %v2851, 1.442695
    %v2853 = vpow.pop %v2852
    %v2854 = vadd.f32 %v2853, 1.0
    %v2855 = vrcp.pop %v2854
    %v2856 = vmul.f32 %v2854, %v2855
    %v2857 = vsub.f32 1.0, %v2856
    %v2858 = vmul.f32 %v2855, %v2857
    %v2859 = vadd.f32 %v2855, %v2858
    %vm2860 = vweird.f32 %v2854
    %vm2861 = vweird.f32 %v2855
    %vm2862 = vmor %vm2860, %vm2861
    %v2863 = vsel %vm2862, %v2855, %v2859
    %v2864 = vand.u32 2147483647, %v2854
    %vm2865 = vcmp.eq.f32.partialorder %v2864, 8.507059e+37
    %v2866 = vand.u32 %v2854, 2147483648
    %v2867 = vor.u32 1.1754944e-38, %v2866
    %v2868 = vsel %vm2865, %v2867, %v2863
    %v2869 = vmul.f32 1.0, %v2868
    %v2871 = vrot.slane %v2850, 2
    %v2873 = vxor.u32 %v2871, 2147483648
    %v2874 = vmul.f32 %v2873, 1.442695
    %v2875 = vpow.pop %v2874
    %v2876 = vadd.f32 %v2875, 1.0
    %v2877 = vrcp.pop %v2876
    %v2878 = vmul.f32 %v2876, %v2877
    %v2879 = vsub.f32 1.0, %v2878
    %v2880 = vmul.f32 %v2877, %v2879
    %v2881 = vadd.f32 %v2877, %v2880
    %vm2882 = vweird.f32 %v2876
    %vm2883 = vweird.f32 %v2877
    %vm2884 = vmor %vm2882, %vm2883
    %v2885 = vsel %vm2884, %v2877, %v2881
    %v2886 = vand.u32 2147483647, %v2876
    %vm2887 = vcmp.eq.f32.partialorder %v2886, 8.507059e+37
    %v2888 = vand.u32 %v2876, 2147483648
    %v2889 = vor.u32 1.1754944e-38, %v2888
    %v2890 = vsel %vm2887, %v2889, %v2885
    %v2891 = vmul.f32 1.0, %v2890
    %v2892 = vrot.slane %v2850, 4
    %v2894 = vtanh.pop %v2892
    %v2895 = vrot.slane %v2850, 6
    %v2897 = vxor.u32 %v2895, 2147483648
    %v2898 = vmul.f32 %v2897, 1.442695
    %v2899 = vpow.pop %v2898
    %v2900 = vadd.f32 %v2899, 1.0
    %v2901 = vrcp.pop %v2900
    %v2902 = vmul.f32 %v2900, %v2901
    %v2903 = vsub.f32 1.0, %v2902
    %v2904 = vmul.f32 %v2901, %v2903
    %v2905 = vadd.f32 %v2901, %v2904
    %vm2906 = vweird.f32 %v2900
    %vm2907 = vweird.f32 %v2901
    %vm2908 = vmor %vm2906, %vm2907
    %v2909 = vsel %vm2908, %v2901, %v2905
    %v2910 = vand.u32 2147483647, %v2900
    %vm2911 = vcmp.eq.f32.partialorder %v2910, 8.507059e+37
    %v2912 = vand.u32 %v2900, 2147483648
    %v2913 = vor.u32 1.1754944e-38, %v2912
    %v2914 = vsel %vm2911, %v2913, %v2909
    %v2915 = vmul.f32 1.0, %v2914
    %v2916 = vmul.f32 %v2891, %v2611
    %v2917 = vmul.f32 %v2869, %v2894
    %v2918 = vadd.f32 %v2916, %v2917
    %v2919 = vtanh.pop %v2918
    %v2920 = vmul.f32 %v2915, %v2919
    %v2921 = vpack.c.bf16 %v2786, %v2786
    %v2922 = vpack.c.bf16 %v2920, %v2920
    %2923 = vmatpush.bf16.msra.mxu0 %v885
    %2924 = vmatpush.bf16.msra.mxu0 %v881
    %2925 = vmatpush.bf16.msra.mxu0 %v877
    %2926 = vmatpush.bf16.msra.mxu0 %v873
    %2927 = vmatpush.bf16.msra.mxu0 %v869
    %2928 = vmatpush.bf16.msra.mxu0 %v865
    %2929 = vmatpush.bf16.msra.mxu0 %v861
    %2930 = vmatpush.bf16.msra.mxu0 %v857
    %2931 = vmatmul.bf16.gmra.mxu0 %v2922
    %v2932 = vpop.f32.mrf.mxu0
    %v2933 = vadd.f32 0.0, %v2932
    %v2934 = vpop.f32.mrf.mxu0
    %2935 = vdwg.mxu0
    %2936 = vmatpush.bf16.msra.mxu0 %v886
    %2937 = vmatpush.bf16.msra.mxu0 %v882
    %2938 = vmatpush.bf16.msra.mxu0 %v878
    %2939 = vmatpush.bf16.msra.mxu0 %v874
    %2940 = vmatpush.bf16.msra.mxu0 %v870
    %2941 = vmatpush.bf16.msra.mxu0 %v866
    %2942 = vmatpush.bf16.msra.mxu0 %v862
    %2943 = vmatpush.bf16.msra.mxu0 %v858
    %2944 = vmatmul.bf16.gmra.mxu0 %v2922
    %v2945 = vpop.f32.mrf.mxu0
    %v2946 = vadd.f32 0.0, %v2945
    %v2947 = vpop.f32.mrf.mxu0
    %2948 = vdwg.mxu0
    %2949 = vmatpush.bf16.msra.mxu0 %v887
    %2950 = vmatpush.bf16.msra.mxu0 %v883
    %2951 = vmatpush.bf16.msra.mxu0 %v879
    %2952 = vmatpush.bf16.msra.mxu0 %v875
    %2953 = vmatpush.bf16.msra.mxu0 %v871
    %2954 = vmatpush.bf16.msra.mxu0 %v867
    %2955 = vmatpush.bf16.msra.mxu0 %v863
    %2956 = vmatpush.bf16.msra.mxu0 %v859
    %2957 = vmatmul.bf16.gmra.mxu0 %v2922
    %v2958 = vpop.f32.mrf.mxu0
    %v2959 = vadd.f32 0.0, %v2958
    %v2960 = vpop.f32.mrf.mxu0
    %2961 = vdwg.mxu0
    %2962 = vmatpush.bf16.msra.mxu0 %v888
    %2963 = vmatpush.bf16.msra.mxu0 %v884
    %2964 = vmatpush.bf16.msra.mxu0 %v880
    %2965 = vmatpush.bf16.msra.mxu0 %v876
    %2966 = vmatpush.bf16.msra.mxu0 %v872
    %2967 = vmatpush.bf16.msra.mxu0 %v868
    %2968 = vmatpush.bf16.msra.mxu0 %v864
    %2969 = vmatpush.bf16.msra.mxu0 %v860
    %2970 = vmatmul.bf16.gmra.mxu0 %v2922
    %v2971 = vpop.f32.mrf.mxu0
    %v2972 = vadd.f32 0.0, %v2971
    %v2973 = vpop.f32.mrf.mxu0
    %2974 = vdwg.mxu0
    %2975 = vmatpush.bf16.msra.mxu0 %v1097
    %2976 = vmatpush.bf16.msra.mxu0 %v1093
    %2977 = vmatpush.bf16.msra.mxu0 %v1089
    %2978 = vmatpush.bf16.msra.mxu0 %v1085
    %2979 = vmatpush.bf16.msra.mxu0 %v1081
    %2980 = vmatpush.bf16.msra.mxu0 %v1077
    %2981 = vmatpush.bf16.msra.mxu0 %v1073
    %2982 = vmatpush.bf16.msra.mxu0 %v1069
    %2983 = vmatmul.bf16.gmra.mxu0 %v2921
    %v2984 = vpop.f32.mrf.mxu0
    %v2985 = vadd.f32 %v2933, %v2984
    %v2986 = vpop.f32.mrf.mxu0
    %2987 = vdwg.mxu0
    %2988 = vmatpush.bf16.msra.mxu0 %v1098
    %2989 = vmatpush.bf16.msra.mxu0 %v1094
    %2990 = vmatpush.bf16.msra.mxu0 %v1090
    %2991 = vmatpush.bf16.msra.mxu0 %v1086
    %2992 = vmatpush.bf16.msra.mxu0 %v1082
    %2993 = vmatpush.bf16.msra.mxu0 %v1078
    %2994 = vmatpush.bf16.msra.mxu0 %v1074
    %2995 = vmatpush.bf16.msra.mxu0 %v1070
    %2996 = vmatmul.bf16.gmra.mxu0 %v2921
    %v2997 = vpop.f32.mrf.mxu0
    %v2998 = vadd.f32 %v2946, %v2997
    %v2999 = vpop.f32.mrf.mxu0
    %3000 = vdwg.mxu0
    %3001 = vmatpush.bf16.msra.mxu0 %v1099
    %3002 = vmatpush.bf16.msra.mxu0 %v1095
    %3003 = vmatpush.bf16.msra.mxu0 %v1091
    %3004 = vmatpush.bf16.msra.mxu0 %v1087
    %3005 = vmatpush.bf16.msra.mxu0 %v1083
    %3006 = vmatpush.bf16.msra.mxu0 %v1079
    %3007 = vmatpush.bf16.msra.mxu0 %v1075
    %3008 = vmatpush.bf16.msra.mxu0 %v1071
    %3009 = vmatmul.bf16.gmra.mxu0 %v2921
    %v3010 = vpop.f32.mrf.mxu0
    %v3011 = vadd.f32 %v2959, %v3010
    %v3012 = vpop.f32.mrf.mxu0
    %3013 = vdwg.mxu0
    %3014 = vmatpush.bf16.msra.mxu0 %v1100
    %3015 = vmatpush.bf16.msra.mxu0 %v1096
    %3016 = vmatpush.bf16.msra.mxu0 %v1092
    %3017 = vmatpush.bf16.msra.mxu0 %v1088
    %3018 = vmatpush.bf16.msra.mxu0 %v1084
    %3019 = vmatpush.bf16.msra.mxu0 %v1080
    %3020 = vmatpush.bf16.msra.mxu0 %v1076
    %3021 = vmatpush.bf16.msra.mxu0 %v1072
    %3022 = vmatmul.bf16.gmra.mxu0 %v2921
    %v3023 = vpop.f32.mrf.mxu0
    %v3024 = vadd.f32 %v2972, %v3023
    %v3025 = vpop.f32.mrf.mxu0
    %3026 = vdwg.mxu0
    %v3027 = vadd.f32 %v2985, %v362
    %v3028 = vadd.f32 %v2998, %v363
    %v3029 = vadd.f32 %v3011, %v364
    %v3030 = vadd.f32 %v3024, %v365
    %v3031 = vxor.u32 %v3027, 2147483648
    %v3032 = vmul.f32 %v3031, 1.442695
    %v3033 = vpow.pop %v3032
    %v3034 = vadd.f32 %v3033, 1.0
    %v3035 = vrcp.pop %v3034
    %v3036 = vmul.f32 %v3034, %v3035
    %v3037 = vsub.f32 1.0, %v3036
    %v3038 = vmul.f32 %v3035, %v3037
    %v3039 = vadd.f32 %v3035, %v3038
    %vm3040 = vweird.f32 %v3034
    %vm3041 = vweird.f32 %v3035
    %vm3042 = vmor %vm3040, %vm3041
    %v3043 = vsel %vm3042, %v3035, %v3039
    %v3044 = vand.u32 2147483647, %v3034
    %vm3045 = vcmp.eq.f32.partialorder %v3044, 8.507059e+37
    %v3046 = vand.u32 %v3034, 2147483648
    %v3047 = vor.u32 1.1754944e-38, %v3046
    %v3048 = vsel %vm3045, %v3047, %v3043
    %v3049 = vmul.f32 1.0, %v3048
    %v3050 = vxor.u32 %v3028, 2147483648
    %v3051 = vmul.f32 %v3050, 1.442695
    %v3052 = vpow.pop %v3051
    %v3053 = vadd.f32 %v3052, 1.0
    %v3054 = vrcp.pop %v3053
    %v3055 = vmul.f32 %v3053, %v3054
    %v3056 = vsub.f32 1.0, %v3055
    %v3057 = vmul.f32 %v3054, %v3056
    %v3058 = vadd.f32 %v3054, %v3057
    %vm3059 = vweird.f32 %v3053
    %vm3060 = vweird.f32 %v3054
    %vm3061 = vmor %vm3059, %vm3060
    %v3062 = vsel %vm3061, %v3054, %v3058
    %v3063 = vand.u32 2147483647, %v3053
    %vm3064 = vcmp.eq.f32.partialorder %v3063, 8.507059e+37
    %v3065 = vand.u32 %v3053, 2147483648
    %v3066 = vor.u32 1.1754944e-38, %v3065
    %v3067 = vsel %vm3064, %v3066, %v3062
    %v3068 = vmul.f32 1.0, %v3067
    %v3069 = vtanh.pop %v3029
    %v3070 = vxor.u32 %v3030, 2147483648
    %v3071 = vmul.f32 %v3070, 1.442695
    %v3072 = vpow.pop %v3071
    %v3073 = vadd.f32 %v3072, 1.0
    %v3074 = vrcp.pop %v3073
    %v3075 = vmul.f32 %v3073, %v3074
    %v3076 = vsub.f32 1.0, %v3075
    %v3077 = vmul.f32 %v3074, %v3076
    %v3078 = vadd.f32 %v3074, %v3077
    %vm3079 = vweird.f32 %v3073
    %vm3080 = vweird.f32 %v3074
    %vm3081 = vmor %vm3079, %vm3080
    %v3082 = vsel %vm3081, %v3074, %v3078
    %v3083 = vand.u32 2147483647, %v3073
    %vm3084 = vcmp.eq.f32.partialorder %v3083, 8.507059e+37
    %v3085 = vand.u32 %v3073, 2147483648
    %v3086 = vor.u32 1.1754944e-38, %v3085
    %v3087 = vsel %vm3084, %v3086, %v3082
    %v3088 = vmul.f32 1.0, %v3087
    %v3089 = vmul.f32 %v3068, %v2784
    %v3090 = vmul.f32 %v3049, %v3069
    %v3091 = vadd.f32 %v3089, %v3090
    %v3092 = vtanh.pop %v3091
    %v3093 = vmul.f32 %v3088, %v3092
    %3094 = vmatpush.bf16.msra.mxu0 %v526
    %3095 = vmatpush.bf16.msra.mxu0 %v522
    %3096 = vmatpush.bf16.msra.mxu0 %v518
    %3097 = vmatpush.bf16.msra.mxu0 %v514
    %3098 = vmatpush.bf16.msra.mxu0 %v510
    %3099 = vmatpush.bf16.msra.mxu0 %v506
    %3100 = vmatpush.bf16.msra.mxu0 %v502
    %3101 = vmatpush.bf16.msra.mxu0 %v498
    %3102 = vmatmul.bf16.gmra.mxu0 %v2922
    %v3103 = vpop.f32.mrf.mxu0
    %v3104 = vadd.f32 0.0, %v3103
    %v3105 = vpop.f32.mrf.mxu0
    %3106 = vdwg.mxu0
    %3107 = vmatpush.bf16.msra.mxu0 %v527
    %3108 = vmatpush.bf16.msra.mxu0 %v523
    %3109 = vmatpush.bf16.msra.mxu0 %v519
    %3110 = vmatpush.bf16.msra.mxu0 %v515
    %3111 = vmatpush.bf16.msra.mxu0 %v511
    %3112 = vmatpush.bf16.msra.mxu0 %v507
    %3113 = vmatpush.bf16.msra.mxu0 %v503
    %3114 = vmatpush.bf16.msra.mxu0 %v499
    %3115 = vmatmul.bf16.gmra.mxu0 %v2922
    %v3116 = vpop.f32.mrf.mxu0
    %v3117 = vadd.f32 0.0, %v3116
    %v3118 = vpop.f32.mrf.mxu0
    %3119 = vdwg.mxu0
    %3120 = vmatpush.bf16.msra.mxu0 %v528
    %3121 = vmatpush.bf16.msra.mxu0 %v524
    %3122 = vmatpush.bf16.msra.mxu0 %v520
    %3123 = vmatpush.bf16.msra.mxu0 %v516
    %3124 = vmatpush.bf16.msra.mxu0 %v512
    %3125 = vmatpush.bf16.msra.mxu0 %v508
    %3126 = vmatpush.bf16.msra.mxu0 %v504
    %3127 = vmatpush.bf16.msra.mxu0 %v500
    %3128 = vmatmul.bf16.gmra.mxu0 %v2922
    %v3129 = vpop.f32.mrf.mxu0
    %v3130 = vadd.f32 0.0, %v3129
    %v3131 = vpop.f32.mrf.mxu0
    %3132 = vdwg.mxu0
    %3133 = vmatpush.bf16.msra.mxu0 %v529
    %3134 = vmatpush.bf16.msra.mxu0 %v525
    %3135 = vmatpush.bf16.msra.mxu0 %v521
    %3136 = vmatpush.bf16.msra.mxu0 %v517
    %3137 = vmatpush.bf16.msra.mxu0 %v513
    %3138 = vmatpush.bf16.msra.mxu0 %v509
    %3139 = vmatpush.bf16.msra.mxu0 %v505
    %3140 = vmatpush.bf16.msra.mxu0 %v501
    %3141 = vmatmul.bf16.gmra.mxu0 %v2922
    %v3142 = vpop.f32.mrf.mxu0
    %v3143 = vadd.f32 0.0, %v3142
    %v3144 = vpop.f32.mrf.mxu0
    %3145 = vdwg.mxu0
    %v3150 = vrot.slane %v3117, 6
    %v3151 = vrot.slane %v3130, 4
    %v3152 = vrot.slane %v3143, 2
    %v3153 = vsel %vm296, %v3104, %v3150
    %v3154 = vsel %vm298, %v3151, %v3152
    %v3155 = vsel %vm213, %v3153, %v3154
    %v3157 = vadd.f32 %v359, %v3155
    %v3158 = vxor.u32 %v3157, 2147483648
    %v3159 = vmul.f32 %v3158, 1.442695
    %v3160 = vpow.pop %v3159
    %v3161 = vadd.f32 %v3160, 1.0
    %v3162 = vrcp.pop %v3161
    %v3163 = vmul.f32 %v3161, %v3162
    %v3164 = vsub.f32 1.0, %v3163
    %v3165 = vmul.f32 %v3162, %v3164
    %v3166 = vadd.f32 %v3162, %v3165
    %vm3167 = vweird.f32 %v3161
    %vm3168 = vweird.f32 %v3162
    %vm3169 = vmor %vm3167, %vm3168
    %v3170 = vsel %vm3169, %v3162, %v3166
    %v3171 = vand.u32 2147483647, %v3161
    %vm3172 = vcmp.eq.f32.partialorder %v3171, 8.507059e+37
    %v3173 = vand.u32 %v3161, 2147483648
    %v3174 = vor.u32 1.1754944e-38, %v3173
    %v3175 = vsel %vm3172, %v3174, %v3170
    %v3176 = vmul.f32 1.0, %v3175
    %v3178 = vrot.slane %v3157, 2
    %v3180 = vxor.u32 %v3178, 2147483648
    %v3181 = vmul.f32 %v3180, 1.442695
    %v3182 = vpow.pop %v3181
    %v3183 = vadd.f32 %v3182, 1.0
    %v3184 = vrcp.pop %v3183
    %v3185 = vmul.f32 %v3183, %v3184
    %v3186 = vsub.f32 1.0, %v3185
    %v3187 = vmul.f32 %v3184, %v3186
    %v3188 = vadd.f32 %v3184, %v3187
    %vm3189 = vweird.f32 %v3183
    %vm3190 = vweird.f32 %v3184
    %vm3191 = vmor %vm3189, %vm3190
    %v3192 = vsel %vm3191, %v3184, %v3188
    %v3193 = vand.u32 2147483647, %v3183
    %vm3194 = vcmp.eq.f32.partialorder %v3193, 8.507059e+37
    %v3195 = vand.u32 %v3183, 2147483648
    %v3196 = vor.u32 1.1754944e-38, %v3195
    %v3197 = vsel %vm3194, %v3196, %v3192
    %v3198 = vmul.f32 1.0, %v3197
    %v3199 = vrot.slane %v3157, 4
    %v3201 = vtanh.pop %v3199
    %v3202 = vrot.slane %v3157, 6
    %v3204 = vxor.u32 %v3202, 2147483648
    %v3205 = vmul.f32 %v3204, 1.442695
    %v3206 = vpow.pop %v3205
    %v3207 = vadd.f32 %v3206, 1.0
    %v3208 = vrcp.pop %v3207
    %v3209 = vmul.f32 %v3207, %v3208
    %v3210 = vsub.f32 1.0, %v3209
    %v3211 = vmul.f32 %v3208, %v3210
    %v3212 = vadd.f32 %v3208, %v3211
    %vm3213 = vweird.f32 %v3207
    %vm3214 = vweird.f32 %v3208
    %vm3215 = vmor %vm3213, %vm3214
    %v3216 = vsel %vm3215, %v3208, %v3212
    %v3217 = vand.u32 2147483647, %v3207
    %vm3218 = vcmp.eq.f32.partialorder %v3217, 8.507059e+37
    %v3219 = vand.u32 %v3207, 2147483648
    %v3220 = vor.u32 1.1754944e-38, %v3219
    %v3221 = vsel %vm3218, %v3220, %v3216
    %v3222 = vmul.f32 1.0, %v3221
    %v3223 = vmul.f32 %v3198, %v2918
    %v3224 = vmul.f32 %v3176, %v3201
    %v3225 = vadd.f32 %v3223, %v3224
    %v3226 = vtanh.pop %v3225
    %v3227 = vmul.f32 %v3222, %v3226
    %v3228 = vpack.c.bf16 %v3093, %v3093
    %v3229 = vpack.c.bf16 %v3227, %v3227
    %3230 = vmatpush.bf16.msra.mxu0 %v885
    %3231 = vmatpush.bf16.msra.mxu0 %v881
    %3232 = vmatpush.bf16.msra.mxu0 %v877
    %3233 = vmatpush.bf16.msra.mxu0 %v873
    %3234 = vmatpush.bf16.msra.mxu0 %v869
    %3235 = vmatpush.bf16.msra.mxu0 %v865
    %3236 = vmatpush.bf16.msra.mxu0 %v861
    %3237 = vmatpush.bf16.msra.mxu0 %v857
    %3238 = vmatmul.bf16.gmra.mxu0 %v3229
    %v3239 = vpop.f32.mrf.mxu0
    %v3240 = vadd.f32 0.0, %v3239
    %v3241 = vpop.f32.mrf.mxu0
    %3242 = vdwg.mxu0
    %3243 = vmatpush.bf16.msra.mxu0 %v886
    %3244 = vmatpush.bf16.msra.mxu0 %v882
    %3245 = vmatpush.bf16.msra.mxu0 %v878
    %3246 = vmatpush.bf16.msra.mxu0 %v874
    %3247 = vmatpush.bf16.msra.mxu0 %v870
    %3248 = vmatpush.bf16.msra.mxu0 %v866
    %3249 = vmatpush.bf16.msra.mxu0 %v862
    %3250 = vmatpush.bf16.msra.mxu0 %v858
    %3251 = vmatmul.bf16.gmra.mxu0 %v3229
    %v3252 = vpop.f32.mrf.mxu0
    %v3253 = vadd.f32 0.0, %v3252
    %v3254 = vpop.f32.mrf.mxu0
    %3255 = vdwg.mxu0
    %3256 = vmatpush.bf16.msra.mxu0 %v887
    %3257 = vmatpush.bf16.msra.mxu0 %v883
    %3258 = vmatpush.bf16.msra.mxu0 %v879
    %3259 = vmatpush.bf16.msra.mxu0 %v875
    %3260 = vmatpush.bf16.msra.mxu0 %v871
    %3261 = vmatpush.bf16.msra.mxu0 %v867
    %3262 = vmatpush.bf16.msra.mxu0 %v863
    %3263 = vmatpush.bf16.msra.mxu0 %v859
    %3264 = vmatmul.bf16.gmra.mxu0 %v3229
    %v3265 = vpop.f32.mrf.mxu0
    %v3266 = vadd.f32 0.0, %v3265
    %v3267 = vpop.f32.mrf.mxu0
    %3268 = vdwg.mxu0
    %3269 = vmatpush.bf16.msra.mxu0 %v888
    %3270 = vmatpush.bf16.msra.mxu0 %v884
    %3271 = vmatpush.bf16.msra.mxu0 %v880
    %3272 = vmatpush.bf16.msra.mxu0 %v876
    %3273 = vmatpush.bf16.msra.mxu0 %v872
    %3274 = vmatpush.bf16.msra.mxu0 %v868
    %3275 = vmatpush.bf16.msra.mxu0 %v864
    %3276 = vmatpush.bf16.msra.mxu0 %v860
    %3277 = vmatmul.bf16.gmra.mxu0 %v3229
    %v3278 = vpop.f32.mrf.mxu0
    %v3279 = vadd.f32 0.0, %v3278
    %v3280 = vpop.f32.mrf.mxu0
    %3281 = vdwg.mxu0
    %3282 = vmatpush.bf16.msra.mxu0 %v1097
    %3283 = vmatpush.bf16.msra.mxu0 %v1093
    %3284 = vmatpush.bf16.msra.mxu0 %v1089
    %3285 = vmatpush.bf16.msra.mxu0 %v1085
    %3286 = vmatpush.bf16.msra.mxu0 %v1081
    %3287 = vmatpush.bf16.msra.mxu0 %v1077
    %3288 = vmatpush.bf16.msra.mxu0 %v1073
    %3289 = vmatpush.bf16.msra.mxu0 %v1069
    %3290 = vmatmul.bf16.gmra.mxu0 %v3228
    %v3291 = vpop.f32.mrf.mxu0
    %v3292 = vadd.f32 %v3240, %v3291
    %v3293 = vpop.f32.mrf.mxu0
    %3294 = vdwg.mxu0
    %3295 = vmatpush.bf16.msra.mxu0 %v1098
    %3296 = vmatpush.bf16.msra.mxu0 %v1094
    %3297 = vmatpush.bf16.msra.mxu0 %v1090
    %3298 = vmatpush.bf16.msra.mxu0 %v1086
    %3299 = vmatpush.bf16.msra.mxu0 %v1082
    %3300 = vmatpush.bf16.msra.mxu0 %v1078
    %3301 = vmatpush.bf16.msra.mxu0 %v1074
    %3302 = vmatpush.bf16.msra.mxu0 %v1070
    %3303 = vmatmul.bf16.gmra.mxu0 %v3228
    %v3304 = vpop.f32.mrf.mxu0
    %v3305 = vadd.f32 %v3253, %v3304
    %v3306 = vpop.f32.mrf.mxu0
    %3307 = vdwg.mxu0
    %3308 = vmatpush.bf16.msra.mxu0 %v1099
    %3309 = vmatpush.bf16.msra.mxu0 %v1095
    %3310 = vmatpush.bf16.msra.mxu0 %v1091
    %3311 = vmatpush.bf16.msra.mxu0 %v1087
    %3312 = vmatpush.bf16.msra.mxu0 %v1083
    %3313 = vmatpush.bf16.msra.mxu0 %v1079
    %3314 = vmatpush.bf16.msra.mxu0 %v1075
    %3315 = vmatpush.bf16.msra.mxu0 %v1071
    %3316 = vmatmul.bf16.gmra.mxu0 %v3228
    %v3317 = vpop.f32.mrf.mxu0
    %v3318 = vadd.f32 %v3266, %v3317
    %v3319 = vpop.f32.mrf.mxu0
    %3320 = vdwg.mxu0
    %3321 = vmatpush.bf16.msra.mxu0 %v1100
    %3322 = vmatpush.bf16.msra.mxu0 %v1096
    %3323 = vmatpush.bf16.msra.mxu0 %v1092
    %3324 = vmatpush.bf16.msra.mxu0 %v1088
    %3325 = vmatpush.bf16.msra.mxu0 %v1084
    %3326 = vmatpush.bf16.msra.mxu0 %v1080
    %3327 = vmatpush.bf16.msra.mxu0 %v1076
    %3328 = vmatpush.bf16.msra.mxu0 %v1072
    %3329 = vmatmul.bf16.gmra.mxu0 %v3228
    %v3330 = vpop.f32.mrf.mxu0
    %v3331 = vadd.f32 %v3279, %v3330
    %v3332 = vpop.f32.mrf.mxu0
    %3333 = vdwg.mxu0
    %v3334 = vadd.f32 %v3292, %v362
    %v3335 = vadd.f32 %v3305, %v363
    %v3336 = vadd.f32 %v3318, %v364
    %v3337 = vadd.f32 %v3331, %v365
    %v3338 = vxor.u32 %v3334, 2147483648
    %v3339 = vmul.f32 %v3338, 1.442695
    %v3340 = vpow.pop %v3339
    %v3341 = vadd.f32 %v3340, 1.0
    %v3342 = vrcp.pop %v3341
    %v3343 = vmul.f32 %v3341, %v3342
    %v3344 = vsub.f32 1.0, %v3343
    %v3345 = vmul.f32 %v3342, %v3344
    %v3346 = vadd.f32 %v3342, %v3345
    %vm3347 = vweird.f32 %v3341
    %vm3348 = vweird.f32 %v3342
    %vm3349 = vmor %vm3347, %vm3348
    %v3350 = vsel %vm3349, %v3342, %v3346
    %v3351 = vand.u32 2147483647, %v3341
    %vm3352 = vcmp.eq.f32.partialorder %v3351, 8.507059e+37
    %v3353 = vand.u32 %v3341, 2147483648
    %v3354 = vor.u32 1.1754944e-38, %v3353
    %v3355 = vsel %vm3352, %v3354, %v3350
    %v3356 = vmul.f32 1.0, %v3355
    %v3357 = vxor.u32 %v3335, 2147483648
    %v3358 = vmul.f32 %v3357, 1.442695
    %v3359 = vpow.pop %v3358
    %v3360 = vadd.f32 %v3359, 1.0
    %v3361 = vrcp.pop %v3360
    %v3362 = vmul.f32 %v3360, %v3361
    %v3363 = vsub.f32 1.0, %v3362
    %v3364 = vmul.f32 %v3361, %v3363
    %v3365 = vadd.f32 %v3361, %v3364
    %vm3366 = vweird.f32 %v3360
    %vm3367 = vweird.f32 %v3361
    %vm3368 = vmor %vm3366, %vm3367
    %v3369 = vsel %vm3368, %v3361, %v3365
    %v3370 = vand.u32 2147483647, %v3360
    %vm3371 = vcmp.eq.f32.partialorder %v3370, 8.507059e+37
    %v3372 = vand.u32 %v3360, 2147483648
    %v3373 = vor.u32 1.1754944e-38, %v3372
    %v3374 = vsel %vm3371, %v3373, %v3369
    %v3375 = vmul.f32 1.0, %v3374
    %v3376 = vtanh.pop %v3336
    %v3377 = vxor.u32 %v3337, 2147483648
    %v3378 = vmul.f32 %v3377, 1.442695
    %v3379 = vpow.pop %v3378
    %v3380 = vadd.f32 %v3379, 1.0
    %v3381 = vrcp.pop %v3380
    %v3382 = vmul.f32 %v3380, %v3381
    %v3383 = vsub.f32 1.0, %v3382
    %v3384 = vmul.f32 %v3381, %v3383
    %v3385 = vadd.f32 %v3381, %v3384
    %vm3386 = vweird.f32 %v3380
    %vm3387 = vweird.f32 %v3381
    %vm3388 = vmor %vm3386, %vm3387
    %v3389 = vsel %vm3388, %v3381, %v3385
    %v3390 = vand.u32 2147483647, %v3380
    %vm3391 = vcmp.eq.f32.partialorder %v3390, 8.507059e+37
    %v3392 = vand.u32 %v3380, 2147483648
    %v3393 = vor.u32 1.1754944e-38, %v3392
    %v3394 = vsel %vm3391, %v3393, %v3389
    %v3395 = vmul.f32 1.0, %v3394
    %v3396 = vmul.f32 %v3375, %v3091
    %v3397 = vmul.f32 %v3356, %v3376
    %v3398 = vadd.f32 %v3396, %v3397
    %v3399 = vtanh.pop %v3398
    %v3400 = vmul.f32 %v3395, %v3399
    %v3401 = vpack.c.bf16 %v3400, %v3400
    %v3402 = vld [vmem:[#allocation13] sm:$0xf]
    %v3403 = vld [vmem:[#allocation13 + $0x4] sm:$0xf]
    %v3404 = vld [vmem:[#allocation13 + $0x8] sm:$0xf]
    %v3405 = vld [vmem:[#allocation13 + $0xc] sm:$0xf]
    %v3406 = vld [vmem:[#allocation13 + $0x10] sm:$0xf]
    %v3407 = vld [vmem:[#allocation13 + $0x14] sm:$0xf]
    %v3408 = vld [vmem:[#allocation13 + $0x18] sm:$0xf]
    %v3409 = vld [vmem:[#allocation13 + $0x1c] sm:$0xf]
    %v3410 = vld [vmem:[#allocation13 + $0x20] sm:$0xf]
    %v3411 = vld [vmem:[#allocation13 + $0x24] sm:$0xf]
    %v3412 = vld [vmem:[#allocation13 + $0x28] sm:$0xf]
    %v3413 = vld [vmem:[#allocation13 + $0x2c] sm:$0xf]
    %v3414 = vld [vmem:[#allocation13 + $0x30] sm:$0xf]
    %v3415 = vld [vmem:[#allocation13 + $0x34] sm:$0xf]
    %v3416 = vld [vmem:[#allocation13 + $0x38] sm:$0xf]
    %v3417 = vld [vmem:[#allocation13 + $0x3c] sm:$0xf]
    %v3418 = vld [vmem:[%s8] sm:$0x1]
    %v3420 = vperm.slane %v3418, 0
    %v3438 = vunpack.c.l.b16 %v3402
    %v3439 = vunpack.c.l.b16 %v3403
    %v3440 = vunpack.c.l.b16 %v3404
    %v3441 = vunpack.c.l.b16 %v3405
    %v3442 = vunpack.c.l.b16 %v3406
    %v3443 = vunpack.c.l.b16 %v3407
    %v3444 = vunpack.c.l.b16 %v3408
    %v3445 = vunpack.c.l.b16 %v3409
    %v3446 = vunpack.c.l.b16 %v3410
    %v3447 = vunpack.c.l.b16 %v3411
    %v3448 = vunpack.c.l.b16 %v3412
    %v3449 = vunpack.c.l.b16 %v3413
    %v3450 = vunpack.c.l.b16 %v3414
    %v3451 = vunpack.c.l.b16 %v3415
    %v3452 = vunpack.c.l.b16 %v3416
    %v3453 = vunpack.c.l.b16 %v3417
    %v3454 = vpack.c.b16 %v3439, %v3438
    %v3455 = vpack.c.b16 %v3441, %v3440
    %v3456 = vpack.c.b16 %v3443, %v3442
    %v3457 = vpack.c.b16 %v3445, %v3444
    %v3458 = vpack.c.b16 %v3447, %v3446
    %v3459 = vpack.c.b16 %v3449, %v3448
    %v3460 = vpack.c.b16 %v3451, %v3450
    %v3461 = vpack.c.b16 %v3453, %v3452
    %3470 = vmatpush.bf16.msra.mxu0 %v3461
    %3471 = vmatpush.bf16.msra.mxu0 %v3460
    %3472 = vmatpush.bf16.msra.mxu0 %v3459
    %3473 = vmatpush.bf16.msra.mxu0 %v3458
    %3474 = vmatpush.bf16.msra.mxu0 %v3457
    %3475 = vmatpush.bf16.msra.mxu0 %v3456
    %3476 = vmatpush.bf16.msra.mxu0 %v3455
    %3477 = vmatpush.bf16.msra.mxu0 %v3454
    %3478 = vmatmul.bf16.gmra.mxu0 %v3401
    %v3479 = vpop.f32.mrf.mxu0
    %v3480 = vadd.f32 %v3420, %v3479
    %v3481 = vpop.f32.mrf.mxu0
    %3482 = vdwg.mxu0
    %v3483 = vmax.f32 %v3480, 0.0
    %v3484 = vpack.c.bf16 %v3483, %v3483
    %v3485 = vld [vmem:[#allocation14] sm:$0xf]
    %v3486 = vld [vmem:[#allocation14 + $0x4] sm:$0xf]
    %v3487 = vld [vmem:[#allocation14 + $0x8] sm:$0xf]
    %v3488 = vld [vmem:[#allocation14 + $0xc] sm:$0xf]
    %v3489 = vld [vmem:[#allocation14 + $0x10] sm:$0xf]
    %v3490 = vld [vmem:[#allocation14 + $0x14] sm:$0xf]
    %v3491 = vld [vmem:[#allocation14 + $0x18] sm:$0xf]
    %v3492 = vld [vmem:[#allocation14 + $0x1c] sm:$0xf]
    %v3493 = vld [vmem:[#allocation14 + $0x20] sm:$0xf]
    %v3494 = vld [vmem:[#allocation14 + $0x24] sm:$0xf]
    %v3495 = vld [vmem:[#allocation14 + $0x28] sm:$0xf]
    %v3496 = vld [vmem:[#allocation14 + $0x2c] sm:$0xf]
    %v3497 = vld [vmem:[#allocation14 + $0x30] sm:$0xf]
    %v3498 = vld [vmem:[#allocation14 + $0x34] sm:$0xf]
    %v3499 = vld [vmem:[#allocation14 + $0x38] sm:$0xf]
    %v3500 = vld [vmem:[#allocation14 + $0x3c] sm:$0xf]
    %v3501 = vld [vmem:[%s10] sm:$0x1]
    %v3503 = vperm.slane %v3501, 0
    %v3521 = vunpack.c.l.b16 %v3485
    %v3522 = vunpack.c.l.b16 %v3486
    %v3523 = vunpack.c.l.b16 %v3487
    %v3524 = vunpack.c.l.b16 %v3488
    %v3525 = vunpack.c.l.b16 %v3489
    %v3526 = vunpack.c.l.b16 %v3490
    %v3527 = vunpack.c.l.b16 %v3491
    %v3528 = vunpack.c.l.b16 %v3492
    %v3529 = vunpack.c.l.b16 %v3493
    %v3530 = vunpack.c.l.b16 %v3494
    %v3531 = vunpack.c.l.b16 %v3495
    %v3532 = vunpack.c.l.b16 %v3496
    %v3533 = vunpack.c.l.b16 %v3497
    %v3534 = vunpack.c.l.b16 %v3498
    %v3535 = vunpack.c.l.b16 %v3499
    %v3536 = vunpack.c.l.b16 %v3500
    %v3537 = vpack.c.b16 %v3522, %v3521
    %v3538 = vpack.c.b16 %v3524, %v3523
    %v3539 = vpack.c.b16 %v3526, %v3525
    %v3540 = vpack.c.b16 %v3528, %v3527
    %v3541 = vpack.c.b16 %v3530, %v3529
    %v3542 = vpack.c.b16 %v3532, %v3531
    %v3543 = vpack.c.b16 %v3534, %v3533
    %v3544 = vpack.c.b16 %v3536, %v3535
    %3553 = vmatpush.bf16.msra.mxu0 %v3544
    %3554 = vmatpush.bf16.msra.mxu0 %v3543
    %3555 = vmatpush.bf16.msra.mxu0 %v3542
    %3556 = vmatpush.bf16.msra.mxu0 %v3541
    %3557 = vmatpush.bf16.msra.mxu0 %v3540
    %3558 = vmatpush.bf16.msra.mxu0 %v3539
    %3559 = vmatpush.bf16.msra.mxu0 %v3538
    %3560 = vmatpush.bf16.msra.mxu0 %v3537
    %3561 = vmatmul.bf16.gmra.mxu0 %v3484
    %v3562 = vpop.f32.mrf.mxu0
    %v3563 = vadd.f32 %v3503, %v3562
    %v3564 = vpop.f32.mrf.mxu0
    %3565 = vdwg.mxu0
    %3566 = vst [vmem:[#allocation16] sm:$0x3] %v3563
    // Predicated region
    $region78: #{tpu_custom_call.1} parent=1 // pred_check
      _
    $region79: #{tpu_custom_call.1} parent=1 // pred_check_branch
      %3568 = sbr.rel (0) target = $region81
    $region80: #{tpu_custom_call.1} parent=1 // pred_region
      %3570 = vsyncadd [#allocation4], 0
      %s3572 = sshll.u32 [#allocation16], 4
      %s3573 = int_to_ptr.vmem [resolvable:$true] %s3572
      %s3574 = sshll.u32 %s11, 4
      %s3575 = int_to_ptr.hbm [resolvable:$true] %s3574
      %3577 = dma.vmem_to_hbm [thread:$0]  %s3573, 32, %s3575, [#allocation4]
    $region81: #{tpu_custom_call.1} parent=1 // pred_fallthru
      _
    // Predicated region
    $region82: #{tpu_custom_call.1} parent=1 // pred_check
      _
    $region83: #{tpu_custom_call.1} parent=1 // pred_check_branch
      %3579 = sbr.rel (0) target = $region85
    $region84: #{tpu_custom_call.1} parent=1 // pred_region
      %3581 = dma.done [#allocation4], 32
    $region85: #{tpu_custom_call.1} parent=1 // pred_fallthru
      _
    %3582 = vsyncpa [#allocation3], 1
    %3583 = vsyncpa [#allocation6], 1
    %3584 = vsyncpa [#allocation9], 1
    %3585 = vsyncpa [#allocation12], 1
    %3586 = vsyncpa [#allocation15], 1
    %3587 = vsyncpa [#allocation4], 1

</llo_original>
